<compile_context>
chip_gen: v7x
topology: tpu7x:2x2x1
jax: 0.10.0
libtpu: 0.0.40
codegen_flags: <defaults>
</compile_context>

<pallas_src>
import jax
import jax.numpy as jnp
from jax.experimental import pallas as pl
from jax.experimental.pallas import tpu as pltpu


# Lane widths tried (largest first).  All are multiples of 128, so output
# stores are always full-width (unmasked) vst's.
_LANE_CHOICES = (1024, 512, 256, 128)
# Below this many elements a single XLA fusion beats pallas_call overhead.
_MIN_PALLAS_ELEMS = 64 * 1024


def _shear_rate_kernel(s_ref, eta0_ref, n_ref, beta_ref, tau_ref, at_ref,
                       f_s_ref, s_sc_ref):
    """Elementwise ShearRate forward on one VMEM tile."""
    s = s_ref[...]
    eta0 = eta0_ref[...]
    n = n_ref[...]
    beta = beta_ref[...]
    tau = tau_ref[...]
    a_t = at_ref[...]

    scr = tau
    s_sc = beta * (s - a_t - scr)
    # log(1 + exp(-S_sc)) + S_sc, exactly as written in the torch forward
    # (numerically-stable softplus would change results in the overflow
    # regime, so torch parity is kept).
    soft = jnp.log(1.0 + jnp.exp(-s_sc)) + s_sc
    # Exact reciprocal: the kernel is HBM-bandwidth-bound, approx=True buys
    # nothing here and exact keeps 1e-4 parity with torch.
    f_s = eta0 - pl.reciprocal(beta) * n * soft

    f_s_ref[...] = f_s
    s_sc_ref[...] = s_sc
    # TODO(synk): the PyTorch module's data-dependent host-side printing for
    # NaNs / (eta_0 > 2) is host I/O and is intentionally not replicated.


def _pick_tile_bytes():
    """Per-generation per-stream tile-byte budget (review items on v5e/v6e/v7x)."""
    try:
        info = pltpu.get_tpu_info()
        vmem_cap = getattr(info, "vmem_capacity_bytes", None)
    except Exception:
        vmem_cap = None
    if vmem_cap is None:
        return 1 << 20          # unknown hardware: conservative 1 MiB
    if vmem_cap >= 100 * (1 << 20):
        return 4 << 20          # v5e / v6e: 128 MiB physical VMEM
    return 2 << 20              # v7x: 64 MiB physical VMEM per TensorCore


def shear_rate_ref(S, eta_0, n, beta, tau, a_t):
    """Plain-JAX reference mirroring the PyTorch forward."""
    scr = tau
    s_sc = beta * (S - a_t - scr)
    f_s = eta_0 - (1.0 / beta) * n * (jnp.log(1.0 + jnp.exp(-s_sc)) + s_sc)
    return f_s, s_sc


def shear_rate(S, eta_0, n, beta, tau, a_t, *,
               min_pallas_elems=_MIN_PALLAS_ELEMS, max_tile_bytes=None):
    """Pallas ShearRate forward. All args share the same shape/dtype."""
    orig_shape = S.shape
    dtype = S.dtype
    total = S.size

    # Small tensors (the model's usual per-batch scalars): skip Pallas.
    if total < max(int(min_pallas_elems), 1):
        return shear_rate_ref(S, eta_0, n, beta, tau, a_t)

    # ---- lane-dense 2D layout (copy-free in the common case) -------------
    lanes = next((l for l in _LANE_CHOICES if total % l == 0), None)
    if lanes is None:
        # Rare: no multiple of 128 divides the element count.  Pad to the
        # next multiple of 128; this is the only path that copies inputs.
        lanes = 128
        rows = pl.cdiv(total, lanes)
        pad = rows * lanes - total
    else:
        rows = total // lanes
        pad = 0

    def _prep(x, pad_value):
        x = jnp.ravel(x).astype(dtype)          # free for contiguous inputs
        if pad:
            x = jnp.pad(x, (0, pad), constant_values=pad_value)
        return x.reshape(rows, lanes)           # no copy when pad == 0

    itemsize = jnp.dtype(dtype).itemsize
    tile_bytes = int(max_tile_bytes) if max_tile_bytes else _pick_tile_bytes()
    block_rows = max(8, (tile_bytes // (lanes * itemsize)) // 8 * 8)
    block_rows = min(block_rows, rows)          # full-extent block if small
    grid = (pl.cdiv(rows, block_rows),)         # final partial block masked

    block_bytes = block_rows * lanes * itemsize
    # 6 inputs + 2 outputs, double-buffered, plus margin for Mosaic scratch.
    vmem_limit = int(2 * 8 * block_bytes + (8 << 20))

    spec = pl.BlockSpec((block_rows, lanes), lambda i: (i, 0))

    cost = pl.CostEstimate(
        flops=8 * total,
        transcendentals=3 * total,              # exp, log, reciprocal
        bytes_accessed=(6 + 2) * itemsize * total,
    )

    s2 = _prep(S, 0.0)
    eta2 = _prep(eta_0, 0.0)
    n2 = _prep(n, 0.0)
    beta2 = _prep(beta, 1.0)   # keep 1/beta finite in any discarded pad tail
    tau2 = _prep(tau, 0.0)
    at2 = _prep(a_t, 0.0)

    f_s, s_sc = pl.pallas_call(
        _shear_rate_kernel,
        out_shape=(
            jax.ShapeDtypeStruct((rows, lanes), dtype),   # f_S
            jax.ShapeDtypeStruct((rows, lanes), dtype),   # S_sc
        ),
        grid_spec=pltpu.PrefetchScalarGridSpec(
            num_scalar_prefetch=0,
            grid=grid,
            in_specs=[spec] * 6,
            out_specs=[spec, spec],
        ),
        compiler_params=pltpu.CompilerParams(
            dimension_semantics=("parallel",),
            vmem_limit_bytes=vmem_limit,
        ),
        cost_estimate=cost,
    )(s2, eta2, n2, beta2, tau2, at2)

    if pad:
        f_s = f_s.reshape(-1)[:total]
        s_sc = s_sc.reshape(-1)[:total]
    return f_s.reshape(orig_shape), s_sc.reshape(orig_shape)


if __name__ == "__main__":
    key = jax.random.PRNGKey(0)
    ks = jax.random.split(key, 6)

    # Above the Pallas-path threshold; divisible by 1024 so the lane-dense
    # reshape is copy-free.  rows=650 is deliberately not a multiple of the
    # (small, forced) block so the masked partial-final-block path is hit.
    shape = (650, 1024)

    S = jax.random.normal(ks[0], shape, dtype=jnp.float32)
    eta_0 = jax.random.normal(ks[1], shape, dtype=jnp.float32)
    n = jax.random.normal(ks[2], shape, dtype=jnp.float32)
    # keep beta away from zero (it is inverted in the formula)
    beta = jax.random.uniform(ks[3], shape, dtype=jnp.float32,
                              minval=0.5, maxval=1.5)
    tau = jax.random.normal(ks[4], shape, dtype=jnp.float32)
    a_t = jax.random.normal(ks[5], shape, dtype=jnp.float32)

    f_s_ref, s_sc_ref = shear_rate_ref(S, eta_0, n, beta, tau, a_t)

    # 1) Pallas path with a forced small tile -> multi-step grid + masked tail.
    f_s, s_sc = shear_rate(S, eta_0, n, beta, tau, a_t,
                           max_tile_bytes=512 * 1024)
    jax.block_until_ready((f_s, s_sc))
    assert f_s.shape == shape and s_sc.shape == shape
    assert jnp.allclose(f_s, f_s_ref, atol=1e-4, rtol=1e-4)
    assert jnp.allclose(s_sc, s_sc_ref, atol=1e-5, rtol=1e-5)

    # 2) Pallas path with the default per-generation tile sizing.
    f_s2, s_sc2 = shear_rate(S, eta_0, n, beta, tau, a_t)
    jax.block_until_ready((f_s2, s_sc2))
    assert jnp.allclose(f_s2, f_s_ref, atol=1e-4, rtol=1e-4)
    assert jnp.allclose(s_sc2, s_sc_ref, atol=1e-5, rtol=1e-5)

    # 3) Small-tensor fallback path (realistic per-batch model shapes).
    sl = (slice(0, 4), slice(0, 33))
    f_s_s, s_sc_s = shear_rate(S[sl], eta_0[sl], n[sl], beta[sl],
                               tau[sl], a_t[sl])
    f_ref_s, s_ref_s = shear_rate_ref(S[sl], eta_0[sl], n[sl], beta[sl],
                                      tau[sl], a_t[sl])
    jax.block_until_ready((f_s_s, s_sc_s))
    assert f_s_s.shape == (4, 33) and s_sc_s.shape == (4, 33)
    assert jnp.allclose(f_s_s, f_ref_s, atol=1e-4, rtol=1e-4)
    assert jnp.allclose(s_sc_s, s_ref_s, atol=1e-5, rtol=1e-5)

    print("KERNEL_OK")
</pallas_src>

<mosaic_0001>
module attributes {stable_mosaic.version = 11 : i64} {
  func.func @_shear_rate_kernel(%arg0: i32, %arg1: memref<128x1024xf32, #tpu.memory_space<vmem>>, %arg2: memref<128x1024xf32, #tpu.memory_space<vmem>>, %arg3: memref<128x1024xf32, #tpu.memory_space<vmem>>, %arg4: memref<128x1024xf32, #tpu.memory_space<vmem>>, %arg5: memref<128x1024xf32, #tpu.memory_space<vmem>>, %arg6: memref<128x1024xf32, #tpu.memory_space<vmem>>, %arg7: memref<128x1024xf32, #tpu.memory_space<vmem>>, %arg8: memref<128x1024xf32, #tpu.memory_space<vmem>>) attributes {dimension_semantics = [#tpu.dimension_semantics<parallel>], iteration_bounds = array<i64: 6>, scalar_prefetch = 0 : i64, scratch_operands = 0 : i64, tpu.core_type = #tpu.core_type<tc>, window_params = [{transform_indices = @transform_0, window_bounds = array<i64: 128, 1024>}, {transform_indices = @transform_1, window_bounds = array<i64: 128, 1024>}, {transform_indices = @transform_2, window_bounds = array<i64: 128, 1024>}, {transform_indices = @transform_3, window_bounds = array<i64: 128, 1024>}, {transform_indices = @transform_4, window_bounds = array<i64: 128, 1024>}, {transform_indices = @transform_5, window_bounds = array<i64: 128, 1024>}, {transform_indices = @transform_6, window_bounds = array<i64: 128, 1024>}, {transform_indices = @transform_7, window_bounds = array<i64: 128, 1024>}]} {
    %c0 = arith.constant 0 : index
    %c0_0 = arith.constant 0 : index
    %0 = vector.load %arg1[%c0, %c0_0] : memref<128x1024xf32, #tpu.memory_space<vmem>>, vector<128x1024xf32>
    %c0_1 = arith.constant 0 : index
    %c0_2 = arith.constant 0 : index
    %1 = vector.load %arg2[%c0_1, %c0_2] : memref<128x1024xf32, #tpu.memory_space<vmem>>, vector<128x1024xf32>
    %c0_3 = arith.constant 0 : index
    %c0_4 = arith.constant 0 : index
    %2 = vector.load %arg3[%c0_3, %c0_4] : memref<128x1024xf32, #tpu.memory_space<vmem>>, vector<128x1024xf32>
    %c0_5 = arith.constant 0 : index
    %c0_6 = arith.constant 0 : index
    %3 = vector.load %arg4[%c0_5, %c0_6] : memref<128x1024xf32, #tpu.memory_space<vmem>>, vector<128x1024xf32>
    %c0_7 = arith.constant 0 : index
    %c0_8 = arith.constant 0 : index
    %4 = vector.load %arg5[%c0_7, %c0_8] : memref<128x1024xf32, #tpu.memory_space<vmem>>, vector<128x1024xf32>
    %c0_9 = arith.constant 0 : index
    %c0_10 = arith.constant 0 : index
    %5 = vector.load %arg6[%c0_9, %c0_10] : memref<128x1024xf32, #tpu.memory_space<vmem>>, vector<128x1024xf32>
    %6 = arith.subf %0, %5 : vector<128x1024xf32>
    %7 = arith.subf %6, %4 : vector<128x1024xf32>
    %8 = arith.mulf %3, %7 : vector<128x1024xf32>
    %cst = arith.constant 0.000000e+00 : f32
    %9 = vector.broadcast %cst : f32 to vector<128x1024xf32>
    %10 = arith.subf %9, %8 : vector<128x1024xf32>
    %11 = math.exp %10 : vector<128x1024xf32>
    %cst_11 = arith.constant 1.000000e+00 : f32
    %12 = vector.broadcast %cst_11 : f32 to vector<128x1024xf32>
    %13 = arith.addf %12, %11 : vector<128x1024xf32>
    %14 = math.log %13 : vector<128x1024xf32>
    %15 = arith.addf %14, %8 : vector<128x1024xf32>
    %16 = tpu.reciprocal %3 : vector<128x1024xf32> -> vector<128x1024xf32>
    %17 = arith.mulf %16, %2 : vector<128x1024xf32>
    %18 = arith.mulf %17, %15 : vector<128x1024xf32>
    %19 = arith.subf %1, %18 : vector<128x1024xf32>
    %c0_12 = arith.constant 0 : index
    %c0_13 = arith.constant 0 : index
    %20 = vector.load %arg7[%c0_12, %c0_13] : memref<128x1024xf32, #tpu.memory_space<vmem>>, vector<128x1024xf32>
    tpu.vector_store %arg7[%c0_12, %c0_13], %19 {strides = array<i32>} : memref<128x1024xf32, #tpu.memory_space<vmem>>, vector<128x1024xf32>,
    %c0_14 = arith.constant 0 : index
    %c0_15 = arith.constant 0 : index
    %21 = vector.load %arg8[%c0_14, %c0_15] : memref<128x1024xf32, #tpu.memory_space<vmem>>, vector<128x1024xf32>
    tpu.vector_store %arg8[%c0_14, %c0_15], %8 {strides = array<i32>} : memref<128x1024xf32, #tpu.memory_space<vmem>>, vector<128x1024xf32>,
    return
  }
  func.func @transform_0(%arg0: i32) -> (i32, i32) {
    %c0_i32 = arith.constant 0 : i32
    %c0_i32_0 = arith.constant 0 : i32
    return %arg0, %c0_i32 : i32, i32
  }
  func.func @transform_1(%arg0: i32) -> (i32, i32) {
    %c0_i32 = arith.constant 0 : i32
    %c0_i32_0 = arith.constant 0 : i32
    return %arg0, %c0_i32 : i32, i32
  }
  func.func @transform_2(%arg0: i32) -> (i32, i32) {
    %c0_i32 = arith.constant 0 : i32
    %c0_i32_0 = arith.constant 0 : i32
    return %arg0, %c0_i32 : i32, i32
  }
  func.func @transform_3(%arg0: i32) -> (i32, i32) {
    %c0_i32 = arith.constant 0 : i32
    %c0_i32_0 = arith.constant 0 : i32
    return %arg0, %c0_i32 : i32, i32
  }
  func.func @transform_4(%arg0: i32) -> (i32, i32) {
    %c0_i32 = arith.constant 0 : i32
    %c0_i32_0 = arith.constant 0 : i32
    return %arg0, %c0_i32 : i32, i32
  }
  func.func @transform_5(%arg0: i32) -> (i32, i32) {
    %c0_i32 = arith.constant 0 : i32
    %c0_i32_0 = arith.constant 0 : i32
    return %arg0, %c0_i32 : i32, i32
  }
  func.func @transform_6(%arg0: i32) -> (i32, i32) {
    %c0_i32 = arith.constant 0 : i32
    %c0_i32_0 = arith.constant 0 : i32
    return %arg0, %c0_i32 : i32, i32
  }
  func.func @transform_7(%arg0: i32) -> (i32, i32) {
    %c0_i32 = arith.constant 0 : i32
    %c0_i32_0 = arith.constant 0 : i32
    return %arg0, %c0_i32 : i32, i32
  }
}

</mosaic_0001>

<llo_original>
// kernel: tpu_custom_call.1
$region0: #{tpu_custom_call.1}
  #allocation0 [shape = 'u32[]', space=smem, size = 0x4, offset = 0x4, fixed_abs, tag = 'smem constant byte address 0x4 - core index']
  #allocation1 [shape = 'u32[144,128]{1,0:T(1,128)}', space=vmem, size = 0x12000, scoped, tag = 'internal scratch']
  %s0 = inlined_call_operand.hbm [shape: f32[650,1024], index: 0, kind: input, shape index: {}]
  %s1 = inlined_call_operand.hbm [shape: f32[650,1024], index: 1, kind: input, shape index: {}]
  %s2 = inlined_call_operand.hbm [shape: f32[650,1024], index: 2, kind: input, shape index: {}]
  %s3 = inlined_call_operand.hbm [shape: f32[650,1024], index: 3, kind: input, shape index: {}]
  %s4 = inlined_call_operand.hbm [shape: f32[650,1024], index: 4, kind: input, shape index: {}]
  %s5 = inlined_call_operand.hbm [shape: f32[650,1024], index: 5, kind: input, shape index: {}]
  %s6 = inlined_call_operand.hbm [shape: f32[650,1024], index: 6, kind: output, shape index: {0}]
  %s7 = inlined_call_operand.hbm [shape: f32[650,1024], index: 7, kind: output, shape index: {1}]
  %8 = xla_tuple %s6, %s7
  %s9 = sld [smem:[#allocation0]]
  $region89: #{tpu_custom_call.1} parent=0
    _
  %s11 = ssub.s32 1, %s9
  %s12 = scalar_select 0, %s11, %s9
  $region1: #{tpu_custom_call.1} parent=0
    #allocation2 [shape = 'u8[1048576]{0}', space=vmem, size = 0x100000, scoped, tag = 'input window, operand 0']
    #allocation3 [shape = 's32[2]{0}', space=sflag, size = 0x8, scoped, tag = 'scoped memory for tpu_custom_call.1']
    #allocation4 [shape = 's32[2]{0}', space=sflag, size = 0x8, scoped, tag = 'scoped memory for tpu_custom_call.1']
    #allocation5 [shape = 'u8[1048576]{0}', space=vmem, size = 0x100000, scoped, tag = 'input window, operand 1']
    #allocation6 [shape = 's32[2]{0}', space=sflag, size = 0x8, scoped, tag = 'scoped memory for tpu_custom_call.1']
    #allocation7 [shape = 'u8[1048576]{0}', space=vmem, size = 0x100000, scoped, tag = 'input window, operand 2']
    #allocation8 [shape = 'u8[1048576]{0}', space=vmem, size = 0x100000, scoped, tag = 'input window, operand 3']
    #allocation9 [shape = 's32[2]{0}', space=sflag, size = 0x8, scoped, tag = 'scoped memory for tpu_custom_call.1']
    #allocation10 [shape = 'u8[1048576]{0}', space=vmem, size = 0x100000, scoped, tag = 'input window, operand 4']
    #allocation11 [shape = 'u8[1048576]{0}', space=vmem, size = 0x100000, scoped, tag = 'input window, operand 5']
    #allocation12 [shape = 's32[2]{0}', space=sflag, size = 0x8, scoped, tag = 'scoped memory for tpu_custom_call.1']
    #allocation13 [shape = 'u8[1048576]{0}', space=vmem, size = 0x100000, scoped, tag = 'output window, operand 0']
    #allocation14 [shape = 'u8[1048576]{0}', space=vmem, size = 0x100000, scoped, tag = 'output window, operand 1']
    #allocation15 [shape = 's32[2]{0}', space=sflag, size = 0x8, scoped, tag = 'scoped memory for tpu_custom_call.1']
    %13 = vsyncpa [#allocation3], 0
    %s14 = scalar_lea.sflag [#allocation3], 1
    %15 = vsyncpa %s14, 0
    %16 = vsyncpa [#allocation6], 0
    %s17 = scalar_lea.sflag [#allocation6], 1
    %18 = vsyncpa %s17, 0
    %19 = vsyncpa [#allocation9], 0
    %s20 = scalar_lea.sflag [#allocation9], 1
    %21 = vsyncpa %s20, 0
    %22 = vsyncpa [#allocation12], 0
    %s23 = scalar_lea.sflag [#allocation12], 1
    %24 = vsyncpa %s23, 0
    %25 = vsyncpa [#allocation4], 0
    %s26 = scalar_lea.sflag [#allocation4], 1
    %27 = vsyncpa %s26, 0
    %28 = vsyncpa [#allocation15], 0
    %s29 = scalar_lea.sflag [#allocation15], 1
    %30 = vsyncpa %s29, 0
    loop: start=0, step=1, limit=8
    $region2: #{tpu_custom_call.1} parent=1 // loop_pre_header
      _
    $region3: #{tpu_custom_call.1} parent=1 // loop_header
      %s32 = sphi 0, %s36
      %p33 = scmp.ge.s32.totalorder %s32, 8
      %s42 = sphi 0, %s44
      %s45 = sphi 0, %s42
      %s46 = sphi 0, %s45
      %s62 = sphi 0, %s46
      %s68 = sphi 0, %s70
      %s71 = sphi 0, %s68
      %s72 = sphi 0, %s71
      %s88 = sphi 0, %s72
      %s94 = sphi 0, %s96
      %s97 = sphi 0, %s94
      %s98 = sphi 0, %s97
      %s114 = sphi 0, %s98
      %s120 = sphi 0, %s122
      %s123 = sphi 0, %s120
      %s124 = sphi 0, %s123
      %s140 = sphi 0, %s124
      %s146 = sphi 0, %s148
      %s149 = sphi 0, %s146
      %s150 = sphi 0, %s149
      %s166 = sphi 0, %s150
      %s172 = sphi 0, %s174
      %s175 = sphi 0, %s172
      %s176 = sphi 0, %s175
      %s192 = sphi 0, %s176
      %s198 = sphi 0, %s200
      %s201 = sphi 0, %s198
      %s202 = sphi 0, %s201
      %s218 = sphi 0, %s202
      %s224 = sphi 0, %s226
      %s227 = sphi 0, %s224
      %s228 = sphi 0, %s227
      %s244 = sphi 0, %s228
    $region4: #{tpu_custom_call.1} parent=1 // loop_header_branch
      %35 = sbr.rel (%p33) target = $region8
    $region5: #{tpu_custom_call.1} parent=1 // loop_body
      %s37 = ssub.s32 %s32, 1
      %s38 = ssub.s32 %s32, 2
      %s39 = sadd.s32 %s32, 1
      %s40 = ssub.s32 %s32, %s39
      %p41 = scmp.eq.s32.totalorder %s40, 0
      %s43 = sadd.s32 %s42, 1
      %s44 = scalar_select %p41, %s42, %s43
      %p47 = pneg %p41
      %p48 = scmp.eq.s32.totalorder %s32, 5
      %p49 = por %p47, %p48
      %p50 = scmp.ne.s32.totalorder %s42, %s45
      %p51 = scmp.eq.s32.totalorder %s32, 0
      %p52 = por %p50, %p51
      %p53 = scmp.ne.s32.totalorder %s42, %s45
      %p54 = scmp.eq.s32.totalorder %s37, 5
      %p55 = por %p53, %p54
      %p56 = scmp.ne.s32.totalorder %s45, %s46
      %p57 = scmp.eq.s32.totalorder %s37, 0
      %p58 = por %p56, %p57
      %p59 = scmp.ne.s32.totalorder %s45, %s46
      %p60 = scmp.eq.s32.totalorder %s38, 5
      %p61 = por %p59, %p60
      %p63 = scmp.ne.s32.totalorder %s46, %s62
      %p64 = scmp.eq.s32.totalorder %s38, 0
      %p65 = por %p63, %p64
      %s66 = ssub.s32 %s32, %s39
      %p67 = scmp.eq.s32.totalorder %s66, 0
      %s69 = sadd.s32 %s68, 1
      %s70 = scalar_select %p67, %s68, %s69
      %p73 = pneg %p67
      %p74 = scmp.eq.s32.totalorder %s32, 5
      %p75 = por %p73, %p74
      %p76 = scmp.ne.s32.totalorder %s68, %s71
      %p77 = scmp.eq.s32.totalorder %s32, 0
      %p78 = por %p76, %p77
      %p79 = scmp.ne.s32.totalorder %s68, %s71
      %p80 = scmp.eq.s32.totalorder %s37, 5
      %p81 = por %p79, %p80
      %p82 = scmp.ne.s32.totalorder %s71, %s72
      %p83 = scmp.eq.s32.totalorder %s37, 0
      %p84 = por %p82, %p83
      %p85 = scmp.ne.s32.totalorder %s71, %s72
      %p86 = scmp.eq.s32.totalorder %s38, 5
      %p87 = por %p85, %p86
      %p89 = scmp.ne.s32.totalorder %s72, %s88
      %p90 = scmp.eq.s32.totalorder %s38, 0
      %p91 = por %p89, %p90
      %s92 = ssub.s32 %s32, %s39
      %p93 = scmp.eq.s32.totalorder %s92, 0
      %s95 = sadd.s32 %s94, 1
      %s96 = scalar_select %p93, %s94, %s95
      %p99 = pneg %p93
      %p100 = scmp.eq.s32.totalorder %s32, 5
      %p101 = por %p99, %p100
      %p102 = scmp.ne.s32.totalorder %s94, %s97
      %p103 = scmp.eq.s32.totalorder %s32, 0
      %p104 = por %p102, %p103
      %p105 = scmp.ne.s32.totalorder %s94, %s97
      %p106 = scmp.eq.s32.totalorder %s37, 5
      %p107 = por %p105, %p106
      %p108 = scmp.ne.s32.totalorder %s97, %s98
      %p109 = scmp.eq.s32.totalorder %s37, 0
      %p110 = por %p108, %p109
      %p111 = scmp.ne.s32.totalorder %s97, %s98
      %p112 = scmp.eq.s32.totalorder %s38, 5
      %p113 = por %p111, %p112
      %p115 = scmp.ne.s32.totalorder %s98, %s114
      %p116 = scmp.eq.s32.totalorder %s38, 0
      %p117 = por %p115, %p116
      %s118 = ssub.s32 %s32, %s39
      %p119 = scmp.eq.s32.totalorder %s118, 0
      %s121 = sadd.s32 %s120, 1
      %s122 = scalar_select %p119, %s120, %s121
      %p125 = pneg %p119
      %p126 = scmp.eq.s32.totalorder %s32, 5
      %p127 = por %p125, %p126
      %p128 = scmp.ne.s32.totalorder %s120, %s123
      %p129 = scmp.eq.s32.totalorder %s32, 0
      %p130 = por %p128, %p129
      %p131 = scmp.ne.s32.totalorder %s120, %s123
      %p132 = scmp.eq.s32.totalorder %s37, 5
      %p133 = por %p131, %p132
      %p134 = scmp.ne.s32.totalorder %s123, %s124
      %p135 = scmp.eq.s32.totalorder %s37, 0
      %p136 = por %p134, %p135
      %p137 = scmp.ne.s32.totalorder %s123, %s124
      %p138 = scmp.eq.s32.totalorder %s38, 5
      %p139 = por %p137, %p138
      %p141 = scmp.ne.s32.totalorder %s124, %s140
      %p142 = scmp.eq.s32.totalorder %s38, 0
      %p143 = por %p141, %p142
      %s144 = ssub.s32 %s32, %s39
      %p145 = scmp.eq.s32.totalorder %s144, 0
      %s147 = sadd.s32 %s146, 1
      %s148 = scalar_select %p145, %s146, %s147
      %p151 = pneg %p145
      %p152 = scmp.eq.s32.totalorder %s32, 5
      %p153 = por %p151, %p152
      %p154 = scmp.ne.s32.totalorder %s146, %s149
      %p155 = scmp.eq.s32.totalorder %s32, 0
      %p156 = por %p154, %p155
      %p157 = scmp.ne.s32.totalorder %s146, %s149
      %p158 = scmp.eq.s32.totalorder %s37, 5
      %p159 = por %p157, %p158
      %p160 = scmp.ne.s32.totalorder %s149, %s150
      %p161 = scmp.eq.s32.totalorder %s37, 0
      %p162 = por %p160, %p161
      %p163 = scmp.ne.s32.totalorder %s149, %s150
      %p164 = scmp.eq.s32.totalorder %s38, 5
      %p165 = por %p163, %p164
      %p167 = scmp.ne.s32.totalorder %s150, %s166
      %p168 = scmp.eq.s32.totalorder %s38, 0
      %p169 = por %p167, %p168
      %s170 = ssub.s32 %s32, %s39
      %p171 = scmp.eq.s32.totalorder %s170, 0
      %s173 = sadd.s32 %s172, 1
      %s174 = scalar_select %p171, %s172, %s173
      %p177 = pneg %p171
      %p178 = scmp.eq.s32.totalorder %s32, 5
      %p179 = por %p177, %p178
      %p180 = scmp.ne.s32.totalorder %s172, %s175
      %p181 = scmp.eq.s32.totalorder %s32, 0
      %p182 = por %p180, %p181
      %p183 = scmp.ne.s32.totalorder %s172, %s175
      %p184 = scmp.eq.s32.totalorder %s37, 5
      %p185 = por %p183, %p184
      %p186 = scmp.ne.s32.totalorder %s175, %s176
      %p187 = scmp.eq.s32.totalorder %s37, 0
      %p188 = por %p186, %p187
      %p189 = scmp.ne.s32.totalorder %s175, %s176
      %p190 = scmp.eq.s32.totalorder %s38, 5
      %p191 = por %p189, %p190
      %p193 = scmp.ne.s32.totalorder %s176, %s192
      %p194 = scmp.eq.s32.totalorder %s38, 0
      %p195 = por %p193, %p194
      %s196 = ssub.s32 %s32, %s39
      %p197 = scmp.eq.s32.totalorder %s196, 0
      %s199 = sadd.s32 %s198, 1
      %s200 = scalar_select %p197, %s198, %s199
      %p203 = pneg %p197
      %p204 = scmp.eq.s32.totalorder %s32, 5
      %p205 = por %p203, %p204
      %p206 = scmp.ne.s32.totalorder %s198, %s201
      %p207 = scmp.eq.s32.totalorder %s32, 0
      %p208 = por %p206, %p207
      %p209 = scmp.ne.s32.totalorder %s198, %s201
      %p210 = scmp.eq.s32.totalorder %s37, 5
      %p211 = por %p209, %p210
      %p212 = scmp.ne.s32.totalorder %s201, %s202
      %p213 = scmp.eq.s32.totalorder %s37, 0
      %p214 = por %p212, %p213
      %p215 = scmp.ne.s32.totalorder %s201, %s202
      %p216 = scmp.eq.s32.totalorder %s38, 5
      %p217 = por %p215, %p216
      %p219 = scmp.ne.s32.totalorder %s202, %s218
      %p220 = scmp.eq.s32.totalorder %s38, 0
      %p221 = por %p219, %p220
      %s222 = ssub.s32 %s32, %s39
      %p223 = scmp.eq.s32.totalorder %s222, 0
      %s225 = sadd.s32 %s224, 1
      %s226 = scalar_select %p223, %s224, %s225
      %p229 = pneg %p223
      %p230 = scmp.eq.s32.totalorder %s32, 5
      %p231 = por %p229, %p230
      %p232 = scmp.ne.s32.totalorder %s224, %s227
      %p233 = scmp.eq.s32.totalorder %s32, 0
      %p234 = por %p232, %p233
      %p235 = scmp.ne.s32.totalorder %s224, %s227
      %p236 = scmp.eq.s32.totalorder %s37, 5
      %p237 = por %p235, %p236
      %p238 = scmp.ne.s32.totalorder %s227, %s228
      %p239 = scmp.eq.s32.totalorder %s37, 0
      %p240 = por %p238, %p239
      %p241 = scmp.ne.s32.totalorder %s227, %s228
      %p242 = scmp.eq.s32.totalorder %s38, 5
      %p243 = por %p241, %p242
      %p245 = scmp.ne.s32.totalorder %s228, %s244
      %p246 = scmp.eq.s32.totalorder %s38, 0
      %p247 = por %p245, %p246
      %p248 = scmp.le.s32.totalorder 1, %s32
      %p249 = scmp.lt.s32.totalorder %s32, 7
      %p250 = pnand %p248, %p249
      %p251 = pneg %p250
      // Predicated region
      $region9: #{tpu_custom_call.1} parent=5 // pred_check
        _
      $region10: #{tpu_custom_call.1} parent=5 // pred_check_branch
        %253 = sbr.rel (%p250) target = $region12
      $region11: #{tpu_custom_call.1} parent=5 // pred_region
        %s254 = ssub.s32 %s32, 1
      $region12: #{tpu_custom_call.1} parent=5 // pred_fallthru
        _
      %p255 = scmp.lt.s32.totalorder %s32, 6
      // Predicated region
      $region13: #{tpu_custom_call.1} parent=5 // pred_check
        %p256 = pneg %p255
      $region14: #{tpu_custom_call.1} parent=5 // pred_check_branch
        %258 = sbr.rel (%p256) target = $region16
      $region15: #{tpu_custom_call.1} parent=5 // pred_region
        // Predicated region
        $region17: #{tpu_custom_call.1} parent=15 // pred_check
          %p259 = pneg %p52
        $region18: #{tpu_custom_call.1} parent=15 // pred_check_branch
          %261 = sbr.rel (%p259) target = $region20
        $region19: #{tpu_custom_call.1} parent=15 // pred_region
          %s262 = sand.u32 %s42, 1
          %s263 = scalar_lea.sflag [#allocation3], %s262
          %s264 = sand.u32 %s42, 1
          %s265 = smul.addr %s264, 1024
          %s266 = scalar_lea.vmem [#allocation2], %s265
          %s267 = smul.u32 16, %s32
          %s268 = ssub.s32 82, %s267
          %p269 = scmp.lt.s32.totalorder %s268, 16
          %s270 = scalar_select %p269, %s268, 16
          %s271 = smul.u32 128, %s270
          %s272 = smul.u32 %s271, 8
          %s274 = ssub.s32 16384, %s272
          %275 = vsyncadd %s263, %s274
          %p276 = scmp.ne.s32.totalorder 0, %s272
          %s277 = smul.addr %s267, 8
          %s278 = smul.addr %s277, 128
          %s279 = scalar_lea.hbm %s0, %s278
          %s280 = smul.u32 64, %s270
          %s281 = sshll.u32 %s266, 4
          %s282 = int_to_ptr.vmem [resolvable:$true] %s281
          %s283 = sshll.u32 %s280, 4
          %287 = dma.hbm_to_vmem [thread:$0]  (%p276), %s279, %s283, %s282, %s263, 1024, 1024, 64
        $region20: #{tpu_custom_call.1} parent=15 // pred_fallthru
          _
        // Predicated region
        $region21: #{tpu_custom_call.1} parent=15 // pred_check
          %p288 = pneg %p78
        $region22: #{tpu_custom_call.1} parent=15 // pred_check_branch
          %290 = sbr.rel (%p288) target = $region24
        $region23: #{tpu_custom_call.1} parent=15 // pred_region
          %s291 = sand.u32 %s32, 1
          %s292 = scalar_lea.sflag [#allocation6], %s291
          %s293 = sand.u32 %s68, 1
          %s294 = smul.addr %s293, 1024
          %s295 = scalar_lea.vmem [#allocation5], %s294
          %s296 = smul.u32 16, %s32
          %s297 = ssub.s32 82, %s296
          %p298 = scmp.lt.s32.totalorder %s297, 16
          %s299 = scalar_select %p298, %s297, 16
          %s300 = smul.u32 128, %s299
          %s301 = smul.u32 %s300, 8
          %s303 = ssub.s32 16384, %s301
          %304 = vsyncadd %s292, %s303
          %p305 = scmp.ne.s32.totalorder 0, %s301
          %s306 = smul.addr %s296, 8
          %s307 = smul.addr %s306, 128
          %s308 = scalar_lea.hbm %s1, %s307
          %s309 = smul.u32 64, %s299
          %s310 = sshll.u32 %s295, 4
          %s311 = int_to_ptr.vmem [resolvable:$true] %s310
          %s312 = sshll.u32 %s309, 4
          %316 = dma.hbm_to_vmem [thread:$0]  (%p305), %s308, %s312, %s311, %s292, 1024, 1024, 64
        $region24: #{tpu_custom_call.1} parent=15 // pred_fallthru
          _
        // Predicated region
        $region25: #{tpu_custom_call.1} parent=15 // pred_check
          %p317 = pneg %p104
        $region26: #{tpu_custom_call.1} parent=15 // pred_check_branch
          %319 = sbr.rel (%p317) target = $region28
        $region27: #{tpu_custom_call.1} parent=15 // pred_region
          %s320 = sand.u32 %s32, 1
          %s321 = scalar_lea.sflag [#allocation6], %s320
          %s322 = sand.u32 %s94, 1
          %s323 = smul.addr %s322, 1024
          %s324 = scalar_lea.vmem [#allocation7], %s323
          %s325 = smul.u32 16, %s32
          %s326 = ssub.s32 82, %s325
          %p327 = scmp.lt.s32.totalorder %s326, 16
          %s328 = scalar_select %p327, %s326, 16
          %s329 = smul.u32 128, %s328
          %s330 = smul.u32 %s329, 8
          %s332 = ssub.s32 16384, %s330
          %333 = vsyncadd %s321, %s332
          %p334 = scmp.ne.s32.totalorder 0, %s330
          %s335 = smul.addr %s325, 8
          %s336 = smul.addr %s335, 128
          %s337 = scalar_lea.hbm %s2, %s336
          %s338 = smul.u32 64, %s328
          %s339 = sshll.u32 %s324, 4
          %s340 = int_to_ptr.vmem [resolvable:$true] %s339
          %s341 = sshll.u32 %s338, 4
          %345 = dma.hbm_to_vmem [thread:$0]  (%p334), %s337, %s341, %s340, %s321, 1024, 1024, 64
        $region28: #{tpu_custom_call.1} parent=15 // pred_fallthru
          _
        // Predicated region
        $region29: #{tpu_custom_call.1} parent=15 // pred_check
          %p346 = pneg %p130
        $region30: #{tpu_custom_call.1} parent=15 // pred_check_branch
          %348 = sbr.rel (%p346) target = $region32
        $region31: #{tpu_custom_call.1} parent=15 // pred_region
          %s349 = sand.u32 %s32, 1
          %s350 = scalar_lea.sflag [#allocation9], %s349
          %s351 = sand.u32 %s120, 1
          %s352 = smul.addr %s351, 1024
          %s353 = scalar_lea.vmem [#allocation8], %s352
          %s354 = smul.u32 16, %s32
          %s355 = ssub.s32 82, %s354
          %p356 = scmp.lt.s32.totalorder %s355, 16
          %s357 = scalar_select %p356, %s355, 16
          %s358 = smul.u32 128, %s357
          %s359 = smul.u32 %s358, 8
          %s361 = ssub.s32 16384, %s359
          %362 = vsyncadd %s350, %s361
          %p363 = scmp.ne.s32.totalorder 0, %s359
          %s364 = smul.addr %s354, 8
          %s365 = smul.addr %s364, 128
          %s366 = scalar_lea.hbm %s3, %s365
          %s367 = smul.u32 64, %s357
          %s368 = sshll.u32 %s353, 4
          %s369 = int_to_ptr.vmem [resolvable:$true] %s368
          %s370 = sshll.u32 %s367, 4
          %374 = dma.hbm_to_vmem [thread:$0]  (%p363), %s366, %s370, %s369, %s350, 1024, 1024, 64
        $region32: #{tpu_custom_call.1} parent=15 // pred_fallthru
          _
        // Predicated region
        $region33: #{tpu_custom_call.1} parent=15 // pred_check
          %p375 = pneg %p156
        $region34: #{tpu_custom_call.1} parent=15 // pred_check_branch
          %377 = sbr.rel (%p375) target = $region36
        $region35: #{tpu_custom_call.1} parent=15 // pred_region
          %s378 = sand.u32 %s32, 1
          %s379 = scalar_lea.sflag [#allocation9], %s378
          %s380 = sand.u32 %s146, 1
          %s381 = smul.addr %s380, 1024
          %s382 = scalar_lea.vmem [#allocation10], %s381
          %s383 = smul.u32 16, %s32
          %s384 = ssub.s32 82, %s383
          %p385 = scmp.lt.s32.totalorder %s384, 16
          %s386 = scalar_select %p385, %s384, 16
          %s387 = smul.u32 128, %s386
          %s388 = smul.u32 %s387, 8
          %s390 = ssub.s32 16384, %s388
          %391 = vsyncadd %s379, %s390
          %p392 = scmp.ne.s32.totalorder 0, %s388
          %s393 = smul.addr %s383, 8
          %s394 = smul.addr %s393, 128
          %s395 = scalar_lea.hbm %s4, %s394
          %s396 = smul.u32 64, %s386
          %s397 = sshll.u32 %s382, 4
          %s398 = int_to_ptr.vmem [resolvable:$true] %s397
          %s399 = sshll.u32 %s396, 4
          %403 = dma.hbm_to_vmem [thread:$0]  (%p392), %s395, %s399, %s398, %s379, 1024, 1024, 64
        $region36: #{tpu_custom_call.1} parent=15 // pred_fallthru
          _
        // Predicated region
        $region37: #{tpu_custom_call.1} parent=15 // pred_check
          %p404 = pneg %p182
        $region38: #{tpu_custom_call.1} parent=15 // pred_check_branch
          %406 = sbr.rel (%p404) target = $region40
        $region39: #{tpu_custom_call.1} parent=15 // pred_region
          %s407 = sand.u32 %s172, 1
          %s408 = scalar_lea.sflag [#allocation12], %s407
          %s409 = sand.u32 %s172, 1
          %s410 = smul.addr %s409, 1024
          %s411 = scalar_lea.vmem [#allocation11], %s410
          %s412 = smul.u32 16, %s32
          %s413 = ssub.s32 82, %s412
          %p414 = scmp.lt.s32.totalorder %s413, 16
          %s415 = scalar_select %p414, %s413, 16
          %s416 = smul.u32 128, %s415
          %s417 = smul.u32 %s416, 8
          %s419 = ssub.s32 16384, %s417
          %420 = vsyncadd %s408, %s419
          %p421 = scmp.ne.s32.totalorder 0, %s417
          %s422 = smul.addr %s412, 8
          %s423 = smul.addr %s422, 128
          %s424 = scalar_lea.hbm %s5, %s423
          %s425 = smul.u32 64, %s415
          %s426 = sshll.u32 %s411, 4
          %s427 = int_to_ptr.vmem [resolvable:$true] %s426
          %s428 = sshll.u32 %s425, 4
          %432 = dma.hbm_to_vmem [thread:$0]  (%p421), %s424, %s428, %s427, %s408, 1024, 1024, 64
        $region40: #{tpu_custom_call.1} parent=15 // pred_fallthru
          _
      $region16: #{tpu_custom_call.1} parent=5 // pred_fallthru
        _
      %p433 = scmp.le.s32.totalorder 1, %s32
      %p434 = scmp.lt.s32.totalorder %s32, 7
      %p435 = pnand %p433, %p434
      %p436 = pneg %p435
      // Predicated region
      $region41: #{tpu_custom_call.1} parent=5 // pred_check
        _
      $region42: #{tpu_custom_call.1} parent=5 // pred_check_branch
        %438 = sbr.rel (%p435) target = $region44
      $region43: #{tpu_custom_call.1} parent=5 // pred_region
        %s439 = ssub.s32 %s32, 1
        %s440 = sand.u32 %s45, 1
        %s441 = scalar_lea.sflag [#allocation3], %s440
        %s442 = sand.u32 %s45, 1
        %s443 = smul.addr %s442, 1024
        %s444 = scalar_lea.vmem [#allocation2], %s443
        // Predicated region
        $region45: #{tpu_custom_call.1} parent=43 // pred_check
          %p445 = pneg %p58
        $region46: #{tpu_custom_call.1} parent=43 // pred_check_branch
          %447 = sbr.rel (%p445) target = $region48
        $region47: #{tpu_custom_call.1} parent=43 // pred_region
          %448 = dma.done %s441, 16384
        $region48: #{tpu_custom_call.1} parent=43 // pred_fallthru
          _
        %s449 = sand.u32 %s37, 1
        %s450 = scalar_lea.sflag [#allocation6], %s449
        %s451 = sand.u32 %s71, 1
        %s452 = smul.addr %s451, 1024
        %s453 = scalar_lea.vmem [#allocation5], %s452
        // Predicated region
        $region49: #{tpu_custom_call.1} parent=43 // pred_check
          %p454 = pneg %p84
        $region50: #{tpu_custom_call.1} parent=43 // pred_check_branch
          %456 = sbr.rel (%p454) target = $region52
        $region51: #{tpu_custom_call.1} parent=43 // pred_region
          %457 = dma.done %s450, 16384
        $region52: #{tpu_custom_call.1} parent=43 // pred_fallthru
          _
        %s458 = sand.u32 %s37, 1
        %s459 = scalar_lea.sflag [#allocation6], %s458
        %s460 = sand.u32 %s97, 1
        %s461 = smul.addr %s460, 1024
        %s462 = scalar_lea.vmem [#allocation7], %s461
        // Predicated region
        $region53: #{tpu_custom_call.1} parent=43 // pred_check
          %p463 = pneg %p110
        $region54: #{tpu_custom_call.1} parent=43 // pred_check_branch
          %465 = sbr.rel (%p463) target = $region56
        $region55: #{tpu_custom_call.1} parent=43 // pred_region
          %466 = dma.done %s459, 16384
        $region56: #{tpu_custom_call.1} parent=43 // pred_fallthru
          _
        %s467 = sand.u32 %s37, 1
        %s468 = scalar_lea.sflag [#allocation9], %s467
        %s469 = sand.u32 %s123, 1
        %s470 = smul.addr %s469, 1024
        %s471 = scalar_lea.vmem [#allocation8], %s470
        // Predicated region
        $region57: #{tpu_custom_call.1} parent=43 // pred_check
          %p472 = pneg %p136
        $region58: #{tpu_custom_call.1} parent=43 // pred_check_branch
          %474 = sbr.rel (%p472) target = $region60
        $region59: #{tpu_custom_call.1} parent=43 // pred_region
          %475 = dma.done %s468, 16384
        $region60: #{tpu_custom_call.1} parent=43 // pred_fallthru
          _
        %s476 = sand.u32 %s37, 1
        %s477 = scalar_lea.sflag [#allocation9], %s476
        %s478 = sand.u32 %s149, 1
        %s479 = smul.addr %s478, 1024
        %s480 = scalar_lea.vmem [#allocation10], %s479
        // Predicated region
        $region61: #{tpu_custom_call.1} parent=43 // pred_check
          %p481 = pneg %p162
        $region62: #{tpu_custom_call.1} parent=43 // pred_check_branch
          %483 = sbr.rel (%p481) target = $region64
        $region63: #{tpu_custom_call.1} parent=43 // pred_region
          %484 = dma.done %s477, 16384
        $region64: #{tpu_custom_call.1} parent=43 // pred_fallthru
          _
        %s485 = sand.u32 %s175, 1
        %s486 = scalar_lea.sflag [#allocation12], %s485
        %s487 = sand.u32 %s175, 1
        %s488 = smul.addr %s487, 1024
        %s489 = scalar_lea.vmem [#allocation11], %s488
        // Predicated region
        $region65: #{tpu_custom_call.1} parent=43 // pred_check
          %p490 = pneg %p188
        $region66: #{tpu_custom_call.1} parent=43 // pred_check_branch
          %492 = sbr.rel (%p490) target = $region68
        $region67: #{tpu_custom_call.1} parent=43 // pred_region
          %493 = dma.done %s486, 16384
        $region68: #{tpu_custom_call.1} parent=43 // pred_fallthru
          _
        %s494 = sand.u32 %s45, 1
        %s495 = scalar_lea.sflag [#allocation3], %s494
        %s496 = sand.u32 %s45, 1
        %s497 = smul.addr %s496, 1024
        %s498 = scalar_lea.vmem [#allocation2], %s497
        %p499 = pneg %p58
        %p500 = pneg %p55
        %s501 = sand.u32 %s37, 1
        %s502 = scalar_lea.sflag [#allocation6], %s501
        %s503 = sand.u32 %s71, 1
        %s504 = smul.addr %s503, 1024
        %s505 = scalar_lea.vmem [#allocation5], %s504
        %p506 = pneg %p84
        %p507 = pneg %p81
        %s508 = sand.u32 %s37, 1
        %s509 = scalar_lea.sflag [#allocation6], %s508
        %s510 = sand.u32 %s97, 1
        %s511 = smul.addr %s510, 1024
        %s512 = scalar_lea.vmem [#allocation7], %s511
        %p513 = pneg %p110
        %p514 = pneg %p107
        %s515 = sand.u32 %s37, 1
        %s516 = scalar_lea.sflag [#allocation9], %s515
        %s517 = sand.u32 %s123, 1
        %s518 = smul.addr %s517, 1024
        %s519 = scalar_lea.vmem [#allocation8], %s518
        %p520 = pneg %p136
        %p521 = pneg %p133
        %s522 = sand.u32 %s37, 1
        %s523 = scalar_lea.sflag [#allocation9], %s522
        %s524 = sand.u32 %s149, 1
        %s525 = smul.addr %s524, 1024
        %s526 = scalar_lea.vmem [#allocation10], %s525
        %p527 = pneg %p162
        %p528 = pneg %p159
        %s529 = sand.u32 %s175, 1
        %s530 = scalar_lea.sflag [#allocation12], %s529
        %s531 = sand.u32 %s175, 1
        %s532 = smul.addr %s531, 1024
        %s533 = scalar_lea.vmem [#allocation11], %s532
        %p534 = pneg %p188
        %p535 = pneg %p185
        %p536 = pneg %p214
        %p537 = pneg %p211
        %s538 = sand.u32 %s201, 1
        %s539 = scalar_lea.sflag [#allocation4], %s538
        %s540 = sand.u32 %s201, 1
        %s541 = smul.addr %s540, 1024
        %s542 = scalar_lea.vmem [#allocation13], %s541
        %p543 = pneg %p240
        %p544 = pneg %p237
        %s545 = sand.u32 %s227, 1
        %s546 = scalar_lea.sflag [#allocation15], %s545
        %s547 = sand.u32 %s227, 1
        %s548 = smul.addr %s547, 1024
        %s549 = scalar_lea.vmem [#allocation14], %s548
        %s550 = smul.u32 16, %s37
        %s551 = ssub.s32 82, %s550
        %p552 = scmp.lt.s32.totalorder %s551, 16
        %s553 = scalar_select %p552, %s551, 16
        %s554 = smul.u32 128, %s553
        %s555 = smul.u32 %s554, 8
        %s556 = smul.u32 16, %s37
        %s557 = ssub.s32 82, %s556
        %p558 = scmp.lt.s32.totalorder %s557, 16
        %s559 = scalar_select %p558, %s557, 16
        %s560 = smul.u32 128, %s559
        %s561 = smul.u32 %s560, 8
        %s562 = smul.u32 16, %s37
        %s563 = ssub.s32 82, %s562
        %p564 = scmp.lt.s32.totalorder %s563, 16
        %s565 = scalar_select %p564, %s563, 16
        %s566 = smul.u32 128, %s565
        %s567 = smul.u32 %s566, 8
        %s568 = smul.u32 16, %s37
        %s569 = ssub.s32 82, %s568
        %p570 = scmp.lt.s32.totalorder %s569, 16
        %s571 = scalar_select %p570, %s569, 16
        %s572 = smul.u32 128, %s571
        %s573 = smul.u32 %s572, 8
        %s574 = smul.u32 16, %s37
        %s575 = ssub.s32 82, %s574
        %p576 = scmp.lt.s32.totalorder %s575, 16
        %s577 = scalar_select %p576, %s575, 16
        %s578 = smul.u32 128, %s577
        %s579 = smul.u32 %s578, 8
        %s580 = smul.u32 16, %s37
        %s581 = ssub.s32 82, %s580
        %p582 = scmp.lt.s32.totalorder %s581, 16
        %s583 = scalar_select %p582, %s581, 16
        %s584 = smul.u32 128, %s583
        %s585 = smul.u32 %s584, 8
        %s586 = smul.u32 16, %s37
        %s587 = ssub.s32 82, %s586
        %p588 = scmp.lt.s32.totalorder %s587, 16
        %s589 = scalar_select %p588, %s587, 16
        %s590 = smul.u32 128, %s589
        %s591 = smul.u32 %s590, 8
        %s592 = smul.u32 16, %s37
        %s593 = ssub.s32 82, %s592
        %p594 = scmp.lt.s32.totalorder %s593, 16
        %s595 = scalar_select %p594, %s593, 16
        %s596 = smul.u32 128, %s595
        %s597 = smul.u32 %s596, 8
        %v598 = vld [vmem:[%s444] sm:$0xff]
        %v599 = vld [vmem:[%s444 + $0x8] sm:$0xff]
        %v600 = vld [vmem:[%s444 + $0x10] sm:$0xff]
        %v601 = vld [vmem:[%s444 + $0x18] sm:$0xff]
        %v602 = vld [vmem:[%s444 + $0x20] sm:$0xff]
        %v603 = vld [vmem:[%s444 + $0x28] sm:$0xff]
        %v604 = vld [vmem:[%s444 + $0x30] sm:$0xff]
        %v605 = vld [vmem:[%s444 + $0x38] sm:$0xff]
        %v606 = vld [vmem:[%s444 + $0x40] sm:$0xff]
        %v607 = vld [vmem:[%s444 + $0x48] sm:$0xff]
        %v608 = vld [vmem:[%s444 + $0x50] sm:$0xff]
        %v609 = vld [vmem:[%s444 + $0x58] sm:$0xff]
        %v610 = vld [vmem:[%s444 + $0x60] sm:$0xff]
        %v611 = vld [vmem:[%s444 + $0x68] sm:$0xff]
        %v612 = vld [vmem:[%s444 + $0x70] sm:$0xff]
        %v613 = vld [vmem:[%s444 + $0x78] sm:$0xff]
        %v614 = vld [vmem:[%s444 + $0x80] sm:$0xff]
        %v615 = vld [vmem:[%s444 + $0x88] sm:$0xff]
        %v616 = vld [vmem:[%s444 + $0x90] sm:$0xff]
        %v617 = vld [vmem:[%s444 + $0x98] sm:$0xff]
        %v618 = vld [vmem:[%s444 + $0xa0] sm:$0xff]
        %v619 = vld [vmem:[%s444 + $0xa8] sm:$0xff]
        %v620 = vld [vmem:[%s444 + $0xb0] sm:$0xff]
        %v621 = vld [vmem:[%s444 + $0xb8] sm:$0xff]
        %v622 = vld [vmem:[%s444 + $0xc0] sm:$0xff]
        %v623 = vld [vmem:[%s444 + $0xc8] sm:$0xff]
        %v624 = vld [vmem:[%s444 + $0xd0] sm:$0xff]
        %v625 = vld [vmem:[%s444 + $0xd8] sm:$0xff]
        %v626 = vld [vmem:[%s444 + $0xe0] sm:$0xff]
        %v627 = vld [vmem:[%s444 + $0xe8] sm:$0xff]
        %v628 = vld [vmem:[%s444 + $0xf0] sm:$0xff]
        %v629 = vld [vmem:[%s444 + $0xf8] sm:$0xff]
        %v630 = vld [vmem:[%s444 + $0x100] sm:$0xff]
        %v631 = vld [vmem:[%s444 + $0x108] sm:$0xff]
        %v632 = vld [vmem:[%s444 + $0x110] sm:$0xff]
        %v633 = vld [vmem:[%s444 + $0x118] sm:$0xff]
        %v634 = vld [vmem:[%s444 + $0x120] sm:$0xff]
        %v635 = vld [vmem:[%s444 + $0x128] sm:$0xff]
        %v636 = vld [vmem:[%s444 + $0x130] sm:$0xff]
        %v637 = vld [vmem:[%s444 + $0x138] sm:$0xff]
        %v638 = vld [vmem:[%s444 + $0x140] sm:$0xff]
        %v639 = vld [vmem:[%s444 + $0x148] sm:$0xff]
        %v640 = vld [vmem:[%s444 + $0x150] sm:$0xff]
        %v641 = vld [vmem:[%s444 + $0x158] sm:$0xff]
        %v642 = vld [vmem:[%s444 + $0x160] sm:$0xff]
        %v643 = vld [vmem:[%s444 + $0x168] sm:$0xff]
        %v644 = vld [vmem:[%s444 + $0x170] sm:$0xff]
        %v645 = vld [vmem:[%s444 + $0x178] sm:$0xff]
        %v646 = vld [vmem:[%s444 + $0x180] sm:$0xff]
        %v647 = vld [vmem:[%s444 + $0x188] sm:$0xff]
        %v648 = vld [vmem:[%s444 + $0x190] sm:$0xff]
        %v649 = vld [vmem:[%s444 + $0x198] sm:$0xff]
        %v650 = vld [vmem:[%s444 + $0x1a0] sm:$0xff]
        %v651 = vld [vmem:[%s444 + $0x1a8] sm:$0xff]
        %v652 = vld [vmem:[%s444 + $0x1b0] sm:$0xff]
        %v653 = vld [vmem:[%s444 + $0x1b8] sm:$0xff]
        %v654 = vld [vmem:[%s444 + $0x1c0] sm:$0xff]
        %v655 = vld [vmem:[%s444 + $0x1c8] sm:$0xff]
        %v656 = vld [vmem:[%s444 + $0x1d0] sm:$0xff]
        %v657 = vld [vmem:[%s444 + $0x1d8] sm:$0xff]
        %v658 = vld [vmem:[%s444 + $0x1e0] sm:$0xff]
        %v659 = vld [vmem:[%s444 + $0x1e8] sm:$0xff]
        %v660 = vld [vmem:[%s444 + $0x1f0] sm:$0xff]
        %v661 = vld [vmem:[%s444 + $0x1f8] sm:$0xff]
        %v662 = vld [vmem:[%s444 + $0x200] sm:$0xff]
        %v663 = vld [vmem:[%s444 + $0x208] sm:$0xff]
        %v664 = vld [vmem:[%s444 + $0x210] sm:$0xff]
        %v665 = vld [vmem:[%s444 + $0x218] sm:$0xff]
        %v666 = vld [vmem:[%s444 + $0x220] sm:$0xff]
        %v667 = vld [vmem:[%s444 + $0x228] sm:$0xff]
        %v668 = vld [vmem:[%s444 + $0x230] sm:$0xff]
        %v669 = vld [vmem:[%s444 + $0x238] sm:$0xff]
        %v670 = vld [vmem:[%s444 + $0x240] sm:$0xff]
        %v671 = vld [vmem:[%s444 + $0x248] sm:$0xff]
        %v672 = vld [vmem:[%s444 + $0x250] sm:$0xff]
        %v673 = vld [vmem:[%s444 + $0x258] sm:$0xff]
        %v674 = vld [vmem:[%s444 + $0x260] sm:$0xff]
        %v675 = vld [vmem:[%s444 + $0x268] sm:$0xff]
        %v676 = vld [vmem:[%s444 + $0x270] sm:$0xff]
        %v677 = vld [vmem:[%s444 + $0x278] sm:$0xff]
        %v678 = vld [vmem:[%s444 + $0x280] sm:$0xff]
        %v679 = vld [vmem:[%s444 + $0x288] sm:$0xff]
        %v680 = vld [vmem:[%s444 + $0x290] sm:$0xff]
        %v681 = vld [vmem:[%s444 + $0x298] sm:$0xff]
        %v682 = vld [vmem:[%s444 + $0x2a0] sm:$0xff]
        %v683 = vld [vmem:[%s444 + $0x2a8] sm:$0xff]
        %v684 = vld [vmem:[%s444 + $0x2b0] sm:$0xff]
        %v685 = vld [vmem:[%s444 + $0x2b8] sm:$0xff]
        %v686 = vld [vmem:[%s444 + $0x2c0] sm:$0xff]
        %v687 = vld [vmem:[%s444 + $0x2c8] sm:$0xff]
        %v688 = vld [vmem:[%s444 + $0x2d0] sm:$0xff]
        %v689 = vld [vmem:[%s444 + $0x2d8] sm:$0xff]
        %v690 = vld [vmem:[%s444 + $0x2e0] sm:$0xff]
        %v691 = vld [vmem:[%s444 + $0x2e8] sm:$0xff]
        %v692 = vld [vmem:[%s444 + $0x2f0] sm:$0xff]
        %v693 = vld [vmem:[%s444 + $0x2f8] sm:$0xff]
        %v694 = vld [vmem:[%s444 + $0x300] sm:$0xff]
        %v695 = vld [vmem:[%s444 + $0x308] sm:$0xff]
        %v696 = vld [vmem:[%s444 + $0x310] sm:$0xff]
        %v697 = vld [vmem:[%s444 + $0x318] sm:$0xff]
        %v698 = vld [vmem:[%s444 + $0x320] sm:$0xff]
        %v699 = vld [vmem:[%s444 + $0x328] sm:$0xff]
        %v700 = vld [vmem:[%s444 + $0x330] sm:$0xff]
        %v701 = vld [vmem:[%s444 + $0x338] sm:$0xff]
        %v702 = vld [vmem:[%s444 + $0x340] sm:$0xff]
        %v703 = vld [vmem:[%s444 + $0x348] sm:$0xff]
        %v704 = vld [vmem:[%s444 + $0x350] sm:$0xff]
        %v705 = vld [vmem:[%s444 + $0x358] sm:$0xff]
        %v706 = vld [vmem:[%s444 + $0x360] sm:$0xff]
        %v707 = vld [vmem:[%s444 + $0x368] sm:$0xff]
        %v708 = vld [vmem:[%s444 + $0x370] sm:$0xff]
        %v709 = vld [vmem:[%s444 + $0x378] sm:$0xff]
        %v710 = vld [vmem:[%s444 + $0x380] sm:$0xff]
        %v711 = vld [vmem:[%s444 + $0x388] sm:$0xff]
        %v712 = vld [vmem:[%s444 + $0x390] sm:$0xff]
        %v713 = vld [vmem:[%s444 + $0x398] sm:$0xff]
        %v714 = vld [vmem:[%s444 + $0x3a0] sm:$0xff]
        %v715 = vld [vmem:[%s444 + $0x3a8] sm:$0xff]
        %v716 = vld [vmem:[%s444 + $0x3b0] sm:$0xff]
        %v717 = vld [vmem:[%s444 + $0x3b8] sm:$0xff]
        %v718 = vld [vmem:[%s444 + $0x3c0] sm:$0xff]
        %v719 = vld [vmem:[%s444 + $0x3c8] sm:$0xff]
        %v720 = vld [vmem:[%s444 + $0x3d0] sm:$0xff]
        %v721 = vld [vmem:[%s444 + $0x3d8] sm:$0xff]
        %v722 = vld [vmem:[%s444 + $0x3e0] sm:$0xff]
        %v723 = vld [vmem:[%s444 + $0x3e8] sm:$0xff]
        %v724 = vld [vmem:[%s444 + $0x3f0] sm:$0xff]
        %v725 = vld [vmem:[%s444 + $0x3f8] sm:$0xff]
        %v726 = vld [vmem:[%s453] sm:$0xff]
        %v727 = vld [vmem:[%s453 + $0x8] sm:$0xff]
        %v728 = vld [vmem:[%s453 + $0x10] sm:$0xff]
        %v729 = vld [vmem:[%s453 + $0x18] sm:$0xff]
        %v730 = vld [vmem:[%s453 + $0x20] sm:$0xff]
        %v731 = vld [vmem:[%s453 + $0x28] sm:$0xff]
        %v732 = vld [vmem:[%s453 + $0x30] sm:$0xff]
        %v733 = vld [vmem:[%s453 + $0x38] sm:$0xff]
        %v734 = vld [vmem:[%s453 + $0x40] sm:$0xff]
        %v735 = vld [vmem:[%s453 + $0x48] sm:$0xff]
        %v736 = vld [vmem:[%s453 + $0x50] sm:$0xff]
        %v737 = vld [vmem:[%s453 + $0x58] sm:$0xff]
        %v738 = vld [vmem:[%s453 + $0x60] sm:$0xff]
        %v739 = vld [vmem:[%s453 + $0x68] sm:$0xff]
        %v740 = vld [vmem:[%s453 + $0x70] sm:$0xff]
        %v741 = vld [vmem:[%s453 + $0x78] sm:$0xff]
        %v742 = vld [vmem:[%s453 + $0x80] sm:$0xff]
        %v743 = vld [vmem:[%s453 + $0x88] sm:$0xff]
        %v744 = vld [vmem:[%s453 + $0x90] sm:$0xff]
        %v745 = vld [vmem:[%s453 + $0x98] sm:$0xff]
        %v746 = vld [vmem:[%s453 + $0xa0] sm:$0xff]
        %v747 = vld [vmem:[%s453 + $0xa8] sm:$0xff]
        %v748 = vld [vmem:[%s453 + $0xb0] sm:$0xff]
        %v749 = vld [vmem:[%s453 + $0xb8] sm:$0xff]
        %v750 = vld [vmem:[%s453 + $0xc0] sm:$0xff]
        %v751 = vld [vmem:[%s453 + $0xc8] sm:$0xff]
        %v752 = vld [vmem:[%s453 + $0xd0] sm:$0xff]
        %v753 = vld [vmem:[%s453 + $0xd8] sm:$0xff]
        %v754 = vld [vmem:[%s453 + $0xe0] sm:$0xff]
        %v755 = vld [vmem:[%s453 + $0xe8] sm:$0xff]
        %v756 = vld [vmem:[%s453 + $0xf0] sm:$0xff]
        %v757 = vld [vmem:[%s453 + $0xf8] sm:$0xff]
        %v758 = vld [vmem:[%s453 + $0x100] sm:$0xff]
        %v759 = vld [vmem:[%s453 + $0x108] sm:$0xff]
        %v760 = vld [vmem:[%s453 + $0x110] sm:$0xff]
        %v761 = vld [vmem:[%s453 + $0x118] sm:$0xff]
        %v762 = vld [vmem:[%s453 + $0x120] sm:$0xff]
        %v763 = vld [vmem:[%s453 + $0x128] sm:$0xff]
        %v764 = vld [vmem:[%s453 + $0x130] sm:$0xff]
        %v765 = vld [vmem:[%s453 + $0x138] sm:$0xff]
        %v766 = vld [vmem:[%s453 + $0x140] sm:$0xff]
        %v767 = vld [vmem:[%s453 + $0x148] sm:$0xff]
        %v768 = vld [vmem:[%s453 + $0x150] sm:$0xff]
        %v769 = vld [vmem:[%s453 + $0x158] sm:$0xff]
        %v770 = vld [vmem:[%s453 + $0x160] sm:$0xff]
        %v771 = vld [vmem:[%s453 + $0x168] sm:$0xff]
        %v772 = vld [vmem:[%s453 + $0x170] sm:$0xff]
        %v773 = vld [vmem:[%s453 + $0x178] sm:$0xff]
        %v774 = vld [vmem:[%s453 + $0x180] sm:$0xff]
        %v775 = vld [vmem:[%s453 + $0x188] sm:$0xff]
        %v776 = vld [vmem:[%s453 + $0x190] sm:$0xff]
        %v777 = vld [vmem:[%s453 + $0x198] sm:$0xff]
        %v778 = vld [vmem:[%s453 + $0x1a0] sm:$0xff]
        %v779 = vld [vmem:[%s453 + $0x1a8] sm:$0xff]
        %v780 = vld [vmem:[%s453 + $0x1b0] sm:$0xff]
        %v781 = vld [vmem:[%s453 + $0x1b8] sm:$0xff]
        %v782 = vld [vmem:[%s453 + $0x1c0] sm:$0xff]
        %v783 = vld [vmem:[%s453 + $0x1c8] sm:$0xff]
        %v784 = vld [vmem:[%s453 + $0x1d0] sm:$0xff]
        %v785 = vld [vmem:[%s453 + $0x1d8] sm:$0xff]
        %v786 = vld [vmem:[%s453 + $0x1e0] sm:$0xff]
        %v787 = vld [vmem:[%s453 + $0x1e8] sm:$0xff]
        %v788 = vld [vmem:[%s453 + $0x1f0] sm:$0xff]
        %v789 = vld [vmem:[%s453 + $0x1f8] sm:$0xff]
        %v790 = vld [vmem:[%s453 + $0x200] sm:$0xff]
        %v791 = vld [vmem:[%s453 + $0x208] sm:$0xff]
        %v792 = vld [vmem:[%s453 + $0x210] sm:$0xff]
        %v793 = vld [vmem:[%s453 + $0x218] sm:$0xff]
        %v794 = vld [vmem:[%s453 + $0x220] sm:$0xff]
        %v795 = vld [vmem:[%s453 + $0x228] sm:$0xff]
        %v796 = vld [vmem:[%s453 + $0x230] sm:$0xff]
        %v797 = vld [vmem:[%s453 + $0x238] sm:$0xff]
        %v798 = vld [vmem:[%s453 + $0x240] sm:$0xff]
        %v799 = vld [vmem:[%s453 + $0x248] sm:$0xff]
        %v800 = vld [vmem:[%s453 + $0x250] sm:$0xff]
        %v801 = vld [vmem:[%s453 + $0x258] sm:$0xff]
        %v802 = vld [vmem:[%s453 + $0x260] sm:$0xff]
        %v803 = vld [vmem:[%s453 + $0x268] sm:$0xff]
        %v804 = vld [vmem:[%s453 + $0x270] sm:$0xff]
        %v805 = vld [vmem:[%s453 + $0x278] sm:$0xff]
        %v806 = vld [vmem:[%s453 + $0x280] sm:$0xff]
        %v807 = vld [vmem:[%s453 + $0x288] sm:$0xff]
        %v808 = vld [vmem:[%s453 + $0x290] sm:$0xff]
        %v809 = vld [vmem:[%s453 + $0x298] sm:$0xff]
        %v810 = vld [vmem:[%s453 + $0x2a0] sm:$0xff]
        %v811 = vld [vmem:[%s453 + $0x2a8] sm:$0xff]
        %v812 = vld [vmem:[%s453 + $0x2b0] sm:$0xff]
        %v813 = vld [vmem:[%s453 + $0x2b8] sm:$0xff]
        %v814 = vld [vmem:[%s453 + $0x2c0] sm:$0xff]
        %v815 = vld [vmem:[%s453 + $0x2c8] sm:$0xff]
        %v816 = vld [vmem:[%s453 + $0x2d0] sm:$0xff]
        %v817 = vld [vmem:[%s453 + $0x2d8] sm:$0xff]
        %v818 = vld [vmem:[%s453 + $0x2e0] sm:$0xff]
        %v819 = vld [vmem:[%s453 + $0x2e8] sm:$0xff]
        %v820 = vld [vmem:[%s453 + $0x2f0] sm:$0xff]
        %v821 = vld [vmem:[%s453 + $0x2f8] sm:$0xff]
        %v822 = vld [vmem:[%s453 + $0x300] sm:$0xff]
        %v823 = vld [vmem:[%s453 + $0x308] sm:$0xff]
        %v824 = vld [vmem:[%s453 + $0x310] sm:$0xff]
        %v825 = vld [vmem:[%s453 + $0x318] sm:$0xff]
        %v826 = vld [vmem:[%s453 + $0x320] sm:$0xff]
        %v827 = vld [vmem:[%s453 + $0x328] sm:$0xff]
        %v828 = vld [vmem:[%s453 + $0x330] sm:$0xff]
        %v829 = vld [vmem:[%s453 + $0x338] sm:$0xff]
        %v830 = vld [vmem:[%s453 + $0x340] sm:$0xff]
        %v831 = vld [vmem:[%s453 + $0x348] sm:$0xff]
        %v832 = vld [vmem:[%s453 + $0x350] sm:$0xff]
        %v833 = vld [vmem:[%s453 + $0x358] sm:$0xff]
        %v834 = vld [vmem:[%s453 + $0x360] sm:$0xff]
        %v835 = vld [vmem:[%s453 + $0x368] sm:$0xff]
        %v836 = vld [vmem:[%s453 + $0x370] sm:$0xff]
        %v837 = vld [vmem:[%s453 + $0x378] sm:$0xff]
        %v838 = vld [vmem:[%s453 + $0x380] sm:$0xff]
        %v839 = vld [vmem:[%s453 + $0x388] sm:$0xff]
        %v840 = vld [vmem:[%s453 + $0x390] sm:$0xff]
        %v841 = vld [vmem:[%s453 + $0x398] sm:$0xff]
        %v842 = vld [vmem:[%s453 + $0x3a0] sm:$0xff]
        %v843 = vld [vmem:[%s453 + $0x3a8] sm:$0xff]
        %v844 = vld [vmem:[%s453 + $0x3b0] sm:$0xff]
        %v845 = vld [vmem:[%s453 + $0x3b8] sm:$0xff]
        %v846 = vld [vmem:[%s453 + $0x3c0] sm:$0xff]
        %v847 = vld [vmem:[%s453 + $0x3c8] sm:$0xff]
        %v848 = vld [vmem:[%s453 + $0x3d0] sm:$0xff]
        %v849 = vld [vmem:[%s453 + $0x3d8] sm:$0xff]
        %v850 = vld [vmem:[%s453 + $0x3e0] sm:$0xff]
        %v851 = vld [vmem:[%s453 + $0x3e8] sm:$0xff]
        %v852 = vld [vmem:[%s453 + $0x3f0] sm:$0xff]
        %v853 = vld [vmem:[%s453 + $0x3f8] sm:$0xff]
        %v854 = vld [vmem:[%s462] sm:$0xff]
        %v855 = vld [vmem:[%s462 + $0x8] sm:$0xff]
        %v856 = vld [vmem:[%s462 + $0x10] sm:$0xff]
        %v857 = vld [vmem:[%s462 + $0x18] sm:$0xff]
        %v858 = vld [vmem:[%s462 + $0x20] sm:$0xff]
        %v859 = vld [vmem:[%s462 + $0x28] sm:$0xff]
        %v860 = vld [vmem:[%s462 + $0x30] sm:$0xff]
        %v861 = vld [vmem:[%s462 + $0x38] sm:$0xff]
        %v862 = vld [vmem:[%s462 + $0x40] sm:$0xff]
        %v863 = vld [vmem:[%s462 + $0x48] sm:$0xff]
        %v864 = vld [vmem:[%s462 + $0x50] sm:$0xff]
        %v865 = vld [vmem:[%s462 + $0x58] sm:$0xff]
        %v866 = vld [vmem:[%s462 + $0x60] sm:$0xff]
        %v867 = vld [vmem:[%s462 + $0x68] sm:$0xff]
        %v868 = vld [vmem:[%s462 + $0x70] sm:$0xff]
        %v869 = vld [vmem:[%s462 + $0x78] sm:$0xff]
        %v870 = vld [vmem:[%s462 + $0x80] sm:$0xff]
        %v871 = vld [vmem:[%s462 + $0x88] sm:$0xff]
        %v872 = vld [vmem:[%s462 + $0x90] sm:$0xff]
        %v873 = vld [vmem:[%s462 + $0x98] sm:$0xff]
        %v874 = vld [vmem:[%s462 + $0xa0] sm:$0xff]
        %v875 = vld [vmem:[%s462 + $0xa8] sm:$0xff]
        %v876 = vld [vmem:[%s462 + $0xb0] sm:$0xff]
        %v877 = vld [vmem:[%s462 + $0xb8] sm:$0xff]
        %v878 = vld [vmem:[%s462 + $0xc0] sm:$0xff]
        %v879 = vld [vmem:[%s462 + $0xc8] sm:$0xff]
        %v880 = vld [vmem:[%s462 + $0xd0] sm:$0xff]
        %v881 = vld [vmem:[%s462 + $0xd8] sm:$0xff]
        %v882 = vld [vmem:[%s462 + $0xe0] sm:$0xff]
        %v883 = vld [vmem:[%s462 + $0xe8] sm:$0xff]
        %v884 = vld [vmem:[%s462 + $0xf0] sm:$0xff]
        %v885 = vld [vmem:[%s462 + $0xf8] sm:$0xff]
        %v886 = vld [vmem:[%s462 + $0x100] sm:$0xff]
        %v887 = vld [vmem:[%s462 + $0x108] sm:$0xff]
        %v888 = vld [vmem:[%s462 + $0x110] sm:$0xff]
        %v889 = vld [vmem:[%s462 + $0x118] sm:$0xff]
        %v890 = vld [vmem:[%s462 + $0x120] sm:$0xff]
        %v891 = vld [vmem:[%s462 + $0x128] sm:$0xff]
        %v892 = vld [vmem:[%s462 + $0x130] sm:$0xff]
        %v893 = vld [vmem:[%s462 + $0x138] sm:$0xff]
        %v894 = vld [vmem:[%s462 + $0x140] sm:$0xff]
        %v895 = vld [vmem:[%s462 + $0x148] sm:$0xff]
        %v896 = vld [vmem:[%s462 + $0x150] sm:$0xff]
        %v897 = vld [vmem:[%s462 + $0x158] sm:$0xff]
        %v898 = vld [vmem:[%s462 + $0x160] sm:$0xff]
        %v899 = vld [vmem:[%s462 + $0x168] sm:$0xff]
        %v900 = vld [vmem:[%s462 + $0x170] sm:$0xff]
        %v901 = vld [vmem:[%s462 + $0x178] sm:$0xff]
        %v902 = vld [vmem:[%s462 + $0x180] sm:$0xff]
        %v903 = vld [vmem:[%s462 + $0x188] sm:$0xff]
        %v904 = vld [vmem:[%s462 + $0x190] sm:$0xff]
        %v905 = vld [vmem:[%s462 + $0x198] sm:$0xff]
        %v906 = vld [vmem:[%s462 + $0x1a0] sm:$0xff]
        %v907 = vld [vmem:[%s462 + $0x1a8] sm:$0xff]
        %v908 = vld [vmem:[%s462 + $0x1b0] sm:$0xff]
        %v909 = vld [vmem:[%s462 + $0x1b8] sm:$0xff]
        %v910 = vld [vmem:[%s462 + $0x1c0] sm:$0xff]
        %v911 = vld [vmem:[%s462 + $0x1c8] sm:$0xff]
        %v912 = vld [vmem:[%s462 + $0x1d0] sm:$0xff]
        %v913 = vld [vmem:[%s462 + $0x1d8] sm:$0xff]
        %v914 = vld [vmem:[%s462 + $0x1e0] sm:$0xff]
        %v915 = vld [vmem:[%s462 + $0x1e8] sm:$0xff]
        %v916 = vld [vmem:[%s462 + $0x1f0] sm:$0xff]
        %v917 = vld [vmem:[%s462 + $0x1f8] sm:$0xff]
        %v918 = vld [vmem:[%s462 + $0x200] sm:$0xff]
        %v919 = vld [vmem:[%s462 + $0x208] sm:$0xff]
        %v920 = vld [vmem:[%s462 + $0x210] sm:$0xff]
        %v921 = vld [vmem:[%s462 + $0x218] sm:$0xff]
        %v922 = vld [vmem:[%s462 + $0x220] sm:$0xff]
        %v923 = vld [vmem:[%s462 + $0x228] sm:$0xff]
        %v924 = vld [vmem:[%s462 + $0x230] sm:$0xff]
        %v925 = vld [vmem:[%s462 + $0x238] sm:$0xff]
        %v926 = vld [vmem:[%s462 + $0x240] sm:$0xff]
        %v927 = vld [vmem:[%s462 + $0x248] sm:$0xff]
        %v928 = vld [vmem:[%s462 + $0x250] sm:$0xff]
        %v929 = vld [vmem:[%s462 + $0x258] sm:$0xff]
        %v930 = vld [vmem:[%s462 + $0x260] sm:$0xff]
        %v931 = vld [vmem:[%s462 + $0x268] sm:$0xff]
        %v932 = vld [vmem:[%s462 + $0x270] sm:$0xff]
        %v933 = vld [vmem:[%s462 + $0x278] sm:$0xff]
        %v934 = vld [vmem:[%s462 + $0x280] sm:$0xff]
        %v935 = vld [vmem:[%s462 + $0x288] sm:$0xff]
        %v936 = vld [vmem:[%s462 + $0x290] sm:$0xff]
        %v937 = vld [vmem:[%s462 + $0x298] sm:$0xff]
        %v938 = vld [vmem:[%s462 + $0x2a0] sm:$0xff]
        %v939 = vld [vmem:[%s462 + $0x2a8] sm:$0xff]
        %v940 = vld [vmem:[%s462 + $0x2b0] sm:$0xff]
        %v941 = vld [vmem:[%s462 + $0x2b8] sm:$0xff]
        %v942 = vld [vmem:[%s462 + $0x2c0] sm:$0xff]
        %v943 = vld [vmem:[%s462 + $0x2c8] sm:$0xff]
        %v944 = vld [vmem:[%s462 + $0x2d0] sm:$0xff]
        %v945 = vld [vmem:[%s462 + $0x2d8] sm:$0xff]
        %v946 = vld [vmem:[%s462 + $0x2e0] sm:$0xff]
        %v947 = vld [vmem:[%s462 + $0x2e8] sm:$0xff]
        %v948 = vld [vmem:[%s462 + $0x2f0] sm:$0xff]
        %v949 = vld [vmem:[%s462 + $0x2f8] sm:$0xff]
        %v950 = vld [vmem:[%s462 + $0x300] sm:$0xff]
        %v951 = vld [vmem:[%s462 + $0x308] sm:$0xff]
        %v952 = vld [vmem:[%s462 + $0x310] sm:$0xff]
        %v953 = vld [vmem:[%s462 + $0x318] sm:$0xff]
        %v954 = vld [vmem:[%s462 + $0x320] sm:$0xff]
        %v955 = vld [vmem:[%s462 + $0x328] sm:$0xff]
        %v956 = vld [vmem:[%s462 + $0x330] sm:$0xff]
        %v957 = vld [vmem:[%s462 + $0x338] sm:$0xff]
        %v958 = vld [vmem:[%s462 + $0x340] sm:$0xff]
        %v959 = vld [vmem:[%s462 + $0x348] sm:$0xff]
        %v960 = vld [vmem:[%s462 + $0x350] sm:$0xff]
        %v961 = vld [vmem:[%s462 + $0x358] sm:$0xff]
        %v962 = vld [vmem:[%s462 + $0x360] sm:$0xff]
        %v963 = vld [vmem:[%s462 + $0x368] sm:$0xff]
        %v964 = vld [vmem:[%s462 + $0x370] sm:$0xff]
        %v965 = vld [vmem:[%s462 + $0x378] sm:$0xff]
        %v966 = vld [vmem:[%s462 + $0x380] sm:$0xff]
        %v967 = vld [vmem:[%s462 + $0x388] sm:$0xff]
        %v968 = vld [vmem:[%s462 + $0x390] sm:$0xff]
        %v969 = vld [vmem:[%s462 + $0x398] sm:$0xff]
        %v970 = vld [vmem:[%s462 + $0x3a0] sm:$0xff]
        %v971 = vld [vmem:[%s462 + $0x3a8] sm:$0xff]
        %v972 = vld [vmem:[%s462 + $0x3b0] sm:$0xff]
        %v973 = vld [vmem:[%s462 + $0x3b8] sm:$0xff]
        %v974 = vld [vmem:[%s462 + $0x3c0] sm:$0xff]
        %v975 = vld [vmem:[%s462 + $0x3c8] sm:$0xff]
        %v976 = vld [vmem:[%s462 + $0x3d0] sm:$0xff]
        %v977 = vld [vmem:[%s462 + $0x3d8] sm:$0xff]
        %v978 = vld [vmem:[%s462 + $0x3e0] sm:$0xff]
        %v979 = vld [vmem:[%s462 + $0x3e8] sm:$0xff]
        %v980 = vld [vmem:[%s462 + $0x3f0] sm:$0xff]
        %v981 = vld [vmem:[%s462 + $0x3f8] sm:$0xff]
        %v982 = vld [vmem:[%s471] sm:$0xff]
        %v983 = vld [vmem:[%s471 + $0x8] sm:$0xff]
        %v984 = vld [vmem:[%s471 + $0x10] sm:$0xff]
        %v985 = vld [vmem:[%s471 + $0x18] sm:$0xff]
        %v986 = vld [vmem:[%s471 + $0x20] sm:$0xff]
        %v987 = vld [vmem:[%s471 + $0x28] sm:$0xff]
        %v988 = vld [vmem:[%s471 + $0x30] sm:$0xff]
        %v989 = vld [vmem:[%s471 + $0x38] sm:$0xff]
        %v990 = vld [vmem:[%s471 + $0x40] sm:$0xff]
        %v991 = vld [vmem:[%s471 + $0x48] sm:$0xff]
        %v992 = vld [vmem:[%s471 + $0x50] sm:$0xff]
        %v993 = vld [vmem:[%s471 + $0x58] sm:$0xff]
        %v994 = vld [vmem:[%s471 + $0x60] sm:$0xff]
        %v995 = vld [vmem:[%s471 + $0x68] sm:$0xff]
        %v996 = vld [vmem:[%s471 + $0x70] sm:$0xff]
        %v997 = vld [vmem:[%s471 + $0x78] sm:$0xff]
        %v998 = vld [vmem:[%s471 + $0x80] sm:$0xff]
        %v999 = vld [vmem:[%s471 + $0x88] sm:$0xff]
        %v1000 = vld [vmem:[%s471 + $0x90] sm:$0xff]
        %v1001 = vld [vmem:[%s471 + $0x98] sm:$0xff]
        %v1002 = vld [vmem:[%s471 + $0xa0] sm:$0xff]
        %v1003 = vld [vmem:[%s471 + $0xa8] sm:$0xff]
        %v1004 = vld [vmem:[%s471 + $0xb0] sm:$0xff]
        %v1005 = vld [vmem:[%s471 + $0xb8] sm:$0xff]
        %v1006 = vld [vmem:[%s471 + $0xc0] sm:$0xff]
        %v1007 = vld [vmem:[%s471 + $0xc8] sm:$0xff]
        %v1008 = vld [vmem:[%s471 + $0xd0] sm:$0xff]
        %v1009 = vld [vmem:[%s471 + $0xd8] sm:$0xff]
        %v1010 = vld [vmem:[%s471 + $0xe0] sm:$0xff]
        %v1011 = vld [vmem:[%s471 + $0xe8] sm:$0xff]
        %v1012 = vld [vmem:[%s471 + $0xf0] sm:$0xff]
        %v1013 = vld [vmem:[%s471 + $0xf8] sm:$0xff]
        %v1014 = vld [vmem:[%s471 + $0x100] sm:$0xff]
        %v1015 = vld [vmem:[%s471 + $0x108] sm:$0xff]
        %v1016 = vld [vmem:[%s471 + $0x110] sm:$0xff]
        %v1017 = vld [vmem:[%s471 + $0x118] sm:$0xff]
        %v1018 = vld [vmem:[%s471 + $0x120] sm:$0xff]
        %v1019 = vld [vmem:[%s471 + $0x128] sm:$0xff]
        %v1020 = vld [vmem:[%s471 + $0x130] sm:$0xff]
        %v1021 = vld [vmem:[%s471 + $0x138] sm:$0xff]
        %v1022 = vld [vmem:[%s471 + $0x140] sm:$0xff]
        %v1023 = vld [vmem:[%s471 + $0x148] sm:$0xff]
        %v1024 = vld [vmem:[%s471 + $0x150] sm:$0xff]
        %v1025 = vld [vmem:[%s471 + $0x158] sm:$0xff]
        %v1026 = vld [vmem:[%s471 + $0x160] sm:$0xff]
        %v1027 = vld [vmem:[%s471 + $0x168] sm:$0xff]
        %v1028 = vld [vmem:[%s471 + $0x170] sm:$0xff]
        %v1029 = vld [vmem:[%s471 + $0x178] sm:$0xff]
        %v1030 = vld [vmem:[%s471 + $0x180] sm:$0xff]
        %v1031 = vld [vmem:[%s471 + $0x188] sm:$0xff]
        %v1032 = vld [vmem:[%s471 + $0x190] sm:$0xff]
        %v1033 = vld [vmem:[%s471 + $0x198] sm:$0xff]
        %v1034 = vld [vmem:[%s471 + $0x1a0] sm:$0xff]
        %v1035 = vld [vmem:[%s471 + $0x1a8] sm:$0xff]
        %v1036 = vld [vmem:[%s471 + $0x1b0] sm:$0xff]
        %v1037 = vld [vmem:[%s471 + $0x1b8] sm:$0xff]
        %v1038 = vld [vmem:[%s471 + $0x1c0] sm:$0xff]
        %v1039 = vld [vmem:[%s471 + $0x1c8] sm:$0xff]
        %v1040 = vld [vmem:[%s471 + $0x1d0] sm:$0xff]
        %v1041 = vld [vmem:[%s471 + $0x1d8] sm:$0xff]
        %v1042 = vld [vmem:[%s471 + $0x1e0] sm:$0xff]
        %v1043 = vld [vmem:[%s471 + $0x1e8] sm:$0xff]
        %v1044 = vld [vmem:[%s471 + $0x1f0] sm:$0xff]
        %v1045 = vld [vmem:[%s471 + $0x1f8] sm:$0xff]
        %v1046 = vld [vmem:[%s471 + $0x200] sm:$0xff]
        %v1047 = vld [vmem:[%s471 + $0x208] sm:$0xff]
        %v1048 = vld [vmem:[%s471 + $0x210] sm:$0xff]
        %v1049 = vld [vmem:[%s471 + $0x218] sm:$0xff]
        %v1050 = vld [vmem:[%s471 + $0x220] sm:$0xff]
        %v1051 = vld [vmem:[%s471 + $0x228] sm:$0xff]
        %v1052 = vld [vmem:[%s471 + $0x230] sm:$0xff]
        %v1053 = vld [vmem:[%s471 + $0x238] sm:$0xff]
        %v1054 = vld [vmem:[%s471 + $0x240] sm:$0xff]
        %v1055 = vld [vmem:[%s471 + $0x248] sm:$0xff]
        %v1056 = vld [vmem:[%s471 + $0x250] sm:$0xff]
        %v1057 = vld [vmem:[%s471 + $0x258] sm:$0xff]
        %v1058 = vld [vmem:[%s471 + $0x260] sm:$0xff]
        %v1059 = vld [vmem:[%s471 + $0x268] sm:$0xff]
        %v1060 = vld [vmem:[%s471 + $0x270] sm:$0xff]
        %v1061 = vld [vmem:[%s471 + $0x278] sm:$0xff]
        %v1062 = vld [vmem:[%s471 + $0x280] sm:$0xff]
        %v1063 = vld [vmem:[%s471 + $0x288] sm:$0xff]
        %v1064 = vld [vmem:[%s471 + $0x290] sm:$0xff]
        %v1065 = vld [vmem:[%s471 + $0x298] sm:$0xff]
        %v1066 = vld [vmem:[%s471 + $0x2a0] sm:$0xff]
        %v1067 = vld [vmem:[%s471 + $0x2a8] sm:$0xff]
        %v1068 = vld [vmem:[%s471 + $0x2b0] sm:$0xff]
        %v1069 = vld [vmem:[%s471 + $0x2b8] sm:$0xff]
        %v1070 = vld [vmem:[%s471 + $0x2c0] sm:$0xff]
        %v1071 = vld [vmem:[%s471 + $0x2c8] sm:$0xff]
        %v1072 = vld [vmem:[%s471 + $0x2d0] sm:$0xff]
        %v1073 = vld [vmem:[%s471 + $0x2d8] sm:$0xff]
        %v1074 = vld [vmem:[%s471 + $0x2e0] sm:$0xff]
        %v1075 = vld [vmem:[%s471 + $0x2e8] sm:$0xff]
        %v1076 = vld [vmem:[%s471 + $0x2f0] sm:$0xff]
        %v1077 = vld [vmem:[%s471 + $0x2f8] sm:$0xff]
        %v1078 = vld [vmem:[%s471 + $0x300] sm:$0xff]
        %v1079 = vld [vmem:[%s471 + $0x308] sm:$0xff]
        %v1080 = vld [vmem:[%s471 + $0x310] sm:$0xff]
        %v1081 = vld [vmem:[%s471 + $0x318] sm:$0xff]
        %v1082 = vld [vmem:[%s471 + $0x320] sm:$0xff]
        %v1083 = vld [vmem:[%s471 + $0x328] sm:$0xff]
        %v1084 = vld [vmem:[%s471 + $0x330] sm:$0xff]
        %v1085 = vld [vmem:[%s471 + $0x338] sm:$0xff]
        %v1086 = vld [vmem:[%s471 + $0x340] sm:$0xff]
        %v1087 = vld [vmem:[%s471 + $0x348] sm:$0xff]
        %v1088 = vld [vmem:[%s471 + $0x350] sm:$0xff]
        %v1089 = vld [vmem:[%s471 + $0x358] sm:$0xff]
        %v1090 = vld [vmem:[%s471 + $0x360] sm:$0xff]
        %v1091 = vld [vmem:[%s471 + $0x368] sm:$0xff]
        %v1092 = vld [vmem:[%s471 + $0x370] sm:$0xff]
        %v1093 = vld [vmem:[%s471 + $0x378] sm:$0xff]
        %v1094 = vld [vmem:[%s471 + $0x380] sm:$0xff]
        %v1095 = vld [vmem:[%s471 + $0x388] sm:$0xff]
        %v1096 = vld [vmem:[%s471 + $0x390] sm:$0xff]
        %v1097 = vld [vmem:[%s471 + $0x398] sm:$0xff]
        %v1098 = vld [vmem:[%s471 + $0x3a0] sm:$0xff]
        %v1099 = vld [vmem:[%s471 + $0x3a8] sm:$0xff]
        %v1100 = vld [vmem:[%s471 + $0x3b0] sm:$0xff]
        %v1101 = vld [vmem:[%s471 + $0x3b8] sm:$0xff]
        %v1102 = vld [vmem:[%s471 + $0x3c0] sm:$0xff]
        %v1103 = vld [vmem:[%s471 + $0x3c8] sm:$0xff]
        %v1104 = vld [vmem:[%s471 + $0x3d0] sm:$0xff]
        %v1105 = vld [vmem:[%s471 + $0x3d8] sm:$0xff]
        %v1106 = vld [vmem:[%s471 + $0x3e0] sm:$0xff]
        %v1107 = vld [vmem:[%s471 + $0x3e8] sm:$0xff]
        %v1108 = vld [vmem:[%s471 + $0x3f0] sm:$0xff]
        %v1109 = vld [vmem:[%s471 + $0x3f8] sm:$0xff]
        %v1110 = vld [vmem:[%s480] sm:$0xff]
        %v1111 = vld [vmem:[%s480 + $0x8] sm:$0xff]
        %v1112 = vld [vmem:[%s480 + $0x10] sm:$0xff]
        %v1113 = vld [vmem:[%s480 + $0x18] sm:$0xff]
        %v1114 = vld [vmem:[%s480 + $0x20] sm:$0xff]
        %v1115 = vld [vmem:[%s480 + $0x28] sm:$0xff]
        %v1116 = vld [vmem:[%s480 + $0x30] sm:$0xff]
        %v1117 = vld [vmem:[%s480 + $0x38] sm:$0xff]
        %v1118 = vld [vmem:[%s480 + $0x40] sm:$0xff]
        %v1119 = vld [vmem:[%s480 + $0x48] sm:$0xff]
        %v1120 = vld [vmem:[%s480 + $0x50] sm:$0xff]
        %v1121 = vld [vmem:[%s480 + $0x58] sm:$0xff]
        %v1122 = vld [vmem:[%s480 + $0x60] sm:$0xff]
        %v1123 = vld [vmem:[%s480 + $0x68] sm:$0xff]
        %v1124 = vld [vmem:[%s480 + $0x70] sm:$0xff]
        %v1125 = vld [vmem:[%s480 + $0x78] sm:$0xff]
        %v1126 = vld [vmem:[%s480 + $0x80] sm:$0xff]
        %v1127 = vld [vmem:[%s480 + $0x88] sm:$0xff]
        %v1128 = vld [vmem:[%s480 + $0x90] sm:$0xff]
        %v1129 = vld [vmem:[%s480 + $0x98] sm:$0xff]
        %v1130 = vld [vmem:[%s480 + $0xa0] sm:$0xff]
        %v1131 = vld [vmem:[%s480 + $0xa8] sm:$0xff]
        %v1132 = vld [vmem:[%s480 + $0xb0] sm:$0xff]
        %v1133 = vld [vmem:[%s480 + $0xb8] sm:$0xff]
        %v1134 = vld [vmem:[%s480 + $0xc0] sm:$0xff]
        %v1135 = vld [vmem:[%s480 + $0xc8] sm:$0xff]
        %v1136 = vld [vmem:[%s480 + $0xd0] sm:$0xff]
        %v1137 = vld [vmem:[%s480 + $0xd8] sm:$0xff]
        %v1138 = vld [vmem:[%s480 + $0xe0] sm:$0xff]
        %v1139 = vld [vmem:[%s480 + $0xe8] sm:$0xff]
        %v1140 = vld [vmem:[%s480 + $0xf0] sm:$0xff]
        %v1141 = vld [vmem:[%s480 + $0xf8] sm:$0xff]
        %v1142 = vld [vmem:[%s480 + $0x100] sm:$0xff]
        %v1143 = vld [vmem:[%s480 + $0x108] sm:$0xff]
        %v1144 = vld [vmem:[%s480 + $0x110] sm:$0xff]
        %v1145 = vld [vmem:[%s480 + $0x118] sm:$0xff]
        %v1146 = vld [vmem:[%s480 + $0x120] sm:$0xff]
        %v1147 = vld [vmem:[%s480 + $0x128] sm:$0xff]
        %v1148 = vld [vmem:[%s480 + $0x130] sm:$0xff]
        %v1149 = vld [vmem:[%s480 + $0x138] sm:$0xff]
        %v1150 = vld [vmem:[%s480 + $0x140] sm:$0xff]
        %v1151 = vld [vmem:[%s480 + $0x148] sm:$0xff]
        %v1152 = vld [vmem:[%s480 + $0x150] sm:$0xff]
        %v1153 = vld [vmem:[%s480 + $0x158] sm:$0xff]
        %v1154 = vld [vmem:[%s480 + $0x160] sm:$0xff]
        %v1155 = vld [vmem:[%s480 + $0x168] sm:$0xff]
        %v1156 = vld [vmem:[%s480 + $0x170] sm:$0xff]
        %v1157 = vld [vmem:[%s480 + $0x178] sm:$0xff]
        %v1158 = vld [vmem:[%s480 + $0x180] sm:$0xff]
        %v1159 = vld [vmem:[%s480 + $0x188] sm:$0xff]
        %v1160 = vld [vmem:[%s480 + $0x190] sm:$0xff]
        %v1161 = vld [vmem:[%s480 + $0x198] sm:$0xff]
        %v1162 = vld [vmem:[%s480 + $0x1a0] sm:$0xff]
        %v1163 = vld [vmem:[%s480 + $0x1a8] sm:$0xff]
        %v1164 = vld [vmem:[%s480 + $0x1b0] sm:$0xff]
        %v1165 = vld [vmem:[%s480 + $0x1b8] sm:$0xff]
        %v1166 = vld [vmem:[%s480 + $0x1c0] sm:$0xff]
        %v1167 = vld [vmem:[%s480 + $0x1c8] sm:$0xff]
        %v1168 = vld [vmem:[%s480 + $0x1d0] sm:$0xff]
        %v1169 = vld [vmem:[%s480 + $0x1d8] sm:$0xff]
        %v1170 = vld [vmem:[%s480 + $0x1e0] sm:$0xff]
        %v1171 = vld [vmem:[%s480 + $0x1e8] sm:$0xff]
        %v1172 = vld [vmem:[%s480 + $0x1f0] sm:$0xff]
        %v1173 = vld [vmem:[%s480 + $0x1f8] sm:$0xff]
        %v1174 = vld [vmem:[%s480 + $0x200] sm:$0xff]
        %v1175 = vld [vmem:[%s480 + $0x208] sm:$0xff]
        %v1176 = vld [vmem:[%s480 + $0x210] sm:$0xff]
        %v1177 = vld [vmem:[%s480 + $0x218] sm:$0xff]
        %v1178 = vld [vmem:[%s480 + $0x220] sm:$0xff]
        %v1179 = vld [vmem:[%s480 + $0x228] sm:$0xff]
        %v1180 = vld [vmem:[%s480 + $0x230] sm:$0xff]
        %v1181 = vld [vmem:[%s480 + $0x238] sm:$0xff]
        %v1182 = vld [vmem:[%s480 + $0x240] sm:$0xff]
        %v1183 = vld [vmem:[%s480 + $0x248] sm:$0xff]
        %v1184 = vld [vmem:[%s480 + $0x250] sm:$0xff]
        %v1185 = vld [vmem:[%s480 + $0x258] sm:$0xff]
        %v1186 = vld [vmem:[%s480 + $0x260] sm:$0xff]
        %v1187 = vld [vmem:[%s480 + $0x268] sm:$0xff]
        %v1188 = vld [vmem:[%s480 + $0x270] sm:$0xff]
        %v1189 = vld [vmem:[%s480 + $0x278] sm:$0xff]
        %v1190 = vld [vmem:[%s480 + $0x280] sm:$0xff]
        %v1191 = vld [vmem:[%s480 + $0x288] sm:$0xff]
        %v1192 = vld [vmem:[%s480 + $0x290] sm:$0xff]
        %v1193 = vld [vmem:[%s480 + $0x298] sm:$0xff]
        %v1194 = vld [vmem:[%s480 + $0x2a0] sm:$0xff]
        %v1195 = vld [vmem:[%s480 + $0x2a8] sm:$0xff]
        %v1196 = vld [vmem:[%s480 + $0x2b0] sm:$0xff]
        %v1197 = vld [vmem:[%s480 + $0x2b8] sm:$0xff]
        %v1198 = vld [vmem:[%s480 + $0x2c0] sm:$0xff]
        %v1199 = vld [vmem:[%s480 + $0x2c8] sm:$0xff]
        %v1200 = vld [vmem:[%s480 + $0x2d0] sm:$0xff]
        %v1201 = vld [vmem:[%s480 + $0x2d8] sm:$0xff]
        %v1202 = vld [vmem:[%s480 + $0x2e0] sm:$0xff]
        %v1203 = vld [vmem:[%s480 + $0x2e8] sm:$0xff]
        %v1204 = vld [vmem:[%s480 + $0x2f0] sm:$0xff]
        %v1205 = vld [vmem:[%s480 + $0x2f8] sm:$0xff]
        %v1206 = vld [vmem:[%s480 + $0x300] sm:$0xff]
        %v1207 = vld [vmem:[%s480 + $0x308] sm:$0xff]
        %v1208 = vld [vmem:[%s480 + $0x310] sm:$0xff]
        %v1209 = vld [vmem:[%s480 + $0x318] sm:$0xff]
        %v1210 = vld [vmem:[%s480 + $0x320] sm:$0xff]
        %v1211 = vld [vmem:[%s480 + $0x328] sm:$0xff]
        %v1212 = vld [vmem:[%s480 + $0x330] sm:$0xff]
        %v1213 = vld [vmem:[%s480 + $0x338] sm:$0xff]
        %v1214 = vld [vmem:[%s480 + $0x340] sm:$0xff]
        %v1215 = vld [vmem:[%s480 + $0x348] sm:$0xff]
        %v1216 = vld [vmem:[%s480 + $0x350] sm:$0xff]
        %v1217 = vld [vmem:[%s480 + $0x358] sm:$0xff]
        %v1218 = vld [vmem:[%s480 + $0x360] sm:$0xff]
        %v1219 = vld [vmem:[%s480 + $0x368] sm:$0xff]
        %v1220 = vld [vmem:[%s480 + $0x370] sm:$0xff]
        %v1221 = vld [vmem:[%s480 + $0x378] sm:$0xff]
        %v1222 = vld [vmem:[%s480 + $0x380] sm:$0xff]
        %v1223 = vld [vmem:[%s480 + $0x388] sm:$0xff]
        %v1224 = vld [vmem:[%s480 + $0x390] sm:$0xff]
        %v1225 = vld [vmem:[%s480 + $0x398] sm:$0xff]
        %v1226 = vld [vmem:[%s480 + $0x3a0] sm:$0xff]
        %v1227 = vld [vmem:[%s480 + $0x3a8] sm:$0xff]
        %v1228 = vld [vmem:[%s480 + $0x3b0] sm:$0xff]
        %v1229 = vld [vmem:[%s480 + $0x3b8] sm:$0xff]
        %v1230 = vld [vmem:[%s480 + $0x3c0] sm:$0xff]
        %v1231 = vld [vmem:[%s480 + $0x3c8] sm:$0xff]
        %v1232 = vld [vmem:[%s480 + $0x3d0] sm:$0xff]
        %v1233 = vld [vmem:[%s480 + $0x3d8] sm:$0xff]
        %v1234 = vld [vmem:[%s480 + $0x3e0] sm:$0xff]
        %v1235 = vld [vmem:[%s480 + $0x3e8] sm:$0xff]
        %v1236 = vld [vmem:[%s480 + $0x3f0] sm:$0xff]
        %v1237 = vld [vmem:[%s480 + $0x3f8] sm:$0xff]
        %v1238 = vld [vmem:[%s489] sm:$0xff]
        %v1239 = vld [vmem:[%s489 + $0x8] sm:$0xff]
        %v1240 = vld [vmem:[%s489 + $0x10] sm:$0xff]
        %v1241 = vld [vmem:[%s489 + $0x18] sm:$0xff]
        %v1242 = vld [vmem:[%s489 + $0x20] sm:$0xff]
        %v1243 = vld [vmem:[%s489 + $0x28] sm:$0xff]
        %v1244 = vld [vmem:[%s489 + $0x30] sm:$0xff]
        %v1245 = vld [vmem:[%s489 + $0x38] sm:$0xff]
        %v1246 = vld [vmem:[%s489 + $0x40] sm:$0xff]
        %v1247 = vld [vmem:[%s489 + $0x48] sm:$0xff]
        %v1248 = vld [vmem:[%s489 + $0x50] sm:$0xff]
        %v1249 = vld [vmem:[%s489 + $0x58] sm:$0xff]
        %v1250 = vld [vmem:[%s489 + $0x60] sm:$0xff]
        %v1251 = vld [vmem:[%s489 + $0x68] sm:$0xff]
        %v1252 = vld [vmem:[%s489 + $0x70] sm:$0xff]
        %v1253 = vld [vmem:[%s489 + $0x78] sm:$0xff]
        %v1254 = vld [vmem:[%s489 + $0x80] sm:$0xff]
        %v1255 = vld [vmem:[%s489 + $0x88] sm:$0xff]
        %v1256 = vld [vmem:[%s489 + $0x90] sm:$0xff]
        %v1257 = vld [vmem:[%s489 + $0x98] sm:$0xff]
        %v1258 = vld [vmem:[%s489 + $0xa0] sm:$0xff]
        %v1259 = vld [vmem:[%s489 + $0xa8] sm:$0xff]
        %v1260 = vld [vmem:[%s489 + $0xb0] sm:$0xff]
        %v1261 = vld [vmem:[%s489 + $0xb8] sm:$0xff]
        %v1262 = vld [vmem:[%s489 + $0xc0] sm:$0xff]
        %v1263 = vld [vmem:[%s489 + $0xc8] sm:$0xff]
        %v1264 = vld [vmem:[%s489 + $0xd0] sm:$0xff]
        %v1265 = vld [vmem:[%s489 + $0xd8] sm:$0xff]
        %v1266 = vld [vmem:[%s489 + $0xe0] sm:$0xff]
        %v1267 = vld [vmem:[%s489 + $0xe8] sm:$0xff]
        %v1268 = vld [vmem:[%s489 + $0xf0] sm:$0xff]
        %v1269 = vld [vmem:[%s489 + $0xf8] sm:$0xff]
        %v1270 = vld [vmem:[%s489 + $0x100] sm:$0xff]
        %v1271 = vld [vmem:[%s489 + $0x108] sm:$0xff]
        %v1272 = vld [vmem:[%s489 + $0x110] sm:$0xff]
        %v1273 = vld [vmem:[%s489 + $0x118] sm:$0xff]
        %v1274 = vld [vmem:[%s489 + $0x120] sm:$0xff]
        %v1275 = vld [vmem:[%s489 + $0x128] sm:$0xff]
        %v1276 = vld [vmem:[%s489 + $0x130] sm:$0xff]
        %v1277 = vld [vmem:[%s489 + $0x138] sm:$0xff]
        %v1278 = vld [vmem:[%s489 + $0x140] sm:$0xff]
        %v1279 = vld [vmem:[%s489 + $0x148] sm:$0xff]
        %v1280 = vld [vmem:[%s489 + $0x150] sm:$0xff]
        %v1281 = vld [vmem:[%s489 + $0x158] sm:$0xff]
        %v1282 = vld [vmem:[%s489 + $0x160] sm:$0xff]
        %v1283 = vld [vmem:[%s489 + $0x168] sm:$0xff]
        %v1284 = vld [vmem:[%s489 + $0x170] sm:$0xff]
        %v1285 = vld [vmem:[%s489 + $0x178] sm:$0xff]
        %v1286 = vld [vmem:[%s489 + $0x180] sm:$0xff]
        %v1287 = vld [vmem:[%s489 + $0x188] sm:$0xff]
        %v1288 = vld [vmem:[%s489 + $0x190] sm:$0xff]
        %v1289 = vld [vmem:[%s489 + $0x198] sm:$0xff]
        %v1290 = vld [vmem:[%s489 + $0x1a0] sm:$0xff]
        %v1291 = vld [vmem:[%s489 + $0x1a8] sm:$0xff]
        %v1292 = vld [vmem:[%s489 + $0x1b0] sm:$0xff]
        %v1293 = vld [vmem:[%s489 + $0x1b8] sm:$0xff]
        %v1294 = vld [vmem:[%s489 + $0x1c0] sm:$0xff]
        %v1295 = vld [vmem:[%s489 + $0x1c8] sm:$0xff]
        %v1296 = vld [vmem:[%s489 + $0x1d0] sm:$0xff]
        %v1297 = vld [vmem:[%s489 + $0x1d8] sm:$0xff]
        %v1298 = vld [vmem:[%s489 + $0x1e0] sm:$0xff]
        %v1299 = vld [vmem:[%s489 + $0x1e8] sm:$0xff]
        %v1300 = vld [vmem:[%s489 + $0x1f0] sm:$0xff]
        %v1301 = vld [vmem:[%s489 + $0x1f8] sm:$0xff]
        %v1302 = vld [vmem:[%s489 + $0x200] sm:$0xff]
        %v1303 = vld [vmem:[%s489 + $0x208] sm:$0xff]
        %v1304 = vld [vmem:[%s489 + $0x210] sm:$0xff]
        %v1305 = vld [vmem:[%s489 + $0x218] sm:$0xff]
        %v1306 = vld [vmem:[%s489 + $0x220] sm:$0xff]
        %v1307 = vld [vmem:[%s489 + $0x228] sm:$0xff]
        %v1308 = vld [vmem:[%s489 + $0x230] sm:$0xff]
        %v1309 = vld [vmem:[%s489 + $0x238] sm:$0xff]
        %v1310 = vld [vmem:[%s489 + $0x240] sm:$0xff]
        %v1311 = vld [vmem:[%s489 + $0x248] sm:$0xff]
        %v1312 = vld [vmem:[%s489 + $0x250] sm:$0xff]
        %v1313 = vld [vmem:[%s489 + $0x258] sm:$0xff]
        %v1314 = vld [vmem:[%s489 + $0x260] sm:$0xff]
        %v1315 = vld [vmem:[%s489 + $0x268] sm:$0xff]
        %v1316 = vld [vmem:[%s489 + $0x270] sm:$0xff]
        %v1317 = vld [vmem:[%s489 + $0x278] sm:$0xff]
        %v1318 = vld [vmem:[%s489 + $0x280] sm:$0xff]
        %v1319 = vld [vmem:[%s489 + $0x288] sm:$0xff]
        %v1320 = vld [vmem:[%s489 + $0x290] sm:$0xff]
        %v1321 = vld [vmem:[%s489 + $0x298] sm:$0xff]
        %v1322 = vld [vmem:[%s489 + $0x2a0] sm:$0xff]
        %v1323 = vld [vmem:[%s489 + $0x2a8] sm:$0xff]
        %v1324 = vld [vmem:[%s489 + $0x2b0] sm:$0xff]
        %v1325 = vld [vmem:[%s489 + $0x2b8] sm:$0xff]
        %v1326 = vld [vmem:[%s489 + $0x2c0] sm:$0xff]
        %v1327 = vld [vmem:[%s489 + $0x2c8] sm:$0xff]
        %v1328 = vld [vmem:[%s489 + $0x2d0] sm:$0xff]
        %v1329 = vld [vmem:[%s489 + $0x2d8] sm:$0xff]
        %v1330 = vld [vmem:[%s489 + $0x2e0] sm:$0xff]
        %v1331 = vld [vmem:[%s489 + $0x2e8] sm:$0xff]
        %v1332 = vld [vmem:[%s489 + $0x2f0] sm:$0xff]
        %v1333 = vld [vmem:[%s489 + $0x2f8] sm:$0xff]
        %v1334 = vld [vmem:[%s489 + $0x300] sm:$0xff]
        %v1335 = vld [vmem:[%s489 + $0x308] sm:$0xff]
        %v1336 = vld [vmem:[%s489 + $0x310] sm:$0xff]
        %v1337 = vld [vmem:[%s489 + $0x318] sm:$0xff]
        %v1338 = vld [vmem:[%s489 + $0x320] sm:$0xff]
        %v1339 = vld [vmem:[%s489 + $0x328] sm:$0xff]
        %v1340 = vld [vmem:[%s489 + $0x330] sm:$0xff]
        %v1341 = vld [vmem:[%s489 + $0x338] sm:$0xff]
        %v1342 = vld [vmem:[%s489 + $0x340] sm:$0xff]
        %v1343 = vld [vmem:[%s489 + $0x348] sm:$0xff]
        %v1344 = vld [vmem:[%s489 + $0x350] sm:$0xff]
        %v1345 = vld [vmem:[%s489 + $0x358] sm:$0xff]
        %v1346 = vld [vmem:[%s489 + $0x360] sm:$0xff]
        %v1347 = vld [vmem:[%s489 + $0x368] sm:$0xff]
        %v1348 = vld [vmem:[%s489 + $0x370] sm:$0xff]
        %v1349 = vld [vmem:[%s489 + $0x378] sm:$0xff]
        %v1350 = vld [vmem:[%s489 + $0x380] sm:$0xff]
        %v1351 = vld [vmem:[%s489 + $0x388] sm:$0xff]
        %v1352 = vld [vmem:[%s489 + $0x390] sm:$0xff]
        %v1353 = vld [vmem:[%s489 + $0x398] sm:$0xff]
        %v1354 = vld [vmem:[%s489 + $0x3a0] sm:$0xff]
        %v1355 = vld [vmem:[%s489 + $0x3a8] sm:$0xff]
        %v1356 = vld [vmem:[%s489 + $0x3b0] sm:$0xff]
        %v1357 = vld [vmem:[%s489 + $0x3b8] sm:$0xff]
        %v1358 = vld [vmem:[%s489 + $0x3c0] sm:$0xff]
        %v1359 = vld [vmem:[%s489 + $0x3c8] sm:$0xff]
        %v1360 = vld [vmem:[%s489 + $0x3d0] sm:$0xff]
        %v1361 = vld [vmem:[%s489 + $0x3d8] sm:$0xff]
        %v1362 = vld [vmem:[%s489 + $0x3e0] sm:$0xff]
        %v1363 = vld [vmem:[%s489 + $0x3e8] sm:$0xff]
        %v1364 = vld [vmem:[%s489 + $0x3f0] sm:$0xff]
        %v1365 = vld [vmem:[%s489 + $0x3f8] sm:$0xff]
        %v1366 = vsub.f32 %v598, %v1238
        %v1367 = vsub.f32 %v599, %v1239
        %v1368 = vsub.f32 %v600, %v1240
        %v1369 = vsub.f32 %v601, %v1241
        %v1370 = vsub.f32 %v602, %v1242
        %v1371 = vsub.f32 %v603, %v1243
        %v1372 = vsub.f32 %v604, %v1244
        %v1373 = vsub.f32 %v605, %v1245
        %v1374 = vsub.f32 %v606, %v1246
        %v1375 = vsub.f32 %v607, %v1247
        %v1376 = vsub.f32 %v608, %v1248
        %v1377 = vsub.f32 %v609, %v1249
        %v1378 = vsub.f32 %v610, %v1250
        %v1379 = vsub.f32 %v611, %v1251
        %v1380 = vsub.f32 %v612, %v1252
        %v1381 = vsub.f32 %v613, %v1253
        %v1382 = vsub.f32 %v614, %v1254
        %v1383 = vsub.f32 %v615, %v1255
        %v1384 = vsub.f32 %v616, %v1256
        %v1385 = vsub.f32 %v617, %v1257
        %v1386 = vsub.f32 %v618, %v1258
        %v1387 = vsub.f32 %v619, %v1259
        %v1388 = vsub.f32 %v620, %v1260
        %v1389 = vsub.f32 %v621, %v1261
        %v1390 = vsub.f32 %v622, %v1262
        %v1391 = vsub.f32 %v623, %v1263
        %v1392 = vsub.f32 %v624, %v1264
        %v1393 = vsub.f32 %v625, %v1265
        %v1394 = vsub.f32 %v626, %v1266
        %v1395 = vsub.f32 %v627, %v1267
        %v1396 = vsub.f32 %v628, %v1268
        %v1397 = vsub.f32 %v629, %v1269
        %v1398 = vsub.f32 %v630, %v1270
        %v1399 = vsub.f32 %v631, %v1271
        %v1400 = vsub.f32 %v632, %v1272
        %v1401 = vsub.f32 %v633, %v1273
        %v1402 = vsub.f32 %v634, %v1274
        %v1403 = vsub.f32 %v635, %v1275
        %v1404 = vsub.f32 %v636, %v1276
        %v1405 = vsub.f32 %v637, %v1277
        %v1406 = vsub.f32 %v638, %v1278
        %v1407 = vsub.f32 %v639, %v1279
        %v1408 = vsub.f32 %v640, %v1280
        %v1409 = vsub.f32 %v641, %v1281
        %v1410 = vsub.f32 %v642, %v1282
        %v1411 = vsub.f32 %v643, %v1283
        %v1412 = vsub.f32 %v644, %v1284
        %v1413 = vsub.f32 %v645, %v1285
        %v1414 = vsub.f32 %v646, %v1286
        %v1415 = vsub.f32 %v647, %v1287
        %v1416 = vsub.f32 %v648, %v1288
        %v1417 = vsub.f32 %v649, %v1289
        %v1418 = vsub.f32 %v650, %v1290
        %v1419 = vsub.f32 %v651, %v1291
        %v1420 = vsub.f32 %v652, %v1292
        %v1421 = vsub.f32 %v653, %v1293
        %v1422 = vsub.f32 %v654, %v1294
        %v1423 = vsub.f32 %v655, %v1295
        %v1424 = vsub.f32 %v656, %v1296
        %v1425 = vsub.f32 %v657, %v1297
        %v1426 = vsub.f32 %v658, %v1298
        %v1427 = vsub.f32 %v659, %v1299
        %v1428 = vsub.f32 %v660, %v1300
        %v1429 = vsub.f32 %v661, %v1301
        %v1430 = vsub.f32 %v662, %v1302
        %v1431 = vsub.f32 %v663, %v1303
        %v1432 = vsub.f32 %v664, %v1304
        %v1433 = vsub.f32 %v665, %v1305
        %v1434 = vsub.f32 %v666, %v1306
        %v1435 = vsub.f32 %v667, %v1307
        %v1436 = vsub.f32 %v668, %v1308
        %v1437 = vsub.f32 %v669, %v1309
        %v1438 = vsub.f32 %v670, %v1310
        %v1439 = vsub.f32 %v671, %v1311
        %v1440 = vsub.f32 %v672, %v1312
        %v1441 = vsub.f32 %v673, %v1313
        %v1442 = vsub.f32 %v674, %v1314
        %v1443 = vsub.f32 %v675, %v1315
        %v1444 = vsub.f32 %v676, %v1316
        %v1445 = vsub.f32 %v677, %v1317
        %v1446 = vsub.f32 %v678, %v1318
        %v1447 = vsub.f32 %v679, %v1319
        %v1448 = vsub.f32 %v680, %v1320
        %v1449 = vsub.f32 %v681, %v1321
        %v1450 = vsub.f32 %v682, %v1322
        %v1451 = vsub.f32 %v683, %v1323
        %v1452 = vsub.f32 %v684, %v1324
        %v1453 = vsub.f32 %v685, %v1325
        %v1454 = vsub.f32 %v686, %v1326
        %v1455 = vsub.f32 %v687, %v1327
        %v1456 = vsub.f32 %v688, %v1328
        %v1457 = vsub.f32 %v689, %v1329
        %v1458 = vsub.f32 %v690, %v1330
        %v1459 = vsub.f32 %v691, %v1331
        %v1460 = vsub.f32 %v692, %v1332
        %v1461 = vsub.f32 %v693, %v1333
        %v1462 = vsub.f32 %v694, %v1334
        %v1463 = vsub.f32 %v695, %v1335
        %v1464 = vsub.f32 %v696, %v1336
        %v1465 = vsub.f32 %v697, %v1337
        %v1466 = vsub.f32 %v698, %v1338
        %v1467 = vsub.f32 %v699, %v1339
        %v1468 = vsub.f32 %v700, %v1340
        %v1469 = vsub.f32 %v701, %v1341
        %v1470 = vsub.f32 %v702, %v1342
        %v1471 = vsub.f32 %v703, %v1343
        %v1472 = vsub.f32 %v704, %v1344
        %v1473 = vsub.f32 %v705, %v1345
        %v1474 = vsub.f32 %v706, %v1346
        %v1475 = vsub.f32 %v707, %v1347
        %v1476 = vsub.f32 %v708, %v1348
        %v1477 = vsub.f32 %v709, %v1349
        %v1478 = vsub.f32 %v710, %v1350
        %v1479 = vsub.f32 %v711, %v1351
        %v1480 = vsub.f32 %v712, %v1352
        %v1481 = vsub.f32 %v713, %v1353
        %v1482 = vsub.f32 %v714, %v1354
        %v1483 = vsub.f32 %v715, %v1355
        %v1484 = vsub.f32 %v716, %v1356
        %v1485 = vsub.f32 %v717, %v1357
        %v1486 = vsub.f32 %v718, %v1358
        %v1487 = vsub.f32 %v719, %v1359
        %v1488 = vsub.f32 %v720, %v1360
        %v1489 = vsub.f32 %v721, %v1361
        %v1490 = vsub.f32 %v722, %v1362
        %v1491 = vsub.f32 %v723, %v1363
        %v1492 = vsub.f32 %v724, %v1364
        %v1493 = vsub.f32 %v725, %v1365
        %v1494 = vsub.f32 %v1366, %v1110
        %v1495 = vsub.f32 %v1367, %v1111
        %v1496 = vsub.f32 %v1368, %v1112
        %v1497 = vsub.f32 %v1369, %v1113
        %v1498 = vsub.f32 %v1370, %v1114
        %v1499 = vsub.f32 %v1371, %v1115
        %v1500 = vsub.f32 %v1372, %v1116
        %v1501 = vsub.f32 %v1373, %v1117
        %v1502 = vsub.f32 %v1374, %v1118
        %v1503 = vsub.f32 %v1375, %v1119
        %v1504 = vsub.f32 %v1376, %v1120
        %v1505 = vsub.f32 %v1377, %v1121
        %v1506 = vsub.f32 %v1378, %v1122
        %v1507 = vsub.f32 %v1379, %v1123
        %v1508 = vsub.f32 %v1380, %v1124
        %v1509 = vsub.f32 %v1381, %v1125
        %v1510 = vsub.f32 %v1382, %v1126
        %v1511 = vsub.f32 %v1383, %v1127
        %v1512 = vsub.f32 %v1384, %v1128
        %v1513 = vsub.f32 %v1385, %v1129
        %v1514 = vsub.f32 %v1386, %v1130
        %v1515 = vsub.f32 %v1387, %v1131
        %v1516 = vsub.f32 %v1388, %v1132
        %v1517 = vsub.f32 %v1389, %v1133
        %v1518 = vsub.f32 %v1390, %v1134
        %v1519 = vsub.f32 %v1391, %v1135
        %v1520 = vsub.f32 %v1392, %v1136
        %v1521 = vsub.f32 %v1393, %v1137
        %v1522 = vsub.f32 %v1394, %v1138
        %v1523 = vsub.f32 %v1395, %v1139
        %v1524 = vsub.f32 %v1396, %v1140
        %v1525 = vsub.f32 %v1397, %v1141
        %v1526 = vsub.f32 %v1398, %v1142
        %v1527 = vsub.f32 %v1399, %v1143
        %v1528 = vsub.f32 %v1400, %v1144
        %v1529 = vsub.f32 %v1401, %v1145
        %v1530 = vsub.f32 %v1402, %v1146
        %v1531 = vsub.f32 %v1403, %v1147
        %v1532 = vsub.f32 %v1404, %v1148
        %v1533 = vsub.f32 %v1405, %v1149
        %v1534 = vsub.f32 %v1406, %v1150
        %v1535 = vsub.f32 %v1407, %v1151
        %v1536 = vsub.f32 %v1408, %v1152
        %v1537 = vsub.f32 %v1409, %v1153
        %v1538 = vsub.f32 %v1410, %v1154
        %v1539 = vsub.f32 %v1411, %v1155
        %v1540 = vsub.f32 %v1412, %v1156
        %v1541 = vsub.f32 %v1413, %v1157
        %v1542 = vsub.f32 %v1414, %v1158
        %v1543 = vsub.f32 %v1415, %v1159
        %v1544 = vsub.f32 %v1416, %v1160
        %v1545 = vsub.f32 %v1417, %v1161
        %v1546 = vsub.f32 %v1418, %v1162
        %v1547 = vsub.f32 %v1419, %v1163
        %v1548 = vsub.f32 %v1420, %v1164
        %v1549 = vsub.f32 %v1421, %v1165
        %v1550 = vsub.f32 %v1422, %v1166
        %v1551 = vsub.f32 %v1423, %v1167
        %v1552 = vsub.f32 %v1424, %v1168
        %v1553 = vsub.f32 %v1425, %v1169
        %v1554 = vsub.f32 %v1426, %v1170
        %v1555 = vsub.f32 %v1427, %v1171
        %v1556 = vsub.f32 %v1428, %v1172
        %v1557 = vsub.f32 %v1429, %v1173
        %v1558 = vsub.f32 %v1430, %v1174
        %v1559 = vsub.f32 %v1431, %v1175
        %v1560 = vsub.f32 %v1432, %v1176
        %v1561 = vsub.f32 %v1433, %v1177
        %v1562 = vsub.f32 %v1434, %v1178
        %v1563 = vsub.f32 %v1435, %v1179
        %v1564 = vsub.f32 %v1436, %v1180
        %v1565 = vsub.f32 %v1437, %v1181
        %v1566 = vsub.f32 %v1438, %v1182
        %v1567 = vsub.f32 %v1439, %v1183
        %v1568 = vsub.f32 %v1440, %v1184
        %v1569 = vsub.f32 %v1441, %v1185
        %v1570 = vsub.f32 %v1442, %v1186
        %v1571 = vsub.f32 %v1443, %v1187
        %v1572 = vsub.f32 %v1444, %v1188
        %v1573 = vsub.f32 %v1445, %v1189
        %v1574 = vsub.f32 %v1446, %v1190
        %v1575 = vsub.f32 %v1447, %v1191
        %v1576 = vsub.f32 %v1448, %v1192
        %v1577 = vsub.f32 %v1449, %v1193
        %v1578 = vsub.f32 %v1450, %v1194
        %v1579 = vsub.f32 %v1451, %v1195
        %v1580 = vsub.f32 %v1452, %v1196
        %v1581 = vsub.f32 %v1453, %v1197
        %v1582 = vsub.f32 %v1454, %v1198
        %v1583 = vsub.f32 %v1455, %v1199
        %v1584 = vsub.f32 %v1456, %v1200
        %v1585 = vsub.f32 %v1457, %v1201
        %v1586 = vsub.f32 %v1458, %v1202
        %v1587 = vsub.f32 %v1459, %v1203
        %v1588 = vsub.f32 %v1460, %v1204
        %v1589 = vsub.f32 %v1461, %v1205
        %v1590 = vsub.f32 %v1462, %v1206
        %v1591 = vsub.f32 %v1463, %v1207
        %v1592 = vsub.f32 %v1464, %v1208
        %v1593 = vsub.f32 %v1465, %v1209
        %v1594 = vsub.f32 %v1466, %v1210
        %v1595 = vsub.f32 %v1467, %v1211
        %v1596 = vsub.f32 %v1468, %v1212
        %v1597 = vsub.f32 %v1469, %v1213
        %v1598 = vsub.f32 %v1470, %v1214
        %v1599 = vsub.f32 %v1471, %v1215
        %v1600 = vsub.f32 %v1472, %v1216
        %v1601 = vsub.f32 %v1473, %v1217
        %v1602 = vsub.f32 %v1474, %v1218
        %v1603 = vsub.f32 %v1475, %v1219
        %v1604 = vsub.f32 %v1476, %v1220
        %v1605 = vsub.f32 %v1477, %v1221
        %v1606 = vsub.f32 %v1478, %v1222
        %v1607 = vsub.f32 %v1479, %v1223
        %v1608 = vsub.f32 %v1480, %v1224
        %v1609 = vsub.f32 %v1481, %v1225
        %v1610 = vsub.f32 %v1482, %v1226
        %v1611 = vsub.f32 %v1483, %v1227
        %v1612 = vsub.f32 %v1484, %v1228
        %v1613 = vsub.f32 %v1485, %v1229
        %v1614 = vsub.f32 %v1486, %v1230
        %v1615 = vsub.f32 %v1487, %v1231
        %v1616 = vsub.f32 %v1488, %v1232
        %v1617 = vsub.f32 %v1489, %v1233
        %v1618 = vsub.f32 %v1490, %v1234
        %v1619 = vsub.f32 %v1491, %v1235
        %v1620 = vsub.f32 %v1492, %v1236
        %v1621 = vsub.f32 %v1493, %v1237
        %v1622 = vmul.f32 %v982, %v1494
        %v1623 = vmul.f32 %v983, %v1495
        %v1624 = vmul.f32 %v984, %v1496
        %v1625 = vmul.f32 %v985, %v1497
        %v1626 = vmul.f32 %v986, %v1498
        %v1627 = vmul.f32 %v987, %v1499
        %v1628 = vmul.f32 %v988, %v1500
        %v1629 = vmul.f32 %v989, %v1501
        %v1630 = vmul.f32 %v990, %v1502
        %v1631 = vmul.f32 %v991, %v1503
        %v1632 = vmul.f32 %v992, %v1504
        %v1633 = vmul.f32 %v993, %v1505
        %v1634 = vmul.f32 %v994, %v1506
        %v1635 = vmul.f32 %v995, %v1507
        %v1636 = vmul.f32 %v996, %v1508
        %v1637 = vmul.f32 %v997, %v1509
        %v1638 = vmul.f32 %v998, %v1510
        %v1639 = vmul.f32 %v999, %v1511
        %v1640 = vmul.f32 %v1000, %v1512
        %v1641 = vmul.f32 %v1001, %v1513
        %v1642 = vmul.f32 %v1002, %v1514
        %v1643 = vmul.f32 %v1003, %v1515
        %v1644 = vmul.f32 %v1004, %v1516
        %v1645 = vmul.f32 %v1005, %v1517
        %v1646 = vmul.f32 %v1006, %v1518
        %v1647 = vmul.f32 %v1007, %v1519
        %v1648 = vmul.f32 %v1008, %v1520
        %v1649 = vmul.f32 %v1009, %v1521
        %v1650 = vmul.f32 %v1010, %v1522
        %v1651 = vmul.f32 %v1011, %v1523
        %v1652 = vmul.f32 %v1012, %v1524
        %v1653 = vmul.f32 %v1013, %v1525
        %v1654 = vmul.f32 %v1014, %v1526
        %v1655 = vmul.f32 %v1015, %v1527
        %v1656 = vmul.f32 %v1016, %v1528
        %v1657 = vmul.f32 %v1017, %v1529
        %v1658 = vmul.f32 %v1018, %v1530
        %v1659 = vmul.f32 %v1019, %v1531
        %v1660 = vmul.f32 %v1020, %v1532
        %v1661 = vmul.f32 %v1021, %v1533
        %v1662 = vmul.f32 %v1022, %v1534
        %v1663 = vmul.f32 %v1023, %v1535
        %v1664 = vmul.f32 %v1024, %v1536
        %v1665 = vmul.f32 %v1025, %v1537
        %v1666 = vmul.f32 %v1026, %v1538
        %v1667 = vmul.f32 %v1027, %v1539
        %v1668 = vmul.f32 %v1028, %v1540
        %v1669 = vmul.f32 %v1029, %v1541
        %v1670 = vmul.f32 %v1030, %v1542
        %v1671 = vmul.f32 %v1031, %v1543
        %v1672 = vmul.f32 %v1032, %v1544
        %v1673 = vmul.f32 %v1033, %v1545
        %v1674 = vmul.f32 %v1034, %v1546
        %v1675 = vmul.f32 %v1035, %v1547
        %v1676 = vmul.f32 %v1036, %v1548
        %v1677 = vmul.f32 %v1037, %v1549
        %v1678 = vmul.f32 %v1038, %v1550
        %v1679 = vmul.f32 %v1039, %v1551
        %v1680 = vmul.f32 %v1040, %v1552
        %v1681 = vmul.f32 %v1041, %v1553
        %v1682 = vmul.f32 %v1042, %v1554
        %v1683 = vmul.f32 %v1043, %v1555
        %v1684 = vmul.f32 %v1044, %v1556
        %v1685 = vmul.f32 %v1045, %v1557
        %v1686 = vmul.f32 %v1046, %v1558
        %v1687 = vmul.f32 %v1047, %v1559
        %v1688 = vmul.f32 %v1048, %v1560
        %v1689 = vmul.f32 %v1049, %v1561
        %v1690 = vmul.f32 %v1050, %v1562
        %v1691 = vmul.f32 %v1051, %v1563
        %v1692 = vmul.f32 %v1052, %v1564
        %v1693 = vmul.f32 %v1053, %v1565
        %v1694 = vmul.f32 %v1054, %v1566
        %v1695 = vmul.f32 %v1055, %v1567
        %v1696 = vmul.f32 %v1056, %v1568
        %v1697 = vmul.f32 %v1057, %v1569
        %v1698 = vmul.f32 %v1058, %v1570
        %v1699 = vmul.f32 %v1059, %v1571
        %v1700 = vmul.f32 %v1060, %v1572
        %v1701 = vmul.f32 %v1061, %v1573
        %v1702 = vmul.f32 %v1062, %v1574
        %v1703 = vmul.f32 %v1063, %v1575
        %v1704 = vmul.f32 %v1064, %v1576
        %v1705 = vmul.f32 %v1065, %v1577
        %v1706 = vmul.f32 %v1066, %v1578
        %v1707 = vmul.f32 %v1067, %v1579
        %v1708 = vmul.f32 %v1068, %v1580
        %v1709 = vmul.f32 %v1069, %v1581
        %v1710 = vmul.f32 %v1070, %v1582
        %v1711 = vmul.f32 %v1071, %v1583
        %v1712 = vmul.f32 %v1072, %v1584
        %v1713 = vmul.f32 %v1073, %v1585
        %v1714 = vmul.f32 %v1074, %v1586
        %v1715 = vmul.f32 %v1075, %v1587
        %v1716 = vmul.f32 %v1076, %v1588
        %v1717 = vmul.f32 %v1077, %v1589
        %v1718 = vmul.f32 %v1078, %v1590
        %v1719 = vmul.f32 %v1079, %v1591
        %v1720 = vmul.f32 %v1080, %v1592
        %v1721 = vmul.f32 %v1081, %v1593
        %v1722 = vmul.f32 %v1082, %v1594
        %v1723 = vmul.f32 %v1083, %v1595
        %v1724 = vmul.f32 %v1084, %v1596
        %v1725 = vmul.f32 %v1085, %v1597
        %v1726 = vmul.f32 %v1086, %v1598
        %v1727 = vmul.f32 %v1087, %v1599
        %v1728 = vmul.f32 %v1088, %v1600
        %v1729 = vmul.f32 %v1089, %v1601
        %v1730 = vmul.f32 %v1090, %v1602
        %v1731 = vmul.f32 %v1091, %v1603
        %v1732 = vmul.f32 %v1092, %v1604
        %v1733 = vmul.f32 %v1093, %v1605
        %v1734 = vmul.f32 %v1094, %v1606
        %v1735 = vmul.f32 %v1095, %v1607
        %v1736 = vmul.f32 %v1096, %v1608
        %v1737 = vmul.f32 %v1097, %v1609
        %v1738 = vmul.f32 %v1098, %v1610
        %v1739 = vmul.f32 %v1099, %v1611
        %v1740 = vmul.f32 %v1100, %v1612
        %v1741 = vmul.f32 %v1101, %v1613
        %v1742 = vmul.f32 %v1102, %v1614
        %v1743 = vmul.f32 %v1103, %v1615
        %v1744 = vmul.f32 %v1104, %v1616
        %v1745 = vmul.f32 %v1105, %v1617
        %v1746 = vmul.f32 %v1106, %v1618
        %v1747 = vmul.f32 %v1107, %v1619
        %v1748 = vmul.f32 %v1108, %v1620
        %v1749 = vmul.f32 %v1109, %v1621
        %v1750 = vsub.f32 0.0, %v1622
        %v1751 = vsub.f32 0.0, %v1623
        %v1752 = vsub.f32 0.0, %v1624
        %v1753 = vsub.f32 0.0, %v1625
        %v1754 = vsub.f32 0.0, %v1626
        %v1755 = vsub.f32 0.0, %v1627
        %v1756 = vsub.f32 0.0, %v1628
        %v1757 = vsub.f32 0.0, %v1629
        %v1758 = vsub.f32 0.0, %v1630
        %v1759 = vsub.f32 0.0, %v1631
        %v1760 = vsub.f32 0.0, %v1632
        %v1761 = vsub.f32 0.0, %v1633
        %v1762 = vsub.f32 0.0, %v1634
        %v1763 = vsub.f32 0.0, %v1635
        %v1764 = vsub.f32 0.0, %v1636
        %v1765 = vsub.f32 0.0, %v1637
        %v1766 = vsub.f32 0.0, %v1638
        %v1767 = vsub.f32 0.0, %v1639
        %v1768 = vsub.f32 0.0, %v1640
        %v1769 = vsub.f32 0.0, %v1641
        %v1770 = vsub.f32 0.0, %v1642
        %v1771 = vsub.f32 0.0, %v1643
        %v1772 = vsub.f32 0.0, %v1644
        %v1773 = vsub.f32 0.0, %v1645
        %v1774 = vsub.f32 0.0, %v1646
        %v1775 = vsub.f32 0.0, %v1647
        %v1776 = vsub.f32 0.0, %v1648
        %v1777 = vsub.f32 0.0, %v1649
        %v1778 = vsub.f32 0.0, %v1650
        %v1779 = vsub.f32 0.0, %v1651
        %v1780 = vsub.f32 0.0, %v1652
        %v1781 = vsub.f32 0.0, %v1653
        %v1782 = vsub.f32 0.0, %v1654
        %v1783 = vsub.f32 0.0, %v1655
        %v1784 = vsub.f32 0.0, %v1656
        %v1785 = vsub.f32 0.0, %v1657
        %v1786 = vsub.f32 0.0, %v1658
        %v1787 = vsub.f32 0.0, %v1659
        %v1788 = vsub.f32 0.0, %v1660
        %v1789 = vsub.f32 0.0, %v1661
        %v1790 = vsub.f32 0.0, %v1662
        %v1791 = vsub.f32 0.0, %v1663
        %v1792 = vsub.f32 0.0, %v1664
        %v1793 = vsub.f32 0.0, %v1665
        %v1794 = vsub.f32 0.0, %v1666
        %v1795 = vsub.f32 0.0, %v1667
        %v1796 = vsub.f32 0.0, %v1668
        %v1797 = vsub.f32 0.0, %v1669
        %v1798 = vsub.f32 0.0, %v1670
        %v1799 = vsub.f32 0.0, %v1671
        %v1800 = vsub.f32 0.0, %v1672
        %v1801 = vsub.f32 0.0, %v1673
        %v1802 = vsub.f32 0.0, %v1674
        %v1803 = vsub.f32 0.0, %v1675
        %v1804 = vsub.f32 0.0, %v1676
        %v1805 = vsub.f32 0.0, %v1677
        %v1806 = vsub.f32 0.0, %v1678
        %v1807 = vsub.f32 0.0, %v1679
        %v1808 = vsub.f32 0.0, %v1680
        %v1809 = vsub.f32 0.0, %v1681
        %v1810 = vsub.f32 0.0, %v1682
        %v1811 = vsub.f32 0.0, %v1683
        %v1812 = vsub.f32 0.0, %v1684
        %v1813 = vsub.f32 0.0, %v1685
        %v1814 = vsub.f32 0.0, %v1686
        %v1815 = vsub.f32 0.0, %v1687
        %v1816 = vsub.f32 0.0, %v1688
        %v1817 = vsub.f32 0.0, %v1689
        %v1818 = vsub.f32 0.0, %v1690
        %v1819 = vsub.f32 0.0, %v1691
        %v1820 = vsub.f32 0.0, %v1692
        %v1821 = vsub.f32 0.0, %v1693
        %v1822 = vsub.f32 0.0, %v1694
        %v1823 = vsub.f32 0.0, %v1695
        %v1824 = vsub.f32 0.0, %v1696
        %v1825 = vsub.f32 0.0, %v1697
        %v1826 = vsub.f32 0.0, %v1698
        %v1827 = vsub.f32 0.0, %v1699
        %v1828 = vsub.f32 0.0, %v1700
        %v1829 = vsub.f32 0.0, %v1701
        %v1830 = vsub.f32 0.0, %v1702
        %v1831 = vsub.f32 0.0, %v1703
        %v1832 = vsub.f32 0.0, %v1704
        %v1833 = vsub.f32 0.0, %v1705
        %v1834 = vsub.f32 0.0, %v1706
        %v1835 = vsub.f32 0.0, %v1707
        %v1836 = vsub.f32 0.0, %v1708
        %v1837 = vsub.f32 0.0, %v1709
        %v1838 = vsub.f32 0.0, %v1710
        %v1839 = vsub.f32 0.0, %v1711
        %v1840 = vsub.f32 0.0, %v1712
        %v1841 = vsub.f32 0.0, %v1713
        %v1842 = vsub.f32 0.0, %v1714
        %v1843 = vsub.f32 0.0, %v1715
        %v1844 = vsub.f32 0.0, %v1716
        %v1845 = vsub.f32 0.0, %v1717
        %v1846 = vsub.f32 0.0, %v1718
        %v1847 = vsub.f32 0.0, %v1719
        %v1848 = vsub.f32 0.0, %v1720
        %v1849 = vsub.f32 0.0, %v1721
        %v1850 = vsub.f32 0.0, %v1722
        %v1851 = vsub.f32 0.0, %v1723
        %v1852 = vsub.f32 0.0, %v1724
        %v1853 = vsub.f32 0.0, %v1725
        %v1854 = vsub.f32 0.0, %v1726
        %v1855 = vsub.f32 0.0, %v1727
        %v1856 = vsub.f32 0.0, %v1728
        %v1857 = vsub.f32 0.0, %v1729
        %v1858 = vsub.f32 0.0, %v1730
        %v1859 = vsub.f32 0.0, %v1731
        %v1860 = vsub.f32 0.0, %v1732
        %v1861 = vsub.f32 0.0, %v1733
        %v1862 = vsub.f32 0.0, %v1734
        %v1863 = vsub.f32 0.0, %v1735
        %v1864 = vsub.f32 0.0, %v1736
        %v1865 = vsub.f32 0.0, %v1737
        %v1866 = vsub.f32 0.0, %v1738
        %v1867 = vsub.f32 0.0, %v1739
        %v1868 = vsub.f32 0.0, %v1740
        %v1869 = vsub.f32 0.0, %v1741
        %v1870 = vsub.f32 0.0, %v1742
        %v1871 = vsub.f32 0.0, %v1743
        %v1872 = vsub.f32 0.0, %v1744
        %v1873 = vsub.f32 0.0, %v1745
        %v1874 = vsub.f32 0.0, %v1746
        %v1875 = vsub.f32 0.0, %v1747
        %v1876 = vsub.f32 0.0, %v1748
        %v1877 = vsub.f32 0.0, %v1749
        %v1878 = vmul.f32 %v1750, 1.442695
        %v1879 = vpow.pop %v1878
        %v1880 = vmul.f32 %v1751, 1.442695
        %v1881 = vpow.pop %v1880
        %v1882 = vmul.f32 %v1752, 1.442695
        %v1883 = vpow.pop %v1882
        %v1884 = vmul.f32 %v1753, 1.442695
        %v1885 = vpow.pop %v1884
        %v1886 = vmul.f32 %v1754, 1.442695
        %v1887 = vpow.pop %v1886
        %v1888 = vmul.f32 %v1755, 1.442695
        %v1889 = vpow.pop %v1888
        %v1890 = vmul.f32 %v1756, 1.442695
        %v1891 = vpow.pop %v1890
        %v1892 = vmul.f32 %v1757, 1.442695
        %v1893 = vpow.pop %v1892
        %v1894 = vmul.f32 %v1758, 1.442695
        %v1895 = vpow.pop %v1894
        %v1896 = vmul.f32 %v1759, 1.442695
        %v1897 = vpow.pop %v1896
        %v1898 = vmul.f32 %v1760, 1.442695
        %v1899 = vpow.pop %v1898
        %v1900 = vmul.f32 %v1761, 1.442695
        %v1901 = vpow.pop %v1900
        %v1902 = vmul.f32 %v1762, 1.442695
        %v1903 = vpow.pop %v1902
        %v1904 = vmul.f32 %v1763, 1.442695
        %v1905 = vpow.pop %v1904
        %v1906 = vmul.f32 %v1764, 1.442695
        %v1907 = vpow.pop %v1906
        %v1908 = vmul.f32 %v1765, 1.442695
        %v1909 = vpow.pop %v1908
        %v1910 = vmul.f32 %v1766, 1.442695
        %v1911 = vpow.pop %v1910
        %v1912 = vmul.f32 %v1767, 1.442695
        %v1913 = vpow.pop %v1912
        %v1914 = vmul.f32 %v1768, 1.442695
        %v1915 = vpow.pop %v1914
        %v1916 = vmul.f32 %v1769, 1.442695
        %v1917 = vpow.pop %v1916
        %v1918 = vmul.f32 %v1770, 1.442695
        %v1919 = vpow.pop %v1918
        %v1920 = vmul.f32 %v1771, 1.442695
        %v1921 = vpow.pop %v1920
        %v1922 = vmul.f32 %v1772, 1.442695
        %v1923 = vpow.pop %v1922
        %v1924 = vmul.f32 %v1773, 1.442695
        %v1925 = vpow.pop %v1924
        %v1926 = vmul.f32 %v1774, 1.442695
        %v1927 = vpow.pop %v1926
        %v1928 = vmul.f32 %v1775, 1.442695
        %v1929 = vpow.pop %v1928
        %v1930 = vmul.f32 %v1776, 1.442695
        %v1931 = vpow.pop %v1930
        %v1932 = vmul.f32 %v1777, 1.442695
        %v1933 = vpow.pop %v1932
        %v1934 = vmul.f32 %v1778, 1.442695
        %v1935 = vpow.pop %v1934
        %v1936 = vmul.f32 %v1779, 1.442695
        %v1937 = vpow.pop %v1936
        %v1938 = vmul.f32 %v1780, 1.442695
        %v1939 = vpow.pop %v1938
        %v1940 = vmul.f32 %v1781, 1.442695
        %v1941 = vpow.pop %v1940
        %v1942 = vmul.f32 %v1782, 1.442695
        %v1943 = vpow.pop %v1942
        %v1944 = vmul.f32 %v1783, 1.442695
        %v1945 = vpow.pop %v1944
        %v1946 = vmul.f32 %v1784, 1.442695
        %v1947 = vpow.pop %v1946
        %v1948 = vmul.f32 %v1785, 1.442695
        %v1949 = vpow.pop %v1948
        %v1950 = vmul.f32 %v1786, 1.442695
        %v1951 = vpow.pop %v1950
        %v1952 = vmul.f32 %v1787, 1.442695
        %v1953 = vpow.pop %v1952
        %v1954 = vmul.f32 %v1788, 1.442695
        %v1955 = vpow.pop %v1954
        %v1956 = vmul.f32 %v1789, 1.442695
        %v1957 = vpow.pop %v1956
        %v1958 = vmul.f32 %v1790, 1.442695
        %v1959 = vpow.pop %v1958
        %v1960 = vmul.f32 %v1791, 1.442695
        %v1961 = vpow.pop %v1960
        %v1962 = vmul.f32 %v1792, 1.442695
        %v1963 = vpow.pop %v1962
        %v1964 = vmul.f32 %v1793, 1.442695
        %v1965 = vpow.pop %v1964
        %v1966 = vmul.f32 %v1794, 1.442695
        %v1967 = vpow.pop %v1966
        %v1968 = vmul.f32 %v1795, 1.442695
        %v1969 = vpow.pop %v1968
        %v1970 = vmul.f32 %v1796, 1.442695
        %v1971 = vpow.pop %v1970
        %v1972 = vmul.f32 %v1797, 1.442695
        %v1973 = vpow.pop %v1972
        %v1974 = vmul.f32 %v1798, 1.442695
        %v1975 = vpow.pop %v1974
        %v1976 = vmul.f32 %v1799, 1.442695
        %v1977 = vpow.pop %v1976
        %v1978 = vmul.f32 %v1800, 1.442695
        %v1979 = vpow.pop %v1978
        %v1980 = vmul.f32 %v1801, 1.442695
        %v1981 = vpow.pop %v1980
        %v1982 = vmul.f32 %v1802, 1.442695
        %v1983 = vpow.pop %v1982
        %v1984 = vmul.f32 %v1803, 1.442695
        %v1985 = vpow.pop %v1984
        %v1986 = vmul.f32 %v1804, 1.442695
        %v1987 = vpow.pop %v1986
        %v1988 = vmul.f32 %v1805, 1.442695
        %v1989 = vpow.pop %v1988
        %v1990 = vmul.f32 %v1806, 1.442695
        %v1991 = vpow.pop %v1990
        %v1992 = vmul.f32 %v1807, 1.442695
        %v1993 = vpow.pop %v1992
        %v1994 = vmul.f32 %v1808, 1.442695
        %v1995 = vpow.pop %v1994
        %v1996 = vmul.f32 %v1809, 1.442695
        %v1997 = vpow.pop %v1996
        %v1998 = vmul.f32 %v1810, 1.442695
        %v1999 = vpow.pop %v1998
        %v2000 = vmul.f32 %v1811, 1.442695
        %v2001 = vpow.pop %v2000
        %v2002 = vmul.f32 %v1812, 1.442695
        %v2003 = vpow.pop %v2002
        %v2004 = vmul.f32 %v1813, 1.442695
        %v2005 = vpow.pop %v2004
        %v2006 = vmul.f32 %v1814, 1.442695
        %v2007 = vpow.pop %v2006
        %v2008 = vmul.f32 %v1815, 1.442695
        %v2009 = vpow.pop %v2008
        %v2010 = vmul.f32 %v1816, 1.442695
        %v2011 = vpow.pop %v2010
        %v2012 = vmul.f32 %v1817, 1.442695
        %v2013 = vpow.pop %v2012
        %v2014 = vmul.f32 %v1818, 1.442695
        %v2015 = vpow.pop %v2014
        %v2016 = vmul.f32 %v1819, 1.442695
        %v2017 = vpow.pop %v2016
        %v2018 = vmul.f32 %v1820, 1.442695
        %v2019 = vpow.pop %v2018
        %v2020 = vmul.f32 %v1821, 1.442695
        %v2021 = vpow.pop %v2020
        %v2022 = vmul.f32 %v1822, 1.442695
        %v2023 = vpow.pop %v2022
        %v2024 = vmul.f32 %v1823, 1.442695
        %v2025 = vpow.pop %v2024
        %v2026 = vmul.f32 %v1824, 1.442695
        %v2027 = vpow.pop %v2026
        %v2028 = vmul.f32 %v1825, 1.442695
        %v2029 = vpow.pop %v2028
        %v2030 = vmul.f32 %v1826, 1.442695
        %v2031 = vpow.pop %v2030
        %v2032 = vmul.f32 %v1827, 1.442695
        %v2033 = vpow.pop %v2032
        %v2034 = vmul.f32 %v1828, 1.442695
        %v2035 = vpow.pop %v2034
        %v2036 = vmul.f32 %v1829, 1.442695
        %v2037 = vpow.pop %v2036
        %v2038 = vmul.f32 %v1830, 1.442695
        %v2039 = vpow.pop %v2038
        %v2040 = vmul.f32 %v1831, 1.442695
        %v2041 = vpow.pop %v2040
        %v2042 = vmul.f32 %v1832, 1.442695
        %v2043 = vpow.pop %v2042
        %v2044 = vmul.f32 %v1833, 1.442695
        %v2045 = vpow.pop %v2044
        %v2046 = vmul.f32 %v1834, 1.442695
        %v2047 = vpow.pop %v2046
        %v2048 = vmul.f32 %v1835, 1.442695
        %v2049 = vpow.pop %v2048
        %v2050 = vmul.f32 %v1836, 1.442695
        %v2051 = vpow.pop %v2050
        %v2052 = vmul.f32 %v1837, 1.442695
        %v2053 = vpow.pop %v2052
        %v2054 = vmul.f32 %v1838, 1.442695
        %v2055 = vpow.pop %v2054
        %v2056 = vmul.f32 %v1839, 1.442695
        %v2057 = vpow.pop %v2056
        %v2058 = vmul.f32 %v1840, 1.442695
        %v2059 = vpow.pop %v2058
        %v2060 = vmul.f32 %v1841, 1.442695
        %v2061 = vpow.pop %v2060
        %v2062 = vmul.f32 %v1842, 1.442695
        %v2063 = vpow.pop %v2062
        %v2064 = vmul.f32 %v1843, 1.442695
        %v2065 = vpow.pop %v2064
        %v2066 = vmul.f32 %v1844, 1.442695
        %v2067 = vpow.pop %v2066
        %v2068 = vmul.f32 %v1845, 1.442695
        %v2069 = vpow.pop %v2068
        %v2070 = vmul.f32 %v1846, 1.442695
        %v2071 = vpow.pop %v2070
        %v2072 = vmul.f32 %v1847, 1.442695
        %v2073 = vpow.pop %v2072
        %v2074 = vmul.f32 %v1848, 1.442695
        %v2075 = vpow.pop %v2074
        %v2076 = vmul.f32 %v1849, 1.442695
        %v2077 = vpow.pop %v2076
        %v2078 = vmul.f32 %v1850, 1.442695
        %v2079 = vpow.pop %v2078
        %v2080 = vmul.f32 %v1851, 1.442695
        %v2081 = vpow.pop %v2080
        %v2082 = vmul.f32 %v1852, 1.442695
        %v2083 = vpow.pop %v2082
        %v2084 = vmul.f32 %v1853, 1.442695
        %v2085 = vpow.pop %v2084
        %v2086 = vmul.f32 %v1854, 1.442695
        %v2087 = vpow.pop %v2086
        %v2088 = vmul.f32 %v1855, 1.442695
        %v2089 = vpow.pop %v2088
        %v2090 = vmul.f32 %v1856, 1.442695
        %v2091 = vpow.pop %v2090
        %v2092 = vmul.f32 %v1857, 1.442695
        %v2093 = vpow.pop %v2092
        %v2094 = vmul.f32 %v1858, 1.442695
        %v2095 = vpow.pop %v2094
        %v2096 = vmul.f32 %v1859, 1.442695
        %v2097 = vpow.pop %v2096
        %v2098 = vmul.f32 %v1860, 1.442695
        %v2099 = vpow.pop %v2098
        %v2100 = vmul.f32 %v1861, 1.442695
        %v2101 = vpow.pop %v2100
        %v2102 = vmul.f32 %v1862, 1.442695
        %v2103 = vpow.pop %v2102
        %v2104 = vmul.f32 %v1863, 1.442695
        %v2105 = vpow.pop %v2104
        %v2106 = vmul.f32 %v1864, 1.442695
        %v2107 = vpow.pop %v2106
        %v2108 = vmul.f32 %v1865, 1.442695
        %v2109 = vpow.pop %v2108
        %v2110 = vmul.f32 %v1866, 1.442695
        %v2111 = vpow.pop %v2110
        %v2112 = vmul.f32 %v1867, 1.442695
        %v2113 = vpow.pop %v2112
        %v2114 = vmul.f32 %v1868, 1.442695
        %v2115 = vpow.pop %v2114
        %v2116 = vmul.f32 %v1869, 1.442695
        %v2117 = vpow.pop %v2116
        %v2118 = vmul.f32 %v1870, 1.442695
        %v2119 = vpow.pop %v2118
        %v2120 = vmul.f32 %v1871, 1.442695
        %v2121 = vpow.pop %v2120
        %v2122 = vmul.f32 %v1872, 1.442695
        %v2123 = vpow.pop %v2122
        %v2124 = vmul.f32 %v1873, 1.442695
        %v2125 = vpow.pop %v2124
        %v2126 = vmul.f32 %v1874, 1.442695
        %v2127 = vpow.pop %v2126
        %v2128 = vmul.f32 %v1875, 1.442695
        %v2129 = vpow.pop %v2128
        %v2130 = vmul.f32 %v1876, 1.442695
        %v2131 = vpow.pop %v2130
        %v2132 = vmul.f32 %v1877, 1.442695
        %v2133 = vpow.pop %v2132
        %v2134 = vadd.f32 %v1879, 1.0
        %v2135 = vadd.f32 %v1881, 1.0
        %v2136 = vadd.f32 %v1883, 1.0
        %v2137 = vadd.f32 %v1885, 1.0
        %v2138 = vadd.f32 %v1887, 1.0
        %v2139 = vadd.f32 %v1889, 1.0
        %v2140 = vadd.f32 %v1891, 1.0
        %v2141 = vadd.f32 %v1893, 1.0
        %v2142 = vadd.f32 %v1895, 1.0
        %v2143 = vadd.f32 %v1897, 1.0
        %v2144 = vadd.f32 %v1899, 1.0
        %v2145 = vadd.f32 %v1901, 1.0
        %v2146 = vadd.f32 %v1903, 1.0
        %v2147 = vadd.f32 %v1905, 1.0
        %v2148 = vadd.f32 %v1907, 1.0
        %v2149 = vadd.f32 %v1909, 1.0
        %v2150 = vadd.f32 %v1911, 1.0
        %v2151 = vadd.f32 %v1913, 1.0
        %v2152 = vadd.f32 %v1915, 1.0
        %v2153 = vadd.f32 %v1917, 1.0
        %v2154 = vadd.f32 %v1919, 1.0
        %v2155 = vadd.f32 %v1921, 1.0
        %v2156 = vadd.f32 %v1923, 1.0
        %v2157 = vadd.f32 %v1925, 1.0
        %v2158 = vadd.f32 %v1927, 1.0
        %v2159 = vadd.f32 %v1929, 1.0
        %v2160 = vadd.f32 %v1931, 1.0
        %v2161 = vadd.f32 %v1933, 1.0
        %v2162 = vadd.f32 %v1935, 1.0
        %v2163 = vadd.f32 %v1937, 1.0
        %v2164 = vadd.f32 %v1939, 1.0
        %v2165 = vadd.f32 %v1941, 1.0
        %v2166 = vadd.f32 %v1943, 1.0
        %v2167 = vadd.f32 %v1945, 1.0
        %v2168 = vadd.f32 %v1947, 1.0
        %v2169 = vadd.f32 %v1949, 1.0
        %v2170 = vadd.f32 %v1951, 1.0
        %v2171 = vadd.f32 %v1953, 1.0
        %v2172 = vadd.f32 %v1955, 1.0
        %v2173 = vadd.f32 %v1957, 1.0
        %v2174 = vadd.f32 %v1959, 1.0
        %v2175 = vadd.f32 %v1961, 1.0
        %v2176 = vadd.f32 %v1963, 1.0
        %v2177 = vadd.f32 %v1965, 1.0
        %v2178 = vadd.f32 %v1967, 1.0
        %v2179 = vadd.f32 %v1969, 1.0
        %v2180 = vadd.f32 %v1971, 1.0
        %v2181 = vadd.f32 %v1973, 1.0
        %v2182 = vadd.f32 %v1975, 1.0
        %v2183 = vadd.f32 %v1977, 1.0
        %v2184 = vadd.f32 %v1979, 1.0
        %v2185 = vadd.f32 %v1981, 1.0
        %v2186 = vadd.f32 %v1983, 1.0
        %v2187 = vadd.f32 %v1985, 1.0
        %v2188 = vadd.f32 %v1987, 1.0
        %v2189 = vadd.f32 %v1989, 1.0
        %v2190 = vadd.f32 %v1991, 1.0
        %v2191 = vadd.f32 %v1993, 1.0
        %v2192 = vadd.f32 %v1995, 1.0
        %v2193 = vadd.f32 %v1997, 1.0
        %v2194 = vadd.f32 %v1999, 1.0
        %v2195 = vadd.f32 %v2001, 1.0
        %v2196 = vadd.f32 %v2003, 1.0
        %v2197 = vadd.f32 %v2005, 1.0
        %v2198 = vadd.f32 %v2007, 1.0
        %v2199 = vadd.f32 %v2009, 1.0
        %v2200 = vadd.f32 %v2011, 1.0
        %v2201 = vadd.f32 %v2013, 1.0
        %v2202 = vadd.f32 %v2015, 1.0
        %v2203 = vadd.f32 %v2017, 1.0
        %v2204 = vadd.f32 %v2019, 1.0
        %v2205 = vadd.f32 %v2021, 1.0
        %v2206 = vadd.f32 %v2023, 1.0
        %v2207 = vadd.f32 %v2025, 1.0
        %v2208 = vadd.f32 %v2027, 1.0
        %v2209 = vadd.f32 %v2029, 1.0
        %v2210 = vadd.f32 %v2031, 1.0
        %v2211 = vadd.f32 %v2033, 1.0
        %v2212 = vadd.f32 %v2035, 1.0
        %v2213 = vadd.f32 %v2037, 1.0
        %v2214 = vadd.f32 %v2039, 1.0
        %v2215 = vadd.f32 %v2041, 1.0
        %v2216 = vadd.f32 %v2043, 1.0
        %v2217 = vadd.f32 %v2045, 1.0
        %v2218 = vadd.f32 %v2047, 1.0
        %v2219 = vadd.f32 %v2049, 1.0
        %v2220 = vadd.f32 %v2051, 1.0
        %v2221 = vadd.f32 %v2053, 1.0
        %v2222 = vadd.f32 %v2055, 1.0
        %v2223 = vadd.f32 %v2057, 1.0
        %v2224 = vadd.f32 %v2059, 1.0
        %v2225 = vadd.f32 %v2061, 1.0
        %v2226 = vadd.f32 %v2063, 1.0
        %v2227 = vadd.f32 %v2065, 1.0
        %v2228 = vadd.f32 %v2067, 1.0
        %v2229 = vadd.f32 %v2069, 1.0
        %v2230 = vadd.f32 %v2071, 1.0
        %v2231 = vadd.f32 %v2073, 1.0
        %v2232 = vadd.f32 %v2075, 1.0
        %v2233 = vadd.f32 %v2077, 1.0
        %v2234 = vadd.f32 %v2079, 1.0
        %v2235 = vadd.f32 %v2081, 1.0
        %v2236 = vadd.f32 %v2083, 1.0
        %v2237 = vadd.f32 %v2085, 1.0
        %v2238 = vadd.f32 %v2087, 1.0
        %v2239 = vadd.f32 %v2089, 1.0
        %v2240 = vadd.f32 %v2091, 1.0
        %v2241 = vadd.f32 %v2093, 1.0
        %v2242 = vadd.f32 %v2095, 1.0
        %v2243 = vadd.f32 %v2097, 1.0
        %v2244 = vadd.f32 %v2099, 1.0
        %v2245 = vadd.f32 %v2101, 1.0
        %v2246 = vadd.f32 %v2103, 1.0
        %v2247 = vadd.f32 %v2105, 1.0
        %v2248 = vadd.f32 %v2107, 1.0
        %v2249 = vadd.f32 %v2109, 1.0
        %v2250 = vadd.f32 %v2111, 1.0
        %v2251 = vadd.f32 %v2113, 1.0
        %v2252 = vadd.f32 %v2115, 1.0
        %v2253 = vadd.f32 %v2117, 1.0
        %v2254 = vadd.f32 %v2119, 1.0
        %v2255 = vadd.f32 %v2121, 1.0
        %v2256 = vadd.f32 %v2123, 1.0
        %v2257 = vadd.f32 %v2125, 1.0
        %v2258 = vadd.f32 %v2127, 1.0
        %v2259 = vadd.f32 %v2129, 1.0
        %v2260 = vadd.f32 %v2131, 1.0
        %v2261 = vadd.f32 %v2133, 1.0
        %v2262 = vlog2.pop %v2134
        %v2263 = vmul.f32 %v2262, 0.6931472
        %v2264 = vlog2.pop %v2135
        %v2265 = vmul.f32 %v2264, 0.6931472
        %v2266 = vlog2.pop %v2136
        %v2267 = vmul.f32 %v2266, 0.6931472
        %v2268 = vlog2.pop %v2137
        %v2269 = vmul.f32 %v2268, 0.6931472
        %v2270 = vlog2.pop %v2138
        %v2271 = vmul.f32 %v2270, 0.6931472
        %v2272 = vlog2.pop %v2139
        %v2273 = vmul.f32 %v2272, 0.6931472
        %v2274 = vlog2.pop %v2140
        %v2275 = vmul.f32 %v2274, 0.6931472
        %v2276 = vlog2.pop %v2141
        %v2277 = vmul.f32 %v2276, 0.6931472
        %v2278 = vlog2.pop %v2142
        %v2279 = vmul.f32 %v2278, 0.6931472
        %v2280 = vlog2.pop %v2143
        %v2281 = vmul.f32 %v2280, 0.6931472
        %v2282 = vlog2.pop %v2144
        %v2283 = vmul.f32 %v2282, 0.6931472
        %v2284 = vlog2.pop %v2145
        %v2285 = vmul.f32 %v2284, 0.6931472
        %v2286 = vlog2.pop %v2146
        %v2287 = vmul.f32 %v2286, 0.6931472
        %v2288 = vlog2.pop %v2147
        %v2289 = vmul.f32 %v2288, 0.6931472
        %v2290 = vlog2.pop %v2148
        %v2291 = vmul.f32 %v2290, 0.6931472
        %v2292 = vlog2.pop %v2149
        %v2293 = vmul.f32 %v2292, 0.6931472
        %v2294 = vlog2.pop %v2150
        %v2295 = vmul.f32 %v2294, 0.6931472
        %v2296 = vlog2.pop %v2151
        %v2297 = vmul.f32 %v2296, 0.6931472
        %v2298 = vlog2.pop %v2152
        %v2299 = vmul.f32 %v2298, 0.6931472
        %v2300 = vlog2.pop %v2153
        %v2301 = vmul.f32 %v2300, 0.6931472
        %v2302 = vlog2.pop %v2154
        %v2303 = vmul.f32 %v2302, 0.6931472
        %v2304 = vlog2.pop %v2155
        %v2305 = vmul.f32 %v2304, 0.6931472
        %v2306 = vlog2.pop %v2156
        %v2307 = vmul.f32 %v2306, 0.6931472
        %v2308 = vlog2.pop %v2157
        %v2309 = vmul.f32 %v2308, 0.6931472
        %v2310 = vlog2.pop %v2158
        %v2311 = vmul.f32 %v2310, 0.6931472
        %v2312 = vlog2.pop %v2159
        %v2313 = vmul.f32 %v2312, 0.6931472
        %v2314 = vlog2.pop %v2160
        %v2315 = vmul.f32 %v2314, 0.6931472
        %v2316 = vlog2.pop %v2161
        %v2317 = vmul.f32 %v2316, 0.6931472
        %v2318 = vlog2.pop %v2162
        %v2319 = vmul.f32 %v2318, 0.6931472
        %v2320 = vlog2.pop %v2163
        %v2321 = vmul.f32 %v2320, 0.6931472
        %v2322 = vlog2.pop %v2164
        %v2323 = vmul.f32 %v2322, 0.6931472
        %v2324 = vlog2.pop %v2165
        %v2325 = vmul.f32 %v2324, 0.6931472
        %v2326 = vlog2.pop %v2166
        %v2327 = vmul.f32 %v2326, 0.6931472
        %v2328 = vlog2.pop %v2167
        %v2329 = vmul.f32 %v2328, 0.6931472
        %v2330 = vlog2.pop %v2168
        %v2331 = vmul.f32 %v2330, 0.6931472
        %v2332 = vlog2.pop %v2169
        %v2333 = vmul.f32 %v2332, 0.6931472
        %v2334 = vlog2.pop %v2170
        %v2335 = vmul.f32 %v2334, 0.6931472
        %v2336 = vlog2.pop %v2171
        %v2337 = vmul.f32 %v2336, 0.6931472
        %v2338 = vlog2.pop %v2172
        %v2339 = vmul.f32 %v2338, 0.6931472
        %v2340 = vlog2.pop %v2173
        %v2341 = vmul.f32 %v2340, 0.6931472
        %v2342 = vlog2.pop %v2174
        %v2343 = vmul.f32 %v2342, 0.6931472
        %v2344 = vlog2.pop %v2175
        %v2345 = vmul.f32 %v2344, 0.6931472
        %v2346 = vlog2.pop %v2176
        %v2347 = vmul.f32 %v2346, 0.6931472
        %v2348 = vlog2.pop %v2177
        %v2349 = vmul.f32 %v2348, 0.6931472
        %v2350 = vlog2.pop %v2178
        %v2351 = vmul.f32 %v2350, 0.6931472
        %v2352 = vlog2.pop %v2179
        %v2353 = vmul.f32 %v2352, 0.6931472
        %v2354 = vlog2.pop %v2180
        %v2355 = vmul.f32 %v2354, 0.6931472
        %v2356 = vlog2.pop %v2181
        %v2357 = vmul.f32 %v2356, 0.6931472
        %v2358 = vlog2.pop %v2182
        %v2359 = vmul.f32 %v2358, 0.6931472
        %v2360 = vlog2.pop %v2183
        %v2361 = vmul.f32 %v2360, 0.6931472
        %v2362 = vlog2.pop %v2184
        %v2363 = vmul.f32 %v2362, 0.6931472
        %v2364 = vlog2.pop %v2185
        %v2365 = vmul.f32 %v2364, 0.6931472
        %v2366 = vlog2.pop %v2186
        %v2367 = vmul.f32 %v2366, 0.6931472
        %v2368 = vlog2.pop %v2187
        %v2369 = vmul.f32 %v2368, 0.6931472
        %v2370 = vlog2.pop %v2188
        %v2371 = vmul.f32 %v2370, 0.6931472
        %v2372 = vlog2.pop %v2189
        %v2373 = vmul.f32 %v2372, 0.6931472
        %v2374 = vlog2.pop %v2190
        %v2375 = vmul.f32 %v2374, 0.6931472
        %v2376 = vlog2.pop %v2191
        %v2377 = vmul.f32 %v2376, 0.6931472
        %v2378 = vlog2.pop %v2192
        %v2379 = vmul.f32 %v2378, 0.6931472
        %v2380 = vlog2.pop %v2193
        %v2381 = vmul.f32 %v2380, 0.6931472
        %v2382 = vlog2.pop %v2194
        %v2383 = vmul.f32 %v2382, 0.6931472
        %v2384 = vlog2.pop %v2195
        %v2385 = vmul.f32 %v2384, 0.6931472
        %v2386 = vlog2.pop %v2196
        %v2387 = vmul.f32 %v2386, 0.6931472
        %v2388 = vlog2.pop %v2197
        %v2389 = vmul.f32 %v2388, 0.6931472
        %v2390 = vlog2.pop %v2198
        %v2391 = vmul.f32 %v2390, 0.6931472
        %v2392 = vlog2.pop %v2199
        %v2393 = vmul.f32 %v2392, 0.6931472
        %v2394 = vlog2.pop %v2200
        %v2395 = vmul.f32 %v2394, 0.6931472
        %v2396 = vlog2.pop %v2201
        %v2397 = vmul.f32 %v2396, 0.6931472
        %v2398 = vlog2.pop %v2202
        %v2399 = vmul.f32 %v2398, 0.6931472
        %v2400 = vlog2.pop %v2203
        %v2401 = vmul.f32 %v2400, 0.6931472
        %v2402 = vlog2.pop %v2204
        %v2403 = vmul.f32 %v2402, 0.6931472
        %v2404 = vlog2.pop %v2205
        %v2405 = vmul.f32 %v2404, 0.6931472
        %v2406 = vlog2.pop %v2206
        %v2407 = vmul.f32 %v2406, 0.6931472
        %v2408 = vlog2.pop %v2207
        %v2409 = vmul.f32 %v2408, 0.6931472
        %v2410 = vlog2.pop %v2208
        %v2411 = vmul.f32 %v2410, 0.6931472
        %v2412 = vlog2.pop %v2209
        %v2413 = vmul.f32 %v2412, 0.6931472
        %v2414 = vlog2.pop %v2210
        %v2415 = vmul.f32 %v2414, 0.6931472
        %v2416 = vlog2.pop %v2211
        %v2417 = vmul.f32 %v2416, 0.6931472
        %v2418 = vlog2.pop %v2212
        %v2419 = vmul.f32 %v2418, 0.6931472
        %v2420 = vlog2.pop %v2213
        %v2421 = vmul.f32 %v2420, 0.6931472
        %v2422 = vlog2.pop %v2214
        %v2423 = vmul.f32 %v2422, 0.6931472
        %v2424 = vlog2.pop %v2215
        %v2425 = vmul.f32 %v2424, 0.6931472
        %v2426 = vlog2.pop %v2216
        %v2427 = vmul.f32 %v2426, 0.6931472
        %v2428 = vlog2.pop %v2217
        %v2429 = vmul.f32 %v2428, 0.6931472
        %v2430 = vlog2.pop %v2218
        %v2431 = vmul.f32 %v2430, 0.6931472
        %v2432 = vlog2.pop %v2219
        %v2433 = vmul.f32 %v2432, 0.6931472
        %v2434 = vlog2.pop %v2220
        %v2435 = vmul.f32 %v2434, 0.6931472
        %v2436 = vlog2.pop %v2221
        %v2437 = vmul.f32 %v2436, 0.6931472
        %v2438 = vlog2.pop %v2222
        %v2439 = vmul.f32 %v2438, 0.6931472
        %v2440 = vlog2.pop %v2223
        %v2441 = vmul.f32 %v2440, 0.6931472
        %v2442 = vlog2.pop %v2224
        %v2443 = vmul.f32 %v2442, 0.6931472
        %v2444 = vlog2.pop %v2225
        %v2445 = vmul.f32 %v2444, 0.6931472
        %v2446 = vlog2.pop %v2226
        %v2447 = vmul.f32 %v2446, 0.6931472
        %v2448 = vlog2.pop %v2227
        %v2449 = vmul.f32 %v2448, 0.6931472
        %v2450 = vlog2.pop %v2228
        %v2451 = vmul.f32 %v2450, 0.6931472
        %v2452 = vlog2.pop %v2229
        %v2453 = vmul.f32 %v2452, 0.6931472
        %v2454 = vlog2.pop %v2230
        %v2455 = vmul.f32 %v2454, 0.6931472
        %v2456 = vlog2.pop %v2231
        %v2457 = vmul.f32 %v2456, 0.6931472
        %v2458 = vlog2.pop %v2232
        %v2459 = vmul.f32 %v2458, 0.6931472
        %v2460 = vlog2.pop %v2233
        %v2461 = vmul.f32 %v2460, 0.6931472
        %v2462 = vlog2.pop %v2234
        %v2463 = vmul.f32 %v2462, 0.6931472
        %v2464 = vlog2.pop %v2235
        %v2465 = vmul.f32 %v2464, 0.6931472
        %v2466 = vlog2.pop %v2236
        %v2467 = vmul.f32 %v2466, 0.6931472
        %v2468 = vlog2.pop %v2237
        %v2469 = vmul.f32 %v2468, 0.6931472
        %v2470 = vlog2.pop %v2238
        %v2471 = vmul.f32 %v2470, 0.6931472
        %v2472 = vlog2.pop %v2239
        %v2473 = vmul.f32 %v2472, 0.6931472
        %v2474 = vlog2.pop %v2240
        %v2475 = vmul.f32 %v2474, 0.6931472
        %v2476 = vlog2.pop %v2241
        %v2477 = vmul.f32 %v2476, 0.6931472
        %v2478 = vlog2.pop %v2242
        %v2479 = vmul.f32 %v2478, 0.6931472
        %v2480 = vlog2.pop %v2243
        %v2481 = vmul.f32 %v2480, 0.6931472
        %v2482 = vlog2.pop %v2244
        %v2483 = vmul.f32 %v2482, 0.6931472
        %v2484 = vlog2.pop %v2245
        %v2485 = vmul.f32 %v2484, 0.6931472
        %v2486 = vlog2.pop %v2246
        %v2487 = vmul.f32 %v2486, 0.6931472
        %v2488 = vlog2.pop %v2247
        %v2489 = vmul.f32 %v2488, 0.6931472
        %v2490 = vlog2.pop %v2248
        %v2491 = vmul.f32 %v2490, 0.6931472
        %v2492 = vlog2.pop %v2249
        %v2493 = vmul.f32 %v2492, 0.6931472
        %v2494 = vlog2.pop %v2250
        %v2495 = vmul.f32 %v2494, 0.6931472
        %v2496 = vlog2.pop %v2251
        %v2497 = vmul.f32 %v2496, 0.6931472
        %v2498 = vlog2.pop %v2252
        %v2499 = vmul.f32 %v2498, 0.6931472
        %v2500 = vlog2.pop %v2253
        %v2501 = vmul.f32 %v2500, 0.6931472
        %v2502 = vlog2.pop %v2254
        %v2503 = vmul.f32 %v2502, 0.6931472
        %v2504 = vlog2.pop %v2255
        %v2505 = vmul.f32 %v2504, 0.6931472
        %v2506 = vlog2.pop %v2256
        %v2507 = vmul.f32 %v2506, 0.6931472
        %v2508 = vlog2.pop %v2257
        %v2509 = vmul.f32 %v2508, 0.6931472
        %v2510 = vlog2.pop %v2258
        %v2511 = vmul.f32 %v2510, 0.6931472
        %v2512 = vlog2.pop %v2259
        %v2513 = vmul.f32 %v2512, 0.6931472
        %v2514 = vlog2.pop %v2260
        %v2515 = vmul.f32 %v2514, 0.6931472
        %v2516 = vlog2.pop %v2261
        %v2517 = vmul.f32 %v2516, 0.6931472
        %v2518 = vadd.f32 %v2263, %v1622
        %v2519 = vadd.f32 %v2265, %v1623
        %v2520 = vadd.f32 %v2267, %v1624
        %v2521 = vadd.f32 %v2269, %v1625
        %v2522 = vadd.f32 %v2271, %v1626
        %v2523 = vadd.f32 %v2273, %v1627
        %v2524 = vadd.f32 %v2275, %v1628
        %v2525 = vadd.f32 %v2277, %v1629
        %v2526 = vadd.f32 %v2279, %v1630
        %v2527 = vadd.f32 %v2281, %v1631
        %v2528 = vadd.f32 %v2283, %v1632
        %v2529 = vadd.f32 %v2285, %v1633
        %v2530 = vadd.f32 %v2287, %v1634
        %v2531 = vadd.f32 %v2289, %v1635
        %v2532 = vadd.f32 %v2291, %v1636
        %v2533 = vadd.f32 %v2293, %v1637
        %v2534 = vadd.f32 %v2295, %v1638
        %v2535 = vadd.f32 %v2297, %v1639
        %v2536 = vadd.f32 %v2299, %v1640
        %v2537 = vadd.f32 %v2301, %v1641
        %v2538 = vadd.f32 %v2303, %v1642
        %v2539 = vadd.f32 %v2305, %v1643
        %v2540 = vadd.f32 %v2307, %v1644
        %v2541 = vadd.f32 %v2309, %v1645
        %v2542 = vadd.f32 %v2311, %v1646
        %v2543 = vadd.f32 %v2313, %v1647
        %v2544 = vadd.f32 %v2315, %v1648
        %v2545 = vadd.f32 %v2317, %v1649
        %v2546 = vadd.f32 %v2319, %v1650
        %v2547 = vadd.f32 %v2321, %v1651
        %v2548 = vadd.f32 %v2323, %v1652
        %v2549 = vadd.f32 %v2325, %v1653
        %v2550 = vadd.f32 %v2327, %v1654
        %v2551 = vadd.f32 %v2329, %v1655
        %v2552 = vadd.f32 %v2331, %v1656
        %v2553 = vadd.f32 %v2333, %v1657
        %v2554 = vadd.f32 %v2335, %v1658
        %v2555 = vadd.f32 %v2337, %v1659
        %v2556 = vadd.f32 %v2339, %v1660
        %v2557 = vadd.f32 %v2341, %v1661
        %v2558 = vadd.f32 %v2343, %v1662
        %v2559 = vadd.f32 %v2345, %v1663
        %v2560 = vadd.f32 %v2347, %v1664
        %v2561 = vadd.f32 %v2349, %v1665
        %v2562 = vadd.f32 %v2351, %v1666
        %v2563 = vadd.f32 %v2353, %v1667
        %v2564 = vadd.f32 %v2355, %v1668
        %v2565 = vadd.f32 %v2357, %v1669
        %v2566 = vadd.f32 %v2359, %v1670
        %v2567 = vadd.f32 %v2361, %v1671
        %v2568 = vadd.f32 %v2363, %v1672
        %v2569 = vadd.f32 %v2365, %v1673
        %v2570 = vadd.f32 %v2367, %v1674
        %v2571 = vadd.f32 %v2369, %v1675
        %v2572 = vadd.f32 %v2371, %v1676
        %v2573 = vadd.f32 %v2373, %v1677
        %v2574 = vadd.f32 %v2375, %v1678
        %v2575 = vadd.f32 %v2377, %v1679
        %v2576 = vadd.f32 %v2379, %v1680
        %v2577 = vadd.f32 %v2381, %v1681
        %v2578 = vadd.f32 %v2383, %v1682
        %v2579 = vadd.f32 %v2385, %v1683
        %v2580 = vadd.f32 %v2387, %v1684
        %v2581 = vadd.f32 %v2389, %v1685
        %v2582 = vadd.f32 %v2391, %v1686
        %v2583 = vadd.f32 %v2393, %v1687
        %v2584 = vadd.f32 %v2395, %v1688
        %v2585 = vadd.f32 %v2397, %v1689
        %v2586 = vadd.f32 %v2399, %v1690
        %v2587 = vadd.f32 %v2401, %v1691
        %v2588 = vadd.f32 %v2403, %v1692
        %v2589 = vadd.f32 %v2405, %v1693
        %v2590 = vadd.f32 %v2407, %v1694
        %v2591 = vadd.f32 %v2409, %v1695
        %v2592 = vadd.f32 %v2411, %v1696
        %v2593 = vadd.f32 %v2413, %v1697
        %v2594 = vadd.f32 %v2415, %v1698
        %v2595 = vadd.f32 %v2417, %v1699
        %v2596 = vadd.f32 %v2419, %v1700
        %v2597 = vadd.f32 %v2421, %v1701
        %v2598 = vadd.f32 %v2423, %v1702
        %v2599 = vadd.f32 %v2425, %v1703
        %v2600 = vadd.f32 %v2427, %v1704
        %v2601 = vadd.f32 %v2429, %v1705
        %v2602 = vadd.f32 %v2431, %v1706
        %v2603 = vadd.f32 %v2433, %v1707
        %v2604 = vadd.f32 %v2435, %v1708
        %v2605 = vadd.f32 %v2437, %v1709
        %v2606 = vadd.f32 %v2439, %v1710
        %v2607 = vadd.f32 %v2441, %v1711
        %v2608 = vadd.f32 %v2443, %v1712
        %v2609 = vadd.f32 %v2445, %v1713
        %v2610 = vadd.f32 %v2447, %v1714
        %v2611 = vadd.f32 %v2449, %v1715
        %v2612 = vadd.f32 %v2451, %v1716
        %v2613 = vadd.f32 %v2453, %v1717
        %v2614 = vadd.f32 %v2455, %v1718
        %v2615 = vadd.f32 %v2457, %v1719
        %v2616 = vadd.f32 %v2459, %v1720
        %v2617 = vadd.f32 %v2461, %v1721
        %v2618 = vadd.f32 %v2463, %v1722
        %v2619 = vadd.f32 %v2465, %v1723
        %v2620 = vadd.f32 %v2467, %v1724
        %v2621 = vadd.f32 %v2469, %v1725
        %v2622 = vadd.f32 %v2471, %v1726
        %v2623 = vadd.f32 %v2473, %v1727
        %v2624 = vadd.f32 %v2475, %v1728
        %v2625 = vadd.f32 %v2477, %v1729
        %v2626 = vadd.f32 %v2479, %v1730
        %v2627 = vadd.f32 %v2481, %v1731
        %v2628 = vadd.f32 %v2483, %v1732
        %v2629 = vadd.f32 %v2485, %v1733
        %v2630 = vadd.f32 %v2487, %v1734
        %v2631 = vadd.f32 %v2489, %v1735
        %v2632 = vadd.f32 %v2491, %v1736
        %v2633 = vadd.f32 %v2493, %v1737
        %v2634 = vadd.f32 %v2495, %v1738
        %v2635 = vadd.f32 %v2497, %v1739
        %v2636 = vadd.f32 %v2499, %v1740
        %v2637 = vadd.f32 %v2501, %v1741
        %v2638 = vadd.f32 %v2503, %v1742
        %v2639 = vadd.f32 %v2505, %v1743
        %v2640 = vadd.f32 %v2507, %v1744
        %v2641 = vadd.f32 %v2509, %v1745
        %v2642 = vadd.f32 %v2511, %v1746
        %v2643 = vadd.f32 %v2513, %v1747
        %v2644 = vadd.f32 %v2515, %v1748
        %v2645 = vadd.f32 %v2517, %v1749
        %v2646 = vrcp.pop %v982
        %v2647 = vrcp.pop %v983
        %v2648 = vrcp.pop %v984
        %v2649 = vrcp.pop %v985
        %v2650 = vrcp.pop %v986
        %v2651 = vrcp.pop %v987
        %v2652 = vrcp.pop %v988
        %v2653 = vrcp.pop %v989
        %v2654 = vrcp.pop %v990
        %v2655 = vrcp.pop %v991
        %v2656 = vrcp.pop %v992
        %v2657 = vrcp.pop %v993
        %v2658 = vrcp.pop %v994
        %v2659 = vrcp.pop %v995
        %v2660 = vrcp.pop %v996
        %v2661 = vrcp.pop %v997
        %v2662 = vrcp.pop %v998
        %v2663 = vrcp.pop %v999
        %v2664 = vrcp.pop %v1000
        %v2665 = vrcp.pop %v1001
        %v2666 = vrcp.pop %v1002
        %v2667 = vrcp.pop %v1003
        %v2668 = vrcp.pop %v1004
        %v2669 = vrcp.pop %v1005
        %v2670 = vrcp.pop %v1006
        %v2671 = vrcp.pop %v1007
        %v2672 = vrcp.pop %v1008
        %v2673 = vrcp.pop %v1009
        %v2674 = vrcp.pop %v1010
        %v2675 = vrcp.pop %v1011
        %v2676 = vrcp.pop %v1012
        %v2677 = vrcp.pop %v1013
        %v2678 = vrcp.pop %v1014
        %v2679 = vrcp.pop %v1015
        %v2680 = vrcp.pop %v1016
        %v2681 = vrcp.pop %v1017
        %v2682 = vrcp.pop %v1018
        %v2683 = vrcp.pop %v1019
        %v2684 = vrcp.pop %v1020
        %v2685 = vrcp.pop %v1021
        %v2686 = vrcp.pop %v1022
        %v2687 = vrcp.pop %v1023
        %v2688 = vrcp.pop %v1024
        %v2689 = vrcp.pop %v1025
        %v2690 = vrcp.pop %v1026
        %v2691 = vrcp.pop %v1027
        %v2692 = vrcp.pop %v1028
        %v2693 = vrcp.pop %v1029
        %v2694 = vrcp.pop %v1030
        %v2695 = vrcp.pop %v1031
        %v2696 = vrcp.pop %v1032
        %v2697 = vrcp.pop %v1033
        %v2698 = vrcp.pop %v1034
        %v2699 = vrcp.pop %v1035
        %v2700 = vrcp.pop %v1036
        %v2701 = vrcp.pop %v1037
        %v2702 = vrcp.pop %v1038
        %v2703 = vrcp.pop %v1039
        %v2704 = vrcp.pop %v1040
        %v2705 = vrcp.pop %v1041
        %v2706 = vrcp.pop %v1042
        %v2707 = vrcp.pop %v1043
        %v2708 = vrcp.pop %v1044
        %v2709 = vrcp.pop %v1045
        %v2710 = vrcp.pop %v1046
        %v2711 = vrcp.pop %v1047
        %v2712 = vrcp.pop %v1048
        %v2713 = vrcp.pop %v1049
        %v2714 = vrcp.pop %v1050
        %v2715 = vrcp.pop %v1051
        %v2716 = vrcp.pop %v1052
        %v2717 = vrcp.pop %v1053
        %v2718 = vrcp.pop %v1054
        %v2719 = vrcp.pop %v1055
        %v2720 = vrcp.pop %v1056
        %v2721 = vrcp.pop %v1057
        %v2722 = vrcp.pop %v1058
        %v2723 = vrcp.pop %v1059
        %v2724 = vrcp.pop %v1060
        %v2725 = vrcp.pop %v1061
        %v2726 = vrcp.pop %v1062
        %v2727 = vrcp.pop %v1063
        %v2728 = vrcp.pop %v1064
        %v2729 = vrcp.pop %v1065
        %v2730 = vrcp.pop %v1066
        %v2731 = vrcp.pop %v1067
        %v2732 = vrcp.pop %v1068
        %v2733 = vrcp.pop %v1069
        %v2734 = vrcp.pop %v1070
        %v2735 = vrcp.pop %v1071
        %v2736 = vrcp.pop %v1072
        %v2737 = vrcp.pop %v1073
        %v2738 = vrcp.pop %v1074
        %v2739 = vrcp.pop %v1075
        %v2740 = vrcp.pop %v1076
        %v2741 = vrcp.pop %v1077
        %v2742 = vrcp.pop %v1078
        %v2743 = vrcp.pop %v1079
        %v2744 = vrcp.pop %v1080
        %v2745 = vrcp.pop %v1081
        %v2746 = vrcp.pop %v1082
        %v2747 = vrcp.pop %v1083
        %v2748 = vrcp.pop %v1084
        %v2749 = vrcp.pop %v1085
        %v2750 = vrcp.pop %v1086
        %v2751 = vrcp.pop %v1087
        %v2752 = vrcp.pop %v1088
        %v2753 = vrcp.pop %v1089
        %v2754 = vrcp.pop %v1090
        %v2755 = vrcp.pop %v1091
        %v2756 = vrcp.pop %v1092
        %v2757 = vrcp.pop %v1093
        %v2758 = vrcp.pop %v1094
        %v2759 = vrcp.pop %v1095
        %v2760 = vrcp.pop %v1096
        %v2761 = vrcp.pop %v1097
        %v2762 = vrcp.pop %v1098
        %v2763 = vrcp.pop %v1099
        %v2764 = vrcp.pop %v1100
        %v2765 = vrcp.pop %v1101
        %v2766 = vrcp.pop %v1102
        %v2767 = vrcp.pop %v1103
        %v2768 = vrcp.pop %v1104
        %v2769 = vrcp.pop %v1105
        %v2770 = vrcp.pop %v1106
        %v2771 = vrcp.pop %v1107
        %v2772 = vrcp.pop %v1108
        %v2773 = vrcp.pop %v1109
        %v2774 = vmul.f32 %v2646, %v854
        %v2775 = vmul.f32 %v2647, %v855
        %v2776 = vmul.f32 %v2648, %v856
        %v2777 = vmul.f32 %v2649, %v857
        %v2778 = vmul.f32 %v2650, %v858
        %v2779 = vmul.f32 %v2651, %v859
        %v2780 = vmul.f32 %v2652, %v860
        %v2781 = vmul.f32 %v2653, %v861
        %v2782 = vmul.f32 %v2654, %v862
        %v2783 = vmul.f32 %v2655, %v863
        %v2784 = vmul.f32 %v2656, %v864
        %v2785 = vmul.f32 %v2657, %v865
        %v2786 = vmul.f32 %v2658, %v866
        %v2787 = vmul.f32 %v2659, %v867
        %v2788 = vmul.f32 %v2660, %v868
        %v2789 = vmul.f32 %v2661, %v869
        %v2790 = vmul.f32 %v2662, %v870
        %v2791 = vmul.f32 %v2663, %v871
        %v2792 = vmul.f32 %v2664, %v872
        %v2793 = vmul.f32 %v2665, %v873
        %v2794 = vmul.f32 %v2666, %v874
        %v2795 = vmul.f32 %v2667, %v875
        %v2796 = vmul.f32 %v2668, %v876
        %v2797 = vmul.f32 %v2669, %v877
        %v2798 = vmul.f32 %v2670, %v878
        %v2799 = vmul.f32 %v2671, %v879
        %v2800 = vmul.f32 %v2672, %v880
        %v2801 = vmul.f32 %v2673, %v881
        %v2802 = vmul.f32 %v2674, %v882
        %v2803 = vmul.f32 %v2675, %v883
        %v2804 = vmul.f32 %v2676, %v884
        %v2805 = vmul.f32 %v2677, %v885
        %v2806 = vmul.f32 %v2678, %v886
        %v2807 = vmul.f32 %v2679, %v887
        %v2808 = vmul.f32 %v2680, %v888
        %v2809 = vmul.f32 %v2681, %v889
        %v2810 = vmul.f32 %v2682, %v890
        %v2811 = vmul.f32 %v2683, %v891
        %v2812 = vmul.f32 %v2684, %v892
        %v2813 = vmul.f32 %v2685, %v893
        %v2814 = vmul.f32 %v2686, %v894
        %v2815 = vmul.f32 %v2687, %v895
        %v2816 = vmul.f32 %v2688, %v896
        %v2817 = vmul.f32 %v2689, %v897
        %v2818 = vmul.f32 %v2690, %v898
        %v2819 = vmul.f32 %v2691, %v899
        %v2820 = vmul.f32 %v2692, %v900
        %v2821 = vmul.f32 %v2693, %v901
        %v2822 = vmul.f32 %v2694, %v902
        %v2823 = vmul.f32 %v2695, %v903
        %v2824 = vmul.f32 %v2696, %v904
        %v2825 = vmul.f32 %v2697, %v905
        %v2826 = vmul.f32 %v2698, %v906
        %v2827 = vmul.f32 %v2699, %v907
        %v2828 = vmul.f32 %v2700, %v908
        %v2829 = vmul.f32 %v2701, %v909
        %v2830 = vmul.f32 %v2702, %v910
        %v2831 = vmul.f32 %v2703, %v911
        %v2832 = vmul.f32 %v2704, %v912
        %v2833 = vmul.f32 %v2705, %v913
        %v2834 = vmul.f32 %v2706, %v914
        %v2835 = vmul.f32 %v2707, %v915
        %v2836 = vmul.f32 %v2708, %v916
        %v2837 = vmul.f32 %v2709, %v917
        %v2838 = vmul.f32 %v2710, %v918
        %v2839 = vmul.f32 %v2711, %v919
        %v2840 = vmul.f32 %v2712, %v920
        %v2841 = vmul.f32 %v2713, %v921
        %v2842 = vmul.f32 %v2714, %v922
        %v2843 = vmul.f32 %v2715, %v923
        %v2844 = vmul.f32 %v2716, %v924
        %v2845 = vmul.f32 %v2717, %v925
        %v2846 = vmul.f32 %v2718, %v926
        %v2847 = vmul.f32 %v2719, %v927
        %v2848 = vmul.f32 %v2720, %v928
        %v2849 = vmul.f32 %v2721, %v929
        %v2850 = vmul.f32 %v2722, %v930
        %v2851 = vmul.f32 %v2723, %v931
        %v2852 = vmul.f32 %v2724, %v932
        %v2853 = vmul.f32 %v2725, %v933
        %v2854 = vmul.f32 %v2726, %v934
        %v2855 = vmul.f32 %v2727, %v935
        %v2856 = vmul.f32 %v2728, %v936
        %v2857 = vmul.f32 %v2729, %v937
        %v2858 = vmul.f32 %v2730, %v938
        %v2859 = vmul.f32 %v2731, %v939
        %v2860 = vmul.f32 %v2732, %v940
        %v2861 = vmul.f32 %v2733, %v941
        %v2862 = vmul.f32 %v2734, %v942
        %v2863 = vmul.f32 %v2735, %v943
        %v2864 = vmul.f32 %v2736, %v944
        %v2865 = vmul.f32 %v2737, %v945
        %v2866 = vmul.f32 %v2738, %v946
        %v2867 = vmul.f32 %v2739, %v947
        %v2868 = vmul.f32 %v2740, %v948
        %v2869 = vmul.f32 %v2741, %v949
        %v2870 = vmul.f32 %v2742, %v950
        %v2871 = vmul.f32 %v2743, %v951
        %v2872 = vmul.f32 %v2744, %v952
        %v2873 = vmul.f32 %v2745, %v953
        %v2874 = vmul.f32 %v2746, %v954
        %v2875 = vmul.f32 %v2747, %v955
        %v2876 = vmul.f32 %v2748, %v956
        %v2877 = vmul.f32 %v2749, %v957
        %v2878 = vmul.f32 %v2750, %v958
        %v2879 = vmul.f32 %v2751, %v959
        %v2880 = vmul.f32 %v2752, %v960
        %v2881 = vmul.f32 %v2753, %v961
        %v2882 = vmul.f32 %v2754, %v962
        %v2883 = vmul.f32 %v2755, %v963
        %v2884 = vmul.f32 %v2756, %v964
        %v2885 = vmul.f32 %v2757, %v965
        %v2886 = vmul.f32 %v2758, %v966
        %v2887 = vmul.f32 %v2759, %v967
        %v2888 = vmul.f32 %v2760, %v968
        %v2889 = vmul.f32 %v2761, %v969
        %v2890 = vmul.f32 %v2762, %v970
        %v2891 = vmul.f32 %v2763, %v971
        %v2892 = vmul.f32 %v2764, %v972
        %v2893 = vmul.f32 %v2765, %v973
        %v2894 = vmul.f32 %v2766, %v974
        %v2895 = vmul.f32 %v2767, %v975
        %v2896 = vmul.f32 %v2768, %v976
        %v2897 = vmul.f32 %v2769, %v977
        %v2898 = vmul.f32 %v2770, %v978
        %v2899 = vmul.f32 %v2771, %v979
        %v2900 = vmul.f32 %v2772, %v980
        %v2901 = vmul.f32 %v2773, %v981
        %v2902 = vmul.f32 %v2774, %v2518
        %v2903 = vmul.f32 %v2775, %v2519
        %v2904 = vmul.f32 %v2776, %v2520
        %v2905 = vmul.f32 %v2777, %v2521
        %v2906 = vmul.f32 %v2778, %v2522
        %v2907 = vmul.f32 %v2779, %v2523
        %v2908 = vmul.f32 %v2780, %v2524
        %v2909 = vmul.f32 %v2781, %v2525
        %v2910 = vmul.f32 %v2782, %v2526
        %v2911 = vmul.f32 %v2783, %v2527
        %v2912 = vmul.f32 %v2784, %v2528
        %v2913 = vmul.f32 %v2785, %v2529
        %v2914 = vmul.f32 %v2786, %v2530
        %v2915 = vmul.f32 %v2787, %v2531
        %v2916 = vmul.f32 %v2788, %v2532
        %v2917 = vmul.f32 %v2789, %v2533
        %v2918 = vmul.f32 %v2790, %v2534
        %v2919 = vmul.f32 %v2791, %v2535
        %v2920 = vmul.f32 %v2792, %v2536
        %v2921 = vmul.f32 %v2793, %v2537
        %v2922 = vmul.f32 %v2794, %v2538
        %v2923 = vmul.f32 %v2795, %v2539
        %v2924 = vmul.f32 %v2796, %v2540
        %v2925 = vmul.f32 %v2797, %v2541
        %v2926 = vmul.f32 %v2798, %v2542
        %v2927 = vmul.f32 %v2799, %v2543
        %v2928 = vmul.f32 %v2800, %v2544
        %v2929 = vmul.f32 %v2801, %v2545
        %v2930 = vmul.f32 %v2802, %v2546
        %v2931 = vmul.f32 %v2803, %v2547
        %v2932 = vmul.f32 %v2804, %v2548
        %v2933 = vmul.f32 %v2805, %v2549
        %v2934 = vmul.f32 %v2806, %v2550
        %v2935 = vmul.f32 %v2807, %v2551
        %v2936 = vmul.f32 %v2808, %v2552
        %v2937 = vmul.f32 %v2809, %v2553
        %v2938 = vmul.f32 %v2810, %v2554
        %v2939 = vmul.f32 %v2811, %v2555
        %v2940 = vmul.f32 %v2812, %v2556
        %v2941 = vmul.f32 %v2813, %v2557
        %v2942 = vmul.f32 %v2814, %v2558
        %v2943 = vmul.f32 %v2815, %v2559
        %v2944 = vmul.f32 %v2816, %v2560
        %v2945 = vmul.f32 %v2817, %v2561
        %v2946 = vmul.f32 %v2818, %v2562
        %v2947 = vmul.f32 %v2819, %v2563
        %v2948 = vmul.f32 %v2820, %v2564
        %v2949 = vmul.f32 %v2821, %v2565
        %v2950 = vmul.f32 %v2822, %v2566
        %v2951 = vmul.f32 %v2823, %v2567
        %v2952 = vmul.f32 %v2824, %v2568
        %v2953 = vmul.f32 %v2825, %v2569
        %v2954 = vmul.f32 %v2826, %v2570
        %v2955 = vmul.f32 %v2827, %v2571
        %v2956 = vmul.f32 %v2828, %v2572
        %v2957 = vmul.f32 %v2829, %v2573
        %v2958 = vmul.f32 %v2830, %v2574
        %v2959 = vmul.f32 %v2831, %v2575
        %v2960 = vmul.f32 %v2832, %v2576
        %v2961 = vmul.f32 %v2833, %v2577
        %v2962 = vmul.f32 %v2834, %v2578
        %v2963 = vmul.f32 %v2835, %v2579
        %v2964 = vmul.f32 %v2836, %v2580
        %v2965 = vmul.f32 %v2837, %v2581
        %v2966 = vmul.f32 %v2838, %v2582
        %v2967 = vmul.f32 %v2839, %v2583
        %v2968 = vmul.f32 %v2840, %v2584
        %v2969 = vmul.f32 %v2841, %v2585
        %v2970 = vmul.f32 %v2842, %v2586
        %v2971 = vmul.f32 %v2843, %v2587
        %v2972 = vmul.f32 %v2844, %v2588
        %v2973 = vmul.f32 %v2845, %v2589
        %v2974 = vmul.f32 %v2846, %v2590
        %v2975 = vmul.f32 %v2847, %v2591
        %v2976 = vmul.f32 %v2848, %v2592
        %v2977 = vmul.f32 %v2849, %v2593
        %v2978 = vmul.f32 %v2850, %v2594
        %v2979 = vmul.f32 %v2851, %v2595
        %v2980 = vmul.f32 %v2852, %v2596
        %v2981 = vmul.f32 %v2853, %v2597
        %v2982 = vmul.f32 %v2854, %v2598
        %v2983 = vmul.f32 %v2855, %v2599
        %v2984 = vmul.f32 %v2856, %v2600
        %v2985 = vmul.f32 %v2857, %v2601
        %v2986 = vmul.f32 %v2858, %v2602
        %v2987 = vmul.f32 %v2859, %v2603
        %v2988 = vmul.f32 %v2860, %v2604
        %v2989 = vmul.f32 %v2861, %v2605
        %v2990 = vmul.f32 %v2862, %v2606
        %v2991 = vmul.f32 %v2863, %v2607
        %v2992 = vmul.f32 %v2864, %v2608
        %v2993 = vmul.f32 %v2865, %v2609
        %v2994 = vmul.f32 %v2866, %v2610
        %v2995 = vmul.f32 %v2867, %v2611
        %v2996 = vmul.f32 %v2868, %v2612
        %v2997 = vmul.f32 %v2869, %v2613
        %v2998 = vmul.f32 %v2870, %v2614
        %v2999 = vmul.f32 %v2871, %v2615
        %v3000 = vmul.f32 %v2872, %v2616
        %v3001 = vmul.f32 %v2873, %v2617
        %v3002 = vmul.f32 %v2874, %v2618
        %v3003 = vmul.f32 %v2875, %v2619
        %v3004 = vmul.f32 %v2876, %v2620
        %v3005 = vmul.f32 %v2877, %v2621
        %v3006 = vmul.f32 %v2878, %v2622
        %v3007 = vmul.f32 %v2879, %v2623
        %v3008 = vmul.f32 %v2880, %v2624
        %v3009 = vmul.f32 %v2881, %v2625
        %v3010 = vmul.f32 %v2882, %v2626
        %v3011 = vmul.f32 %v2883, %v2627
        %v3012 = vmul.f32 %v2884, %v2628
        %v3013 = vmul.f32 %v2885, %v2629
        %v3014 = vmul.f32 %v2886, %v2630
        %v3015 = vmul.f32 %v2887, %v2631
        %v3016 = vmul.f32 %v2888, %v2632
        %v3017 = vmul.f32 %v2889, %v2633
        %v3018 = vmul.f32 %v2890, %v2634
        %v3019 = vmul.f32 %v2891, %v2635
        %v3020 = vmul.f32 %v2892, %v2636
        %v3021 = vmul.f32 %v2893, %v2637
        %v3022 = vmul.f32 %v2894, %v2638
        %v3023 = vmul.f32 %v2895, %v2639
        %v3024 = vmul.f32 %v2896, %v2640
        %v3025 = vmul.f32 %v2897, %v2641
        %v3026 = vmul.f32 %v2898, %v2642
        %v3027 = vmul.f32 %v2899, %v2643
        %v3028 = vmul.f32 %v2900, %v2644
        %v3029 = vmul.f32 %v2901, %v2645
        %v3030 = vsub.f32 %v726, %v2902
        %v3031 = vsub.f32 %v727, %v2903
        %v3032 = vsub.f32 %v728, %v2904
        %v3033 = vsub.f32 %v729, %v2905
        %v3034 = vsub.f32 %v730, %v2906
        %v3035 = vsub.f32 %v731, %v2907
        %v3036 = vsub.f32 %v732, %v2908
        %v3037 = vsub.f32 %v733, %v2909
        %v3038 = vsub.f32 %v734, %v2910
        %v3039 = vsub.f32 %v735, %v2911
        %v3040 = vsub.f32 %v736, %v2912
        %v3041 = vsub.f32 %v737, %v2913
        %v3042 = vsub.f32 %v738, %v2914
        %v3043 = vsub.f32 %v739, %v2915
        %v3044 = vsub.f32 %v740, %v2916
        %v3045 = vsub.f32 %v741, %v2917
        %v3046 = vsub.f32 %v742, %v2918
        %v3047 = vsub.f32 %v743, %v2919
        %v3048 = vsub.f32 %v744, %v2920
        %v3049 = vsub.f32 %v745, %v2921
        %v3050 = vsub.f32 %v746, %v2922
        %v3051 = vsub.f32 %v747, %v2923
        %v3052 = vsub.f32 %v748, %v2924
        %v3053 = vsub.f32 %v749, %v2925
        %v3054 = vsub.f32 %v750, %v2926
        %v3055 = vsub.f32 %v751, %v2927
        %v3056 = vsub.f32 %v752, %v2928
        %v3057 = vsub.f32 %v753, %v2929
        %v3058 = vsub.f32 %v754, %v2930
        %v3059 = vsub.f32 %v755, %v2931
        %v3060 = vsub.f32 %v756, %v2932
        %v3061 = vsub.f32 %v757, %v2933
        %v3062 = vsub.f32 %v758, %v2934
        %v3063 = vsub.f32 %v759, %v2935
        %v3064 = vsub.f32 %v760, %v2936
        %v3065 = vsub.f32 %v761, %v2937
        %v3066 = vsub.f32 %v762, %v2938
        %v3067 = vsub.f32 %v763, %v2939
        %v3068 = vsub.f32 %v764, %v2940
        %v3069 = vsub.f32 %v765, %v2941
        %v3070 = vsub.f32 %v766, %v2942
        %v3071 = vsub.f32 %v767, %v2943
        %v3072 = vsub.f32 %v768, %v2944
        %v3073 = vsub.f32 %v769, %v2945
        %v3074 = vsub.f32 %v770, %v2946
        %v3075 = vsub.f32 %v771, %v2947
        %v3076 = vsub.f32 %v772, %v2948
        %v3077 = vsub.f32 %v773, %v2949
        %v3078 = vsub.f32 %v774, %v2950
        %v3079 = vsub.f32 %v775, %v2951
        %v3080 = vsub.f32 %v776, %v2952
        %v3081 = vsub.f32 %v777, %v2953
        %v3082 = vsub.f32 %v778, %v2954
        %v3083 = vsub.f32 %v779, %v2955
        %v3084 = vsub.f32 %v780, %v2956
        %v3085 = vsub.f32 %v781, %v2957
        %v3086 = vsub.f32 %v782, %v2958
        %v3087 = vsub.f32 %v783, %v2959
        %v3088 = vsub.f32 %v784, %v2960
        %v3089 = vsub.f32 %v785, %v2961
        %v3090 = vsub.f32 %v786, %v2962
        %v3091 = vsub.f32 %v787, %v2963
        %v3092 = vsub.f32 %v788, %v2964
        %v3093 = vsub.f32 %v789, %v2965
        %v3094 = vsub.f32 %v790, %v2966
        %v3095 = vsub.f32 %v791, %v2967
        %v3096 = vsub.f32 %v792, %v2968
        %v3097 = vsub.f32 %v793, %v2969
        %v3098 = vsub.f32 %v794, %v2970
        %v3099 = vsub.f32 %v795, %v2971
        %v3100 = vsub.f32 %v796, %v2972
        %v3101 = vsub.f32 %v797, %v2973
        %v3102 = vsub.f32 %v798, %v2974
        %v3103 = vsub.f32 %v799, %v2975
        %v3104 = vsub.f32 %v800, %v2976
        %v3105 = vsub.f32 %v801, %v2977
        %v3106 = vsub.f32 %v802, %v2978
        %v3107 = vsub.f32 %v803, %v2979
        %v3108 = vsub.f32 %v804, %v2980
        %v3109 = vsub.f32 %v805, %v2981
        %v3110 = vsub.f32 %v806, %v2982
        %v3111 = vsub.f32 %v807, %v2983
        %v3112 = vsub.f32 %v808, %v2984
        %v3113 = vsub.f32 %v809, %v2985
        %v3114 = vsub.f32 %v810, %v2986
        %v3115 = vsub.f32 %v811, %v2987
        %v3116 = vsub.f32 %v812, %v2988
        %v3117 = vsub.f32 %v813, %v2989
        %v3118 = vsub.f32 %v814, %v2990
        %v3119 = vsub.f32 %v815, %v2991
        %v3120 = vsub.f32 %v816, %v2992
        %v3121 = vsub.f32 %v817, %v2993
        %v3122 = vsub.f32 %v818, %v2994
        %v3123 = vsub.f32 %v819, %v2995
        %v3124 = vsub.f32 %v820, %v2996
        %v3125 = vsub.f32 %v821, %v2997
        %v3126 = vsub.f32 %v822, %v2998
        %v3127 = vsub.f32 %v823, %v2999
        %v3128 = vsub.f32 %v824, %v3000
        %v3129 = vsub.f32 %v825, %v3001
        %v3130 = vsub.f32 %v826, %v3002
        %v3131 = vsub.f32 %v827, %v3003
        %v3132 = vsub.f32 %v828, %v3004
        %v3133 = vsub.f32 %v829, %v3005
        %v3134 = vsub.f32 %v830, %v3006
        %v3135 = vsub.f32 %v831, %v3007
        %v3136 = vsub.f32 %v832, %v3008
        %v3137 = vsub.f32 %v833, %v3009
        %v3138 = vsub.f32 %v834, %v3010
        %v3139 = vsub.f32 %v835, %v3011
        %v3140 = vsub.f32 %v836, %v3012
        %v3141 = vsub.f32 %v837, %v3013
        %v3142 = vsub.f32 %v838, %v3014
        %v3143 = vsub.f32 %v839, %v3015
        %v3144 = vsub.f32 %v840, %v3016
        %v3145 = vsub.f32 %v841, %v3017
        %v3146 = vsub.f32 %v842, %v3018
        %v3147 = vsub.f32 %v843, %v3019
        %v3148 = vsub.f32 %v844, %v3020
        %v3149 = vsub.f32 %v845, %v3021
        %v3150 = vsub.f32 %v846, %v3022
        %v3151 = vsub.f32 %v847, %v3023
        %v3152 = vsub.f32 %v848, %v3024
        %v3153 = vsub.f32 %v849, %v3025
        %v3154 = vsub.f32 %v850, %v3026
        %v3155 = vsub.f32 %v851, %v3027
        %v3156 = vsub.f32 %v852, %v3028
        %v3157 = vsub.f32 %v853, %v3029
        %3158 = vst [vmem:[%s542] sm:$0xff] %v3030
        %3159 = vst [vmem:[%s542 + $0x8] sm:$0xff] %v3031
        %3160 = vst [vmem:[%s542 + $0x10] sm:$0xff] %v3032
        %3161 = vst [vmem:[%s542 + $0x18] sm:$0xff] %v3033
        %3162 = vst [vmem:[%s542 + $0x20] sm:$0xff] %v3034
        %3163 = vst [vmem:[%s542 + $0x28] sm:$0xff] %v3035
        %3164 = vst [vmem:[%s542 + $0x30] sm:$0xff] %v3036
        %3165 = vst [vmem:[%s542 + $0x38] sm:$0xff] %v3037
        %3166 = vst [vmem:[%s542 + $0x40] sm:$0xff] %v3038
        %3167 = vst [vmem:[%s542 + $0x48] sm:$0xff] %v3039
        %3168 = vst [vmem:[%s542 + $0x50] sm:$0xff] %v3040
        %3169 = vst [vmem:[%s542 + $0x58] sm:$0xff] %v3041
        %3170 = vst [vmem:[%s542 + $0x60] sm:$0xff] %v3042
        %3171 = vst [vmem:[%s542 + $0x68] sm:$0xff] %v3043
        %3172 = vst [vmem:[%s542 + $0x70] sm:$0xff] %v3044
        %3173 = vst [vmem:[%s542 + $0x78] sm:$0xff] %v3045
        %3174 = vst [vmem:[%s542 + $0x80] sm:$0xff] %v3046
        %3175 = vst [vmem:[%s542 + $0x88] sm:$0xff] %v3047
        %3176 = vst [vmem:[%s542 + $0x90] sm:$0xff] %v3048
        %3177 = vst [vmem:[%s542 + $0x98] sm:$0xff] %v3049
        %3178 = vst [vmem:[%s542 + $0xa0] sm:$0xff] %v3050
        %3179 = vst [vmem:[%s542 + $0xa8] sm:$0xff] %v3051
        %3180 = vst [vmem:[%s542 + $0xb0] sm:$0xff] %v3052
        %3181 = vst [vmem:[%s542 + $0xb8] sm:$0xff] %v3053
        %3182 = vst [vmem:[%s542 + $0xc0] sm:$0xff] %v3054
        %3183 = vst [vmem:[%s542 + $0xc8] sm:$0xff] %v3055
        %3184 = vst [vmem:[%s542 + $0xd0] sm:$0xff] %v3056
        %3185 = vst [vmem:[%s542 + $0xd8] sm:$0xff] %v3057
        %3186 = vst [vmem:[%s542 + $0xe0] sm:$0xff] %v3058
        %3187 = vst [vmem:[%s542 + $0xe8] sm:$0xff] %v3059
        %3188 = vst [vmem:[%s542 + $0xf0] sm:$0xff] %v3060
        %3189 = vst [vmem:[%s542 + $0xf8] sm:$0xff] %v3061
        %3190 = vst [vmem:[%s542 + $0x100] sm:$0xff] %v3062
        %3191 = vst [vmem:[%s542 + $0x108] sm:$0xff] %v3063
        %3192 = vst [vmem:[%s542 + $0x110] sm:$0xff] %v3064
        %3193 = vst [vmem:[%s542 + $0x118] sm:$0xff] %v3065
        %3194 = vst [vmem:[%s542 + $0x120] sm:$0xff] %v3066
        %3195 = vst [vmem:[%s542 + $0x128] sm:$0xff] %v3067
        %3196 = vst [vmem:[%s542 + $0x130] sm:$0xff] %v3068
        %3197 = vst [vmem:[%s542 + $0x138] sm:$0xff] %v3069
        %3198 = vst [vmem:[%s542 + $0x140] sm:$0xff] %v3070
        %3199 = vst [vmem:[%s542 + $0x148] sm:$0xff] %v3071
        %3200 = vst [vmem:[%s542 + $0x150] sm:$0xff] %v3072
        %3201 = vst [vmem:[%s542 + $0x158] sm:$0xff] %v3073
        %3202 = vst [vmem:[%s542 + $0x160] sm:$0xff] %v3074
        %3203 = vst [vmem:[%s542 + $0x168] sm:$0xff] %v3075
        %3204 = vst [vmem:[%s542 + $0x170] sm:$0xff] %v3076
        %3205 = vst [vmem:[%s542 + $0x178] sm:$0xff] %v3077
        %3206 = vst [vmem:[%s542 + $0x180] sm:$0xff] %v3078
        %3207 = vst [vmem:[%s542 + $0x188] sm:$0xff] %v3079
        %3208 = vst [vmem:[%s542 + $0x190] sm:$0xff] %v3080
        %3209 = vst [vmem:[%s542 + $0x198] sm:$0xff] %v3081
        %3210 = vst [vmem:[%s542 + $0x1a0] sm:$0xff] %v3082
        %3211 = vst [vmem:[%s542 + $0x1a8] sm:$0xff] %v3083
        %3212 = vst [vmem:[%s542 + $0x1b0] sm:$0xff] %v3084
        %3213 = vst [vmem:[%s542 + $0x1b8] sm:$0xff] %v3085
        %3214 = vst [vmem:[%s542 + $0x1c0] sm:$0xff] %v3086
        %3215 = vst [vmem:[%s542 + $0x1c8] sm:$0xff] %v3087
        %3216 = vst [vmem:[%s542 + $0x1d0] sm:$0xff] %v3088
        %3217 = vst [vmem:[%s542 + $0x1d8] sm:$0xff] %v3089
        %3218 = vst [vmem:[%s542 + $0x1e0] sm:$0xff] %v3090
        %3219 = vst [vmem:[%s542 + $0x1e8] sm:$0xff] %v3091
        %3220 = vst [vmem:[%s542 + $0x1f0] sm:$0xff] %v3092
        %3221 = vst [vmem:[%s542 + $0x1f8] sm:$0xff] %v3093
        %3222 = vst [vmem:[%s542 + $0x200] sm:$0xff] %v3094
        %3223 = vst [vmem:[%s542 + $0x208] sm:$0xff] %v3095
        %3224 = vst [vmem:[%s542 + $0x210] sm:$0xff] %v3096
        %3225 = vst [vmem:[%s542 + $0x218] sm:$0xff] %v3097
        %3226 = vst [vmem:[%s542 + $0x220] sm:$0xff] %v3098
        %3227 = vst [vmem:[%s542 + $0x228] sm:$0xff] %v3099
        %3228 = vst [vmem:[%s542 + $0x230] sm:$0xff] %v3100
        %3229 = vst [vmem:[%s542 + $0x238] sm:$0xff] %v3101
        %3230 = vst [vmem:[%s542 + $0x240] sm:$0xff] %v3102
        %3231 = vst [vmem:[%s542 + $0x248] sm:$0xff] %v3103
        %3232 = vst [vmem:[%s542 + $0x250] sm:$0xff] %v3104
        %3233 = vst [vmem:[%s542 + $0x258] sm:$0xff] %v3105
        %3234 = vst [vmem:[%s542 + $0x260] sm:$0xff] %v3106
        %3235 = vst [vmem:[%s542 + $0x268] sm:$0xff] %v3107
        %3236 = vst [vmem:[%s542 + $0x270] sm:$0xff] %v3108
        %3237 = vst [vmem:[%s542 + $0x278] sm:$0xff] %v3109
        %3238 = vst [vmem:[%s542 + $0x280] sm:$0xff] %v3110
        %3239 = vst [vmem:[%s542 + $0x288] sm:$0xff] %v3111
        %3240 = vst [vmem:[%s542 + $0x290] sm:$0xff] %v3112
        %3241 = vst [vmem:[%s542 + $0x298] sm:$0xff] %v3113
        %3242 = vst [vmem:[%s542 + $0x2a0] sm:$0xff] %v3114
        %3243 = vst [vmem:[%s542 + $0x2a8] sm:$0xff] %v3115
        %3244 = vst [vmem:[%s542 + $0x2b0] sm:$0xff] %v3116
        %3245 = vst [vmem:[%s542 + $0x2b8] sm:$0xff] %v3117
        %3246 = vst [vmem:[%s542 + $0x2c0] sm:$0xff] %v3118
        %3247 = vst [vmem:[%s542 + $0x2c8] sm:$0xff] %v3119
        %3248 = vst [vmem:[%s542 + $0x2d0] sm:$0xff] %v3120
        %3249 = vst [vmem:[%s542 + $0x2d8] sm:$0xff] %v3121
        %3250 = vst [vmem:[%s542 + $0x2e0] sm:$0xff] %v3122
        %3251 = vst [vmem:[%s542 + $0x2e8] sm:$0xff] %v3123
        %3252 = vst [vmem:[%s542 + $0x2f0] sm:$0xff] %v3124
        %3253 = vst [vmem:[%s542 + $0x2f8] sm:$0xff] %v3125
        %3254 = vst [vmem:[%s542 + $0x300] sm:$0xff] %v3126
        %3255 = vst [vmem:[%s542 + $0x308] sm:$0xff] %v3127
        %3256 = vst [vmem:[%s542 + $0x310] sm:$0xff] %v3128
        %3257 = vst [vmem:[%s542 + $0x318] sm:$0xff] %v3129
        %3258 = vst [vmem:[%s542 + $0x320] sm:$0xff] %v3130
        %3259 = vst [vmem:[%s542 + $0x328] sm:$0xff] %v3131
        %3260 = vst [vmem:[%s542 + $0x330] sm:$0xff] %v3132
        %3261 = vst [vmem:[%s542 + $0x338] sm:$0xff] %v3133
        %3262 = vst [vmem:[%s542 + $0x340] sm:$0xff] %v3134
        %3263 = vst [vmem:[%s542 + $0x348] sm:$0xff] %v3135
        %3264 = vst [vmem:[%s542 + $0x350] sm:$0xff] %v3136
        %3265 = vst [vmem:[%s542 + $0x358] sm:$0xff] %v3137
        %3266 = vst [vmem:[%s542 + $0x360] sm:$0xff] %v3138
        %3267 = vst [vmem:[%s542 + $0x368] sm:$0xff] %v3139
        %3268 = vst [vmem:[%s542 + $0x370] sm:$0xff] %v3140
        %3269 = vst [vmem:[%s542 + $0x378] sm:$0xff] %v3141
        %3270 = vst [vmem:[%s542 + $0x380] sm:$0xff] %v3142
        %3271 = vst [vmem:[%s542 + $0x388] sm:$0xff] %v3143
        %3272 = vst [vmem:[%s542 + $0x390] sm:$0xff] %v3144
        %3273 = vst [vmem:[%s542 + $0x398] sm:$0xff] %v3145
        %3274 = vst [vmem:[%s542 + $0x3a0] sm:$0xff] %v3146
        %3275 = vst [vmem:[%s542 + $0x3a8] sm:$0xff] %v3147
        %3276 = vst [vmem:[%s542 + $0x3b0] sm:$0xff] %v3148
        %3277 = vst [vmem:[%s542 + $0x3b8] sm:$0xff] %v3149
        %3278 = vst [vmem:[%s542 + $0x3c0] sm:$0xff] %v3150
        %3279 = vst [vmem:[%s542 + $0x3c8] sm:$0xff] %v3151
        %3280 = vst [vmem:[%s542 + $0x3d0] sm:$0xff] %v3152
        %3281 = vst [vmem:[%s542 + $0x3d8] sm:$0xff] %v3153
        %3282 = vst [vmem:[%s542 + $0x3e0] sm:$0xff] %v3154
        %3283 = vst [vmem:[%s542 + $0x3e8] sm:$0xff] %v3155
        %3284 = vst [vmem:[%s542 + $0x3f0] sm:$0xff] %v3156
        %3285 = vst [vmem:[%s542 + $0x3f8] sm:$0xff] %v3157
        %3286 = vst [vmem:[%s549] sm:$0xff] %v1622
        %3287 = vst [vmem:[%s549 + $0x8] sm:$0xff] %v1623
        %3288 = vst [vmem:[%s549 + $0x10] sm:$0xff] %v1624
        %3289 = vst [vmem:[%s549 + $0x18] sm:$0xff] %v1625
        %3290 = vst [vmem:[%s549 + $0x20] sm:$0xff] %v1626
        %3291 = vst [vmem:[%s549 + $0x28] sm:$0xff] %v1627
        %3292 = vst [vmem:[%s549 + $0x30] sm:$0xff] %v1628
        %3293 = vst [vmem:[%s549 + $0x38] sm:$0xff] %v1629
        %3294 = vst [vmem:[%s549 + $0x40] sm:$0xff] %v1630
        %3295 = vst [vmem:[%s549 + $0x48] sm:$0xff] %v1631
        %3296 = vst [vmem:[%s549 + $0x50] sm:$0xff] %v1632
        %3297 = vst [vmem:[%s549 + $0x58] sm:$0xff] %v1633
        %3298 = vst [vmem:[%s549 + $0x60] sm:$0xff] %v1634
        %3299 = vst [vmem:[%s549 + $0x68] sm:$0xff] %v1635
        %3300 = vst [vmem:[%s549 + $0x70] sm:$0xff] %v1636
        %3301 = vst [vmem:[%s549 + $0x78] sm:$0xff] %v1637
        %3302 = vst [vmem:[%s549 + $0x80] sm:$0xff] %v1638
        %3303 = vst [vmem:[%s549 + $0x88] sm:$0xff] %v1639
        %3304 = vst [vmem:[%s549 + $0x90] sm:$0xff] %v1640
        %3305 = vst [vmem:[%s549 + $0x98] sm:$0xff] %v1641
        %3306 = vst [vmem:[%s549 + $0xa0] sm:$0xff] %v1642
        %3307 = vst [vmem:[%s549 + $0xa8] sm:$0xff] %v1643
        %3308 = vst [vmem:[%s549 + $0xb0] sm:$0xff] %v1644
        %3309 = vst [vmem:[%s549 + $0xb8] sm:$0xff] %v1645
        %3310 = vst [vmem:[%s549 + $0xc0] sm:$0xff] %v1646
        %3311 = vst [vmem:[%s549 + $0xc8] sm:$0xff] %v1647
        %3312 = vst [vmem:[%s549 + $0xd0] sm:$0xff] %v1648
        %3313 = vst [vmem:[%s549 + $0xd8] sm:$0xff] %v1649
        %3314 = vst [vmem:[%s549 + $0xe0] sm:$0xff] %v1650
        %3315 = vst [vmem:[%s549 + $0xe8] sm:$0xff] %v1651
        %3316 = vst [vmem:[%s549 + $0xf0] sm:$0xff] %v1652
        %3317 = vst [vmem:[%s549 + $0xf8] sm:$0xff] %v1653
        %3318 = vst [vmem:[%s549 + $0x100] sm:$0xff] %v1654
        %3319 = vst [vmem:[%s549 + $0x108] sm:$0xff] %v1655
        %3320 = vst [vmem:[%s549 + $0x110] sm:$0xff] %v1656
        %3321 = vst [vmem:[%s549 + $0x118] sm:$0xff] %v1657
        %3322 = vst [vmem:[%s549 + $0x120] sm:$0xff] %v1658
        %3323 = vst [vmem:[%s549 + $0x128] sm:$0xff] %v1659
        %3324 = vst [vmem:[%s549 + $0x130] sm:$0xff] %v1660
        %3325 = vst [vmem:[%s549 + $0x138] sm:$0xff] %v1661
        %3326 = vst [vmem:[%s549 + $0x140] sm:$0xff] %v1662
        %3327 = vst [vmem:[%s549 + $0x148] sm:$0xff] %v1663
        %3328 = vst [vmem:[%s549 + $0x150] sm:$0xff] %v1664
        %3329 = vst [vmem:[%s549 + $0x158] sm:$0xff] %v1665
        %3330 = vst [vmem:[%s549 + $0x160] sm:$0xff] %v1666
        %3331 = vst [vmem:[%s549 + $0x168] sm:$0xff] %v1667
        %3332 = vst [vmem:[%s549 + $0x170] sm:$0xff] %v1668
        %3333 = vst [vmem:[%s549 + $0x178] sm:$0xff] %v1669
        %3334 = vst [vmem:[%s549 + $0x180] sm:$0xff] %v1670
        %3335 = vst [vmem:[%s549 + $0x188] sm:$0xff] %v1671
        %3336 = vst [vmem:[%s549 + $0x190] sm:$0xff] %v1672
        %3337 = vst [vmem:[%s549 + $0x198] sm:$0xff] %v1673
        %3338 = vst [vmem:[%s549 + $0x1a0] sm:$0xff] %v1674
        %3339 = vst [vmem:[%s549 + $0x1a8] sm:$0xff] %v1675
        %3340 = vst [vmem:[%s549 + $0x1b0] sm:$0xff] %v1676
        %3341 = vst [vmem:[%s549 + $0x1b8] sm:$0xff] %v1677
        %3342 = vst [vmem:[%s549 + $0x1c0] sm:$0xff] %v1678
        %3343 = vst [vmem:[%s549 + $0x1c8] sm:$0xff] %v1679
        %3344 = vst [vmem:[%s549 + $0x1d0] sm:$0xff] %v1680
        %3345 = vst [vmem:[%s549 + $0x1d8] sm:$0xff] %v1681
        %3346 = vst [vmem:[%s549 + $0x1e0] sm:$0xff] %v1682
        %3347 = vst [vmem:[%s549 + $0x1e8] sm:$0xff] %v1683
        %3348 = vst [vmem:[%s549 + $0x1f0] sm:$0xff] %v1684
        %3349 = vst [vmem:[%s549 + $0x1f8] sm:$0xff] %v1685
        %3350 = vst [vmem:[%s549 + $0x200] sm:$0xff] %v1686
        %3351 = vst [vmem:[%s549 + $0x208] sm:$0xff] %v1687
        %3352 = vst [vmem:[%s549 + $0x210] sm:$0xff] %v1688
        %3353 = vst [vmem:[%s549 + $0x218] sm:$0xff] %v1689
        %3354 = vst [vmem:[%s549 + $0x220] sm:$0xff] %v1690
        %3355 = vst [vmem:[%s549 + $0x228] sm:$0xff] %v1691
        %3356 = vst [vmem:[%s549 + $0x230] sm:$0xff] %v1692
        %3357 = vst [vmem:[%s549 + $0x238] sm:$0xff] %v1693
        %3358 = vst [vmem:[%s549 + $0x240] sm:$0xff] %v1694
        %3359 = vst [vmem:[%s549 + $0x248] sm:$0xff] %v1695
        %3360 = vst [vmem:[%s549 + $0x250] sm:$0xff] %v1696
        %3361 = vst [vmem:[%s549 + $0x258] sm:$0xff] %v1697
        %3362 = vst [vmem:[%s549 + $0x260] sm:$0xff] %v1698
        %3363 = vst [vmem:[%s549 + $0x268] sm:$0xff] %v1699
        %3364 = vst [vmem:[%s549 + $0x270] sm:$0xff] %v1700
        %3365 = vst [vmem:[%s549 + $0x278] sm:$0xff] %v1701
        %3366 = vst [vmem:[%s549 + $0x280] sm:$0xff] %v1702
        %3367 = vst [vmem:[%s549 + $0x288] sm:$0xff] %v1703
        %3368 = vst [vmem:[%s549 + $0x290] sm:$0xff] %v1704
        %3369 = vst [vmem:[%s549 + $0x298] sm:$0xff] %v1705
        %3370 = vst [vmem:[%s549 + $0x2a0] sm:$0xff] %v1706
        %3371 = vst [vmem:[%s549 + $0x2a8] sm:$0xff] %v1707
        %3372 = vst [vmem:[%s549 + $0x2b0] sm:$0xff] %v1708
        %3373 = vst [vmem:[%s549 + $0x2b8] sm:$0xff] %v1709
        %3374 = vst [vmem:[%s549 + $0x2c0] sm:$0xff] %v1710
        %3375 = vst [vmem:[%s549 + $0x2c8] sm:$0xff] %v1711
        %3376 = vst [vmem:[%s549 + $0x2d0] sm:$0xff] %v1712
        %3377 = vst [vmem:[%s549 + $0x2d8] sm:$0xff] %v1713
        %3378 = vst [vmem:[%s549 + $0x2e0] sm:$0xff] %v1714
        %3379 = vst [vmem:[%s549 + $0x2e8] sm:$0xff] %v1715
        %3380 = vst [vmem:[%s549 + $0x2f0] sm:$0xff] %v1716
        %3381 = vst [vmem:[%s549 + $0x2f8] sm:$0xff] %v1717
        %3382 = vst [vmem:[%s549 + $0x300] sm:$0xff] %v1718
        %3383 = vst [vmem:[%s549 + $0x308] sm:$0xff] %v1719
        %3384 = vst [vmem:[%s549 + $0x310] sm:$0xff] %v1720
        %3385 = vst [vmem:[%s549 + $0x318] sm:$0xff] %v1721
        %3386 = vst [vmem:[%s549 + $0x320] sm:$0xff] %v1722
        %3387 = vst [vmem:[%s549 + $0x328] sm:$0xff] %v1723
        %3388 = vst [vmem:[%s549 + $0x330] sm:$0xff] %v1724
        %3389 = vst [vmem:[%s549 + $0x338] sm:$0xff] %v1725
        %3390 = vst [vmem:[%s549 + $0x340] sm:$0xff] %v1726
        %3391 = vst [vmem:[%s549 + $0x348] sm:$0xff] %v1727
        %3392 = vst [vmem:[%s549 + $0x350] sm:$0xff] %v1728
        %3393 = vst [vmem:[%s549 + $0x358] sm:$0xff] %v1729
        %3394 = vst [vmem:[%s549 + $0x360] sm:$0xff] %v1730
        %3395 = vst [vmem:[%s549 + $0x368] sm:$0xff] %v1731
        %3396 = vst [vmem:[%s549 + $0x370] sm:$0xff] %v1732
        %3397 = vst [vmem:[%s549 + $0x378] sm:$0xff] %v1733
        %3398 = vst [vmem:[%s549 + $0x380] sm:$0xff] %v1734
        %3399 = vst [vmem:[%s549 + $0x388] sm:$0xff] %v1735
        %3400 = vst [vmem:[%s549 + $0x390] sm:$0xff] %v1736
        %3401 = vst [vmem:[%s549 + $0x398] sm:$0xff] %v1737
        %3402 = vst [vmem:[%s549 + $0x3a0] sm:$0xff] %v1738
        %3403 = vst [vmem:[%s549 + $0x3a8] sm:$0xff] %v1739
        %3404 = vst [vmem:[%s549 + $0x3b0] sm:$0xff] %v1740
        %3405 = vst [vmem:[%s549 + $0x3b8] sm:$0xff] %v1741
        %3406 = vst [vmem:[%s549 + $0x3c0] sm:$0xff] %v1742
        %3407 = vst [vmem:[%s549 + $0x3c8] sm:$0xff] %v1743
        %3408 = vst [vmem:[%s549 + $0x3d0] sm:$0xff] %v1744
        %3409 = vst [vmem:[%s549 + $0x3d8] sm:$0xff] %v1745
        %3410 = vst [vmem:[%s549 + $0x3e0] sm:$0xff] %v1746
        %3411 = vst [vmem:[%s549 + $0x3e8] sm:$0xff] %v1747
        %3412 = vst [vmem:[%s549 + $0x3f0] sm:$0xff] %v1748
        %3413 = vst [vmem:[%s549 + $0x3f8] sm:$0xff] %v1749
        %s3414 = sand.u32 %s201, 1
        %s3415 = scalar_lea.sflag [#allocation4], %s3414
        %s3416 = sand.u32 %s201, 1
        %s3417 = smul.addr %s3416, 1024
        %s3418 = scalar_lea.vmem [#allocation13], %s3417
        %s3419 = sand.u32 %s227, 1
        %s3420 = scalar_lea.sflag [#allocation15], %s3419
        %s3421 = sand.u32 %s227, 1
        %s3422 = smul.addr %s3421, 1024
        %s3423 = scalar_lea.vmem [#allocation14], %s3422
        // Predicated region
        $region69: #{tpu_custom_call.1} parent=43 // pred_check
          %p3424 = pneg %p211
        $region70: #{tpu_custom_call.1} parent=43 // pred_check_branch
          %3426 = sbr.rel (%p3424) target = $region72
        $region71: #{tpu_custom_call.1} parent=43 // pred_region
          %s3427 = smul.u32 16, %s37
          %s3428 = ssub.s32 82, %s3427
          %p3429 = scmp.lt.s32.totalorder %s3428, 16
          %s3430 = scalar_select %p3429, %s3428, 16
          %s3431 = smul.u32 128, %s3430
          %s3432 = smul.u32 %s3431, 8
          %s3434 = ssub.s32 16384, %s3432
          %3435 = vsyncadd %s3415, %s3434
          %p3436 = scmp.ne.s32.totalorder 0, %s3432
          %s3437 = smul.addr %s3427, 8
          %s3438 = smul.addr %s3437, 128
          %s3439 = scalar_lea.hbm %s6, %s3438
          %s3440 = smul.u32 64, %s3430
          %s3441 = sshll.u32 %s3418, 4
          %s3442 = int_to_ptr.vmem [resolvable:$true] %s3441
          %s3443 = sshll.u32 %s3440, 4
          %3447 = dma.vmem_to_hbm [thread:$0]  (%p3436), %s3442, %s3443, %s3439, %s3415, 1024, 1024, 64
        $region72: #{tpu_custom_call.1} parent=43 // pred_fallthru
          _
        // Predicated region
        $region73: #{tpu_custom_call.1} parent=43 // pred_check
          %p3448 = pneg %p237
        $region74: #{tpu_custom_call.1} parent=43 // pred_check_branch
          %3450 = sbr.rel (%p3448) target = $region76
        $region75: #{tpu_custom_call.1} parent=43 // pred_region
          %s3451 = smul.u32 16, %s37
          %s3452 = ssub.s32 82, %s3451
          %p3453 = scmp.lt.s32.totalorder %s3452, 16
          %s3454 = scalar_select %p3453, %s3452, 16
          %s3455 = smul.u32 128, %s3454
          %s3456 = smul.u32 %s3455, 8
          %s3458 = ssub.s32 16384, %s3456
          %3459 = vsyncadd %s3420, %s3458
          %p3460 = scmp.ne.s32.totalorder 0, %s3456
          %s3461 = smul.addr %s3451, 8
          %s3462 = smul.addr %s3461, 128
          %s3463 = scalar_lea.hbm %s7, %s3462
          %s3464 = smul.u32 64, %s3454
          %s3465 = sshll.u32 %s3423, 4
          %s3466 = int_to_ptr.vmem [resolvable:$true] %s3465
          %s3467 = sshll.u32 %s3464, 4
          %3471 = dma.vmem_to_hbm [thread:$0]  (%p3460), %s3466, %s3467, %s3463, %s3420, 1024, 1024, 64
        $region76: #{tpu_custom_call.1} parent=43 // pred_fallthru
          _
      $region44: #{tpu_custom_call.1} parent=5 // pred_fallthru
        _
      %p3472 = scmp.le.s32.totalorder 2, %s32
      // Predicated region
      $region77: #{tpu_custom_call.1} parent=5 // pred_check
        %p3473 = pneg %p3472
      $region78: #{tpu_custom_call.1} parent=5 // pred_check_branch
        %3475 = sbr.rel (%p3473) target = $region80
      $region79: #{tpu_custom_call.1} parent=5 // pred_region
        %s3476 = ssub.s32 %s32, 2
        // Predicated region
        $region81: #{tpu_custom_call.1} parent=79 // pred_check
          %p3477 = pneg %p217
        $region82: #{tpu_custom_call.1} parent=79 // pred_check_branch
          %3479 = sbr.rel (%p3477) target = $region84
        $region83: #{tpu_custom_call.1} parent=79 // pred_region
          %s3480 = sand.u32 %s202, 1
          %s3481 = scalar_lea.sflag [#allocation4], %s3480
          %s3482 = sand.u32 %s202, 1
          %s3483 = smul.addr %s3482, 1024
          %s3484 = scalar_lea.vmem [#allocation13], %s3483
          %3485 = dma.done %s3481, 16384
        $region84: #{tpu_custom_call.1} parent=79 // pred_fallthru
          _
        // Predicated region
        $region85: #{tpu_custom_call.1} parent=79 // pred_check
          %p3486 = pneg %p243
        $region86: #{tpu_custom_call.1} parent=79 // pred_check_branch
          %3488 = sbr.rel (%p3486) target = $region88
        $region87: #{tpu_custom_call.1} parent=79 // pred_region
          %s3489 = sand.u32 %s228, 1
          %s3490 = scalar_lea.sflag [#allocation15], %s3489
          %s3491 = sand.u32 %s228, 1
          %s3492 = smul.addr %s3491, 1024
          %s3493 = scalar_lea.vmem [#allocation14], %s3492
          %3494 = dma.done %s3490, 16384
        $region88: #{tpu_custom_call.1} parent=79 // pred_fallthru
          _
      $region80: #{tpu_custom_call.1} parent=5 // pred_fallthru
        _
    $region6: #{tpu_custom_call.1} parent=1 // loop_footer
      %s36 = sadd.s32 1, %s32
    $region7: #{tpu_custom_call.1} parent=1 // loop_footer_branch
      %31 = sbr.rel target = $region3
    $region8: #{tpu_custom_call.1} parent=1 // loop_exit
      _
    %3495 = vsyncpa [#allocation3], 1
    %s3496 = scalar_lea.sflag [#allocation3], 1
    %3497 = vsyncpa %s3496, 1
    %3498 = vsyncpa [#allocation6], 1
    %s3499 = scalar_lea.sflag [#allocation6], 1
    %3500 = vsyncpa %s3499, 1
    %3501 = vsyncpa [#allocation9], 1
    %s3502 = scalar_lea.sflag [#allocation9], 1
    %3503 = vsyncpa %s3502, 1
    %3504 = vsyncpa [#allocation12], 1
    %s3505 = scalar_lea.sflag [#allocation12], 1
    %3506 = vsyncpa %s3505, 1
    %3507 = vsyncpa [#allocation4], 1
    %s3508 = scalar_lea.sflag [#allocation4], 1
    %3509 = vsyncpa %s3508, 1
    %3510 = vsyncpa [#allocation15], 1
    %s3511 = scalar_lea.sflag [#allocation15], 1
    %3512 = vsyncpa %s3511, 1

</llo_original>
